<compile_context>
chip_gen: v5e
topology: v5e:2x2
jax: 0.10.0
libtpu: 0.0.40
codegen_flags: <defaults>
</compile_context>

<pallas_src>
import functools

import jax
import jax.numpy as jnp
from jax.experimental import pallas as pl
from jax.experimental.pallas import tpu as pltpu

DTYPE = jnp.float32
EPS = 1e-5  # LayerNorm / BatchNorm eps (PyTorch default)


# --------------------------------------------------------------------------
# helpers
# --------------------------------------------------------------------------
def _tile_m(m, row_width_elems, vmem_budget_bytes=4 << 20):
    """Row-tile size: whole array when small, otherwise sized so a tile's widest
    f32 row working set stays within a conservative VMEM budget (keeps the
    double-buffered footprint well inside v7x's 64 MiB physical VMEM)."""
    if m <= 512:
        return m
    tm = (vmem_budget_bytes // (4 * max(int(row_width_elems), 1))) // 64 * 64
    tm = max(64, min(1024, tm))
    return m if tm >= m else tm


def _parallel1():
    return pltpu.CompilerParams(dimension_semantics=("parallel",))


# --------------------------------------------------------------------------
# Pallas kernels
# --------------------------------------------------------------------------
def _ff_kernel(x_ref, g_ref, b_ref, w1_ref, b1_ref, w2_ref, b2_ref, o_ref):
    """Fused Scale(0.5, PreNorm(LN, Linear->Swish->Linear)) + residual."""
    x = x_ref[...]
    mu = jnp.mean(x, axis=-1, keepdims=True)
    var = jnp.mean(jnp.square(x - mu), axis=-1, keepdims=True)
    xn = (x - mu) * jax.lax.rsqrt(var + EPS) * g_ref[...] + b_ref[...]
    h = jnp.dot(xn.astype(jnp.bfloat16), w1_ref[...],
                preferred_element_type=jnp.float32) + b1_ref[...]
    h = h * jax.nn.sigmoid(h)                                   # Swish (f32)
    y = jnp.dot(h.astype(jnp.bfloat16), w2_ref[...],
                preferred_element_type=jnp.float32) + b2_ref[...]
    o_ref[...] = (x + 0.5 * y).astype(o_ref.dtype)


def ff_block(x2d, p):
    M, C = x2d.shape
    Cf = p["w1"].shape[1]
    tm = _tile_m(M, Cf)
    return pl.pallas_call(
        _ff_kernel,
        grid=(pl.cdiv(M, tm),),
        in_specs=[pl.BlockSpec((tm, C), lambda i: (i, 0)),
                  pl.BlockSpec((1, C), lambda i: (0, 0)),
                  pl.BlockSpec((1, C), lambda i: (0, 0)),
                  pl.BlockSpec((C, Cf), lambda i: (0, 0)),
                  pl.BlockSpec((1, Cf), lambda i: (0, 0)),
                  pl.BlockSpec((Cf, C), lambda i: (0, 0)),
                  pl.BlockSpec((1, C), lambda i: (0, 0))],
        out_specs=pl.BlockSpec((tm, C), lambda i: (i, 0)),
        out_shape=jax.ShapeDtypeStruct((M, C), x2d.dtype),
        compiler_params=_parallel1(),
    )(x2d, p["ln_g"].reshape(1, C), p["ln_b"].reshape(1, C),
      p["w1"], p["b1"].reshape(1, Cf), p["w2"], p["b2"].reshape(1, C))


def _ln_kernel(x_ref, g_ref, b_ref, o_ref):
    x = x_ref[...]
    mu = jnp.mean(x, axis=-1, keepdims=True)
    var = jnp.mean(jnp.square(x - mu), axis=-1, keepdims=True)
    y = (x - mu) * jax.lax.rsqrt(var + EPS)
    o_ref[...] = (y * g_ref[...] + b_ref[...]).astype(o_ref.dtype)


def layer_norm(x2d, gamma, beta):
    M, C = x2d.shape
    tm = _tile_m(M, C)
    return pl.pallas_call(
        _ln_kernel,
        grid=(pl.cdiv(M, tm),),
        in_specs=[pl.BlockSpec((tm, C), lambda i: (i, 0)),
                  pl.BlockSpec((1, C), lambda i: (0, 0)),
                  pl.BlockSpec((1, C), lambda i: (0, 0))],
        out_specs=pl.BlockSpec((tm, C), lambda i: (i, 0)),
        out_shape=jax.ShapeDtypeStruct((M, C), x2d.dtype),
        compiler_params=_parallel1(),
    )(x2d, gamma.reshape(1, C), beta.reshape(1, C))


def _linear_kernel(x_ref, w_ref, *rest, has_bias):
    if has_bias:
        b_ref, o_ref = rest
    else:
        (o_ref,) = rest
    y = jnp.dot(x_ref[...].astype(jnp.bfloat16), w_ref[...].astype(jnp.bfloat16),
                preferred_element_type=jnp.float32)
    if has_bias:
        y = y + b_ref[...]
    o_ref[...] = y.astype(o_ref.dtype)


def linear(x, w, b=None, out_dtype=None):
    """x:(M,K) @ w:(K,N) [+ b] with bf16 MXU operands; bias truly optional."""
    M, Kd = x.shape
    Nout = w.shape[1]
    out_dtype = out_dtype or x.dtype
    tm = _tile_m(M, max(Kd, Nout))
    in_specs = [pl.BlockSpec((tm, Kd), lambda i: (i, 0)),
                pl.BlockSpec((Kd, Nout), lambda i: (0, 0))]
    args = [x, w]
    if b is not None:
        in_specs.append(pl.BlockSpec((1, Nout), lambda i: (0, 0)))
        args.append(b.reshape(1, Nout).astype(jnp.float32))
    return pl.pallas_call(
        functools.partial(_linear_kernel, has_bias=b is not None),
        grid=(pl.cdiv(M, tm),),
        in_specs=in_specs,
        out_specs=pl.BlockSpec((tm, Nout), lambda i: (i, 0)),
        out_shape=jax.ShapeDtypeStruct((M, Nout), out_dtype),
        compiler_params=_parallel1(),
    )(*args)


def _attn_kernel(x_ref, wqkv_ref, wp_ref, bp_ref, xres_ref, y_ref, a_ref,
                 *, heads, dh, n, scale):
    """Per-batch fused attention: QKV proj + all-head softmax(QK^T)V + output
    projection + cls-token fixup + residual.  qkv never leaves VMEM."""
    C = heads * dh
    x = x_ref[0]                                          # (M, C) f32
    qkv = jnp.dot(x.astype(jnp.bfloat16), wqkv_ref[...],
                  preferred_element_type=jnp.float32)     # (M, 3C), bias-less
    qkv = qkv.astype(jnp.bfloat16)                        # MXU operands
    outs = []
    for h in range(heads):                                # static unroll over heads
        qh = qkv[:, h * dh:(h + 1) * dh]
        kh = qkv[:, C + h * dh:C + (h + 1) * dh]
        vh = qkv[:, 2 * C + h * dh:2 * C + (h + 1) * dh]
        s = jnp.dot(qh, kh.T, preferred_element_type=jnp.float32) * scale
        s = s - jnp.max(s, axis=-1, keepdims=True)
        e = jnp.exp(s)
        p = e * pl.reciprocal(jnp.sum(e, axis=-1, keepdims=True), approx=True)
        a_ref[0, h] = p.astype(a_ref.dtype)
        outs.append(jnp.dot(p.astype(jnp.bfloat16), vh,
                            preferred_element_type=jnp.float32))
    o = jnp.concatenate(outs, axis=-1)                    # (M, C)
    o = jnp.dot(o.astype(jnp.bfloat16), wp_ref[...],
                preferred_element_type=jnp.float32) + bp_ref[...]
    # cls, patch, ht split + cls update (reference semantics)
    cls = (o[0:1] + jnp.mean(o[n:], axis=0, keepdims=True)
           + jnp.mean(o[1:n], axis=0, keepdims=True))
    y = jnp.concatenate([cls, o[1:n]], axis=0)            # (n, C)
    y_ref[0] = (y + xres_ref[0]).astype(y_ref.dtype)


def attention_core(xcat, x_res, wqkv, wproj, bproj, *, heads, dim_head, n_tokens):
    """xcat:(B,M,C) (normed tokens ++ head tokens), x_res:(B,N,C).
    Returns (y:(B,N,C) including residual, attn:(B,H,M,M))."""
    B, M, C = xcat.shape
    scale = float(dim_head) ** -0.5
    kernel = functools.partial(_attn_kernel, heads=heads, dh=dim_head,
                               n=n_tokens, scale=scale)
    # TODO(synk): full (M x M) scores per batch (no flash tiling) — fine for short
    # Conformer sequences; tile over M (online softmax) for long sequences.
    return pl.pallas_call(
        kernel,
        grid=(B,),
        in_specs=[pl.BlockSpec((1, M, C), lambda b: (b, 0, 0)),
                  pl.BlockSpec((C, 3 * C), lambda b: (0, 0)),
                  pl.BlockSpec((C, C), lambda b: (0, 0)),
                  pl.BlockSpec((1, C), lambda b: (0, 0)),
                  pl.BlockSpec((1, n_tokens, C), lambda b: (b, 0, 0))],
        out_specs=(pl.BlockSpec((1, n_tokens, C), lambda b: (b, 0, 0)),
                   pl.BlockSpec((1, heads, M, M), lambda b: (b, 0, 0, 0))),
        out_shape=(jax.ShapeDtypeStruct((B, n_tokens, C), x_res.dtype),
                   jax.ShapeDtypeStruct((B, heads, M, M), jnp.float32)),
        compiler_params=_parallel1(),
    )(xcat, wqkv, wproj, bproj.reshape(1, C).astype(jnp.float32), x_res)


def _ln_glu_kernel(x_ref, g_ref, b_ref, wv_ref, bv_ref, wg_ref, bg_ref, o_ref):
    """Fused LayerNorm + 1x1-conv (two lane-aligned halves) + GLU."""
    x = x_ref[...]
    mu = jnp.mean(x, axis=-1, keepdims=True)
    var = jnp.mean(jnp.square(x - mu), axis=-1, keepdims=True)
    xn = ((x - mu) * jax.lax.rsqrt(var + EPS) * g_ref[...] + b_ref[...]
          ).astype(jnp.bfloat16)
    val = jnp.dot(xn, wv_ref[...], preferred_element_type=jnp.float32) + bv_ref[...]
    gate = jnp.dot(xn, wg_ref[...], preferred_element_type=jnp.float32) + bg_ref[...]
    o_ref[...] = (val * jax.nn.sigmoid(gate)).astype(o_ref.dtype)


def ln_pw1_glu(x2d, pc):
    M, C = x2d.shape
    inner = pc["pw1v_w"].shape[1]
    tm = _tile_m(M, inner)
    return pl.pallas_call(
        _ln_glu_kernel,
        grid=(pl.cdiv(M, tm),),
        in_specs=[pl.BlockSpec((tm, C), lambda i: (i, 0)),
                  pl.BlockSpec((1, C), lambda i: (0, 0)),
                  pl.BlockSpec((1, C), lambda i: (0, 0)),
                  pl.BlockSpec((C, inner), lambda i: (0, 0)),
                  pl.BlockSpec((1, inner), lambda i: (0, 0)),
                  pl.BlockSpec((C, inner), lambda i: (0, 0)),
                  pl.BlockSpec((1, inner), lambda i: (0, 0))],
        out_specs=pl.BlockSpec((tm, inner), lambda i: (i, 0)),
        out_shape=jax.ShapeDtypeStruct((M, inner), jnp.float32),
        compiler_params=_parallel1(),
    )(x2d, pc["ln_g"].reshape(1, C), pc["ln_b"].reshape(1, C),
      pc["pw1v_w"], pc["pw1v_b"].reshape(1, inner),
      pc["pw1g_w"], pc["pw1g_b"].reshape(1, inner))


def _dwconv_kernel(x_ref, w_ref, b_ref, o_ref, s_ref, ss_ref,
                   *, n, k, pad_l, pad_r):
    """Depthwise conv along the token axis; halo built in-VMEM (no HBM pad).
    Also emits per-batch per-channel sum / sum-of-squares for BatchNorm."""
    x = x_ref[0]                                         # (n, C2) f32
    c2 = x.shape[-1]
    parts = []
    if pad_l:
        parts.append(jnp.zeros((pad_l, c2), jnp.float32))
    parts.append(x)
    if pad_r:
        parts.append(jnp.zeros((pad_r, c2), jnp.float32))
    xp = jnp.concatenate(parts, axis=0) if len(parts) > 1 else x   # (n+k-1, C2)
    w = w_ref[...]                                       # (k, C2), loaded once
    # TODO(synk): the per-tap static slices could be replaced with pltpu.roll
    # shifts along the sublane axis to offload the shuffles onto the XLU slot.
    acc = xp[0:n, :] * w[0:1, :]
    for i in range(1, k):
        acc = acc + xp[i:i + n, :] * w[i:i + 1, :]
    acc = acc + b_ref[...]
    o_ref[0] = acc.astype(o_ref.dtype)
    s_ref[0] = jnp.sum(acc, axis=0, keepdims=True)
    ss_ref[0] = jnp.sum(acc * acc, axis=0, keepdims=True)


def depthwise_conv1d(h3, w, b, K):
    """h3: (B, N, C2); w: (K, C2); b: (C2,) -> conv (B,N,C2), sums (B,1,C2) x2."""
    B, N, C2 = h3.shape
    pad_l = K // 2
    pad_r = pad_l - (K + 1) % 2                          # calc_same_padding
    kernel = functools.partial(_dwconv_kernel, n=N, k=K, pad_l=pad_l, pad_r=pad_r)
    return pl.pallas_call(
        kernel,
        grid=(B,),
        in_specs=[pl.BlockSpec((1, N, C2), lambda i: (i, 0, 0)),
                  pl.BlockSpec((K, C2), lambda i: (0, 0)),
                  pl.BlockSpec((1, C2), lambda i: (0, 0))],
        out_specs=(pl.BlockSpec((1, N, C2), lambda i: (i, 0, 0)),
                   pl.BlockSpec((1, 1, C2), lambda i: (i, 0, 0)),
                   pl.BlockSpec((1, 1, C2), lambda i: (i, 0, 0))),
        out_shape=(jax.ShapeDtypeStruct((B, N, C2), jnp.float32),
                   jax.ShapeDtypeStruct((B, 1, C2), jnp.float32),
                   jax.ShapeDtypeStruct((B, 1, C2), jnp.float32)),
        compiler_params=_parallel1(),
    )(h3, w, b.reshape(1, C2))


def _bn_pw2_kernel(h_ref, mu_ref, var_ref, g_ref, b_ref, w2_ref, b2_ref,
                   xres_ref, o_ref):
    """Fused BatchNorm(apply) + Swish + 1x1 conv + residual add."""
    h = h_ref[...]
    y = (h - mu_ref[...]) * jax.lax.rsqrt(var_ref[...] + EPS) * g_ref[...] + b_ref[...]
    y = y * jax.nn.sigmoid(y)                            # Swish (f32)
    out = jnp.dot(y.astype(jnp.bfloat16), w2_ref[...],
                  preferred_element_type=jnp.float32) + b2_ref[...]
    o_ref[...] = (out + xres_ref[...]).astype(o_ref.dtype)


def bn_swish_pw2(h2d, mean, var, pc, x_res2d):
    M, C2 = h2d.shape
    C = pc["pw2_w"].shape[1]
    tm = _tile_m(M, max(C2, C))
    return pl.pallas_call(
        _bn_pw2_kernel,
        grid=(pl.cdiv(M, tm),),
        in_specs=[pl.BlockSpec((tm, C2), lambda i: (i, 0)),
                  pl.BlockSpec((1, C2), lambda i: (0, 0)),
                  pl.BlockSpec((1, C2), lambda i: (0, 0)),
                  pl.BlockSpec((1, C2), lambda i: (0, 0)),
                  pl.BlockSpec((1, C2), lambda i: (0, 0)),
                  pl.BlockSpec((C2, C), lambda i: (0, 0)),
                  pl.BlockSpec((1, C), lambda i: (0, 0)),
                  pl.BlockSpec((tm, C), lambda i: (i, 0))],
        out_specs=pl.BlockSpec((tm, C), lambda i: (i, 0)),
        out_shape=jax.ShapeDtypeStruct((M, C), x_res2d.dtype),
        compiler_params=_parallel1(),
    )(h2d, mean.reshape(1, C2).astype(jnp.float32),
      var.reshape(1, C2).astype(jnp.float32),
      pc["bn_g"].reshape(1, C2), pc["bn_b"].reshape(1, C2),
      pc["pw2_w"], pc["pw2_b"].reshape(1, C), x_res2d)


# --------------------------------------------------------------------------
# Module forward (JAX glue around the Pallas kernels)
# --------------------------------------------------------------------------
def conformer_block(x, p, heads, dim_head, K):
    B, N, C = x.shape
    H, dh = heads, dim_head
    M0 = B * N

    # ---- ff1: x + 0.5 * FF(LN(x))  (one fused kernel) ----
    x2 = ff_block(x.reshape(M0, C), p["ff1"])

    # ---- attention (pre-norm) ----
    pa = p["attn"]
    xn2 = layer_norm(x2, p["attn_ln_g"], p["attn_ln_b"])
    xn = xn2.reshape(B, N, C)
    # head-token branch (tiny: B*H rows): mean -> proj -> LN(dh) -> GELU -> +pos
    head_mean = xn.reshape(B, N, H, dh).mean(axis=1)                    # (B, H, dh)
    ht = linear(head_mean.reshape(B * H, dh), pa["ht_w"], pa["ht_b"])   # (B*H, C)
    ht = layer_norm(ht.reshape(B * H * H, dh), pa["htn_g"], pa["htn_b"])
    # exact (erf) GELU on a tiny tensor kept in plain JAX
    ht = jax.nn.gelu(ht, approximate=False).reshape(B, H, C) + pa["pos_embed"]
    xcat = jnp.concatenate([xn, ht.astype(xn.dtype)], axis=1)           # (B, N+H, C)
    # fused: qkv proj + softmax + attn@V + out proj + cls fixup + residual
    y, attn_w = attention_core(xcat, x2.reshape(B, N, C),
                               pa["qkv_w"], pa["proj_w"], pa["proj_b"],
                               heads=H, dim_head=dh, n_tokens=N)
    x2 = y.reshape(M0, C)                                               # incl. residual

    # ---- conv module + residual ----
    # TODO(synk): BatchNorm1d uses training-mode batch statistics (module default);
    # eval-mode running statistics are not modeled.
    pc = p["conv"]
    inner = pc["dw_w"].shape[1]
    h = ln_pw1_glu(x2, pc)                                              # (M0, inner)
    conv_out, psum, psq = depthwise_conv1d(h.reshape(B, N, inner),
                                           pc["dw_w"], pc["dw_b"], K)
    cnt = float(B * N)
    mean = psum.sum(axis=(0, 1)) / cnt
    var = jnp.maximum(psq.sum(axis=(0, 1)) / cnt - mean * mean, 0.0)    # biased var
    x2 = bn_swish_pw2(conv_out.reshape(M0, inner), mean, var, pc, x2)   # incl. residual

    # ---- ff2 + post-norm ----
    x2 = ff_block(x2, p["ff2"])
    x2 = layer_norm(x2, p["post_g"], p["post_b"])
    return x2.reshape(B, N, C), attn_w


def conformer_forward(x, params, heads, dim_head, K):
    # Mirrors the reference exactly: x = block(x) per layer (valid for depth==1,
    # same as the PyTorch module, whose forward also only works for depth==1).
    for p in params["blocks"]:
        x = conformer_block(x, p, heads, dim_head, K)
    return x


# --------------------------------------------------------------------------
# Deterministic parameter init (synthetic); matmul weights stored in bf16.
# --------------------------------------------------------------------------
def init_params(key, dim, depth, heads, dim_head, ff_mult, K):
    C, H, dh = dim, heads, dim_head
    inner = 2 * C
    BF = jnp.bfloat16

    def nrm(k, shape, dtype=DTYPE):
        return (jax.random.normal(k, shape, DTYPE) * 0.05).astype(dtype)

    def ff_params(k):
        k1, k2, k3, k4 = jax.random.split(k, 4)
        return dict(ln_g=jnp.ones((C,), DTYPE), ln_b=jnp.zeros((C,), DTYPE),
                    w1=nrm(k1, (C, ff_mult * C), BF), b1=nrm(k2, (ff_mult * C,)),
                    w2=nrm(k3, (ff_mult * C, C), BF), b2=nrm(k4, (C,)))

    blocks = []
    for _ in range(depth):
        key, kff1, kff2, ka, kc = jax.random.split(key, 5)
        ka1, ka2, ka3, ka4, ka5, ka6 = jax.random.split(ka, 6)
        kc1, kc2, kc3, kc4, kc5, kc6, kc7, kc8 = jax.random.split(kc, 8)
        attn = dict(
            qkv_w=nrm(ka1, (C, 3 * C), BF),
            proj_w=nrm(ka2, (C, C), BF), proj_b=nrm(ka3, (C,)),
            ht_w=nrm(ka4, (dh, C), BF), ht_b=nrm(ka5, (C,)),
            htn_g=jnp.ones((dh,), DTYPE), htn_b=jnp.zeros((dh,), DTYPE),
            pos_embed=nrm(ka6, (1, H, C)),
        )
        conv = dict(
            ln_g=jnp.ones((C,), DTYPE), ln_b=jnp.zeros((C,), DTYPE),
            # pw1 (1x1 conv, 2*inner outputs) stored as two lane-aligned halves
            pw1v_w=nrm(kc1, (C, inner), BF), pw1v_b=nrm(kc2, (inner,)),
            pw1g_w=nrm(kc3, (C, inner), BF), pw1g_b=nrm(kc4, (inner,)),
            dw_w=nrm(kc5, (K, inner)), dw_b=nrm(kc6, (inner,)),
            bn_g=jnp.ones((inner,), DTYPE), bn_b=jnp.zeros((inner,), DTYPE),
            pw2_w=nrm(kc7, (inner, C), BF), pw2_b=nrm(kc8, (C,)),
        )
        blocks.append(dict(
            ff1=ff_params(kff1), ff2=ff_params(kff2),
            attn_ln_g=jnp.ones((C,), DTYPE), attn_ln_b=jnp.zeros((C,), DTYPE),
            attn=attn, conv=conv,
            post_g=jnp.ones((C,), DTYPE), post_b=jnp.zeros((C,), DTYPE),
        ))
    return dict(blocks=blocks)


# --------------------------------------------------------------------------
if __name__ == "__main__":
    B, N = 2, 10
    heads, dim_head = 4, 8
    dim = heads * dim_head        # = 32 (required by the reference reshapes)
    depth = 1                     # reference module only supports depth=1 forward
    K = 7                         # conv_kernel_size

    key = jax.random.PRNGKey(0)
    kx, kp = jax.random.split(key)
    x = jax.random.normal(kx, (B, N, dim), DTYPE)
    params = init_params(kp, dim, depth, heads, dim_head, ff_mult=4, K=K)

    fwd = jax.jit(functools.partial(conformer_forward, heads=heads,
                                    dim_head=dim_head, K=K))
    out, attn_w = fwd(x, params)
    jax.block_until_ready((out, attn_w))

    assert out.shape == (B, N, dim)
    assert attn_w.shape == (B, heads, N + heads, N + heads)
    assert jnp.all(jnp.isfinite(out)) and jnp.all(jnp.isfinite(attn_w))
    print("KERNEL_OK")
</pallas_src>

<mosaic_0001>
module attributes {stable_mosaic.version = 11 : i64} {
  func.func @_ln_kernel(%arg0: i32, %arg1: memref<20x32xf32, #tpu.memory_space<vmem>>, %arg2: memref<1x32xf32, #tpu.memory_space<vmem>>, %arg3: memref<1x32xf32, #tpu.memory_space<vmem>>, %arg4: memref<20x32xf32, #tpu.memory_space<vmem>>) attributes {dimension_semantics = [#tpu.dimension_semantics<parallel>], iteration_bounds = array<i64: 1>, scalar_prefetch = 0 : i64, scratch_operands = 0 : i64, tpu.core_type = #tpu.core_type<tc>, window_params = [{transform_indices = @transform_0, window_bounds = array<i64: 20, 32>}, {pipeline_mode = #tpu.pipeline_mode<synchronous>, transform_indices = @transform_1, window_bounds = array<i64: 1, 32>}, {pipeline_mode = #tpu.pipeline_mode<synchronous>, transform_indices = @transform_2, window_bounds = array<i64: 1, 32>}, {transform_indices = @transform_3, window_bounds = array<i64: 20, 32>}]} {
    %c0 = arith.constant 0 : index
    %c0_0 = arith.constant 0 : index
    %0 = vector.load %arg1[%c0, %c0_0] : memref<20x32xf32, #tpu.memory_space<vmem>>, vector<20x32xf32>
    %cst = arith.constant dense<0.000000e+00> : vector<20xf32>
    %1 = vector.multi_reduction <add>, %0, %cst [1] : vector<20x32xf32> to vector<20xf32>
    %2 = vector.shape_cast %1 : vector<20xf32> to vector<20x1xf32>
    %cst_1 = arith.constant 3.200000e+01 : f32
    %3 = vector.broadcast %cst_1 : f32 to vector<20x1xf32>
    %4 = arith.divf %2, %3 : vector<20x1xf32>
    %5 = vector.broadcast %4 : vector<20x1xf32> to vector<20x32xf32>
    %6 = arith.subf %0, %5 : vector<20x32xf32>
    %7 = arith.mulf %6, %6 : vector<20x32xf32>
    %cst_2 = arith.constant dense<0.000000e+00> : vector<20xf32>
    %8 = vector.multi_reduction <add>, %7, %cst_2 [1] : vector<20x32xf32> to vector<20xf32>
    %9 = vector.shape_cast %8 : vector<20xf32> to vector<20x1xf32>
    %cst_3 = arith.constant 3.200000e+01 : f32
    %10 = vector.broadcast %cst_3 : f32 to vector<20x1xf32>
    %11 = arith.divf %9, %10 : vector<20x1xf32>
    %12 = vector.broadcast %4 : vector<20x1xf32> to vector<20x32xf32>
    %13 = arith.subf %0, %12 : vector<20x32xf32>
    %cst_4 = arith.constant 9.99999974E-6 : f32
    %14 = vector.broadcast %cst_4 : f32 to vector<20x1xf32>
    %15 = arith.addf %11, %14 : vector<20x1xf32>
    %16 = math.rsqrt %15 : vector<20x1xf32>
    %17 = vector.broadcast %16 : vector<20x1xf32> to vector<20x32xf32>
    %18 = arith.mulf %13, %17 : vector<20x32xf32>
    %c0_5 = arith.constant 0 : index
    %c0_6 = arith.constant 0 : index
    %19 = vector.load %arg2[%c0_5, %c0_6] : memref<1x32xf32, #tpu.memory_space<vmem>>, vector<1x32xf32>
    %20 = vector.broadcast %19 : vector<1x32xf32> to vector<20x32xf32>
    %21 = arith.mulf %18, %20 : vector<20x32xf32>
    %c0_7 = arith.constant 0 : index
    %c0_8 = arith.constant 0 : index
    %22 = vector.load %arg3[%c0_7, %c0_8] : memref<1x32xf32, #tpu.memory_space<vmem>>, vector<1x32xf32>
    %23 = vector.broadcast %22 : vector<1x32xf32> to vector<20x32xf32>
    %24 = arith.addf %21, %23 : vector<20x32xf32>
    %c0_9 = arith.constant 0 : index
    %c0_10 = arith.constant 0 : index
    %25 = vector.load %arg4[%c0_9, %c0_10] : memref<20x32xf32, #tpu.memory_space<vmem>>, vector<20x32xf32>
    tpu.vector_store %arg4[%c0_9, %c0_10], %24 {strides = array<i32>} : memref<20x32xf32, #tpu.memory_space<vmem>>, vector<20x32xf32>,
    return
  }
  func.func @transform_0(%arg0: i32) -> (i32, i32) {
    %c0_i32 = arith.constant 0 : i32
    %c0_i32_0 = arith.constant 0 : i32
    return %arg0, %c0_i32 : i32, i32
  }
  func.func @transform_1(%arg0: i32) -> (i32, i32) {
    %c0_i32 = arith.constant 0 : i32
    %c0_i32_0 = arith.constant 0 : i32
    %c0_i32_1 = arith.constant 0 : i32
    return %c0_i32, %c0_i32_0 : i32, i32
  }
  func.func @transform_2(%arg0: i32) -> (i32, i32) {
    %c0_i32 = arith.constant 0 : i32
    %c0_i32_0 = arith.constant 0 : i32
    %c0_i32_1 = arith.constant 0 : i32
    return %c0_i32, %c0_i32_0 : i32, i32
  }
  func.func @transform_3(%arg0: i32) -> (i32, i32) {
    %c0_i32 = arith.constant 0 : i32
    %c0_i32_0 = arith.constant 0 : i32
    return %arg0, %c0_i32 : i32, i32
  }
}

module attributes {stable_mosaic.version = 11 : i64} {
  func.func @_ff_kernel(%arg0: i32, %arg1: memref<20x32xf32, #tpu.memory_space<vmem>>, %arg2: memref<1x32xf32, #tpu.memory_space<vmem>>, %arg3: memref<1x32xf32, #tpu.memory_space<vmem>>, %arg4: memref<32x128xbf16, #tpu.memory_space<vmem>>, %arg5: memref<1x128xf32, #tpu.memory_space<vmem>>, %arg6: memref<128x32xbf16, #tpu.memory_space<vmem>>, %arg7: memref<1x32xf32, #tpu.memory_space<vmem>>, %arg8: memref<20x32xf32, #tpu.memory_space<vmem>>) attributes {dimension_semantics = [#tpu.dimension_semantics<parallel>], iteration_bounds = array<i64: 1>, scalar_prefetch = 0 : i64, scratch_operands = 0 : i64, tpu.core_type = #tpu.core_type<tc>, window_params = [{transform_indices = @transform_0, window_bounds = array<i64: 20, 32>}, {pipeline_mode = #tpu.pipeline_mode<synchronous>, transform_indices = @transform_1, window_bounds = array<i64: 1, 32>}, {pipeline_mode = #tpu.pipeline_mode<synchronous>, transform_indices = @transform_2, window_bounds = array<i64: 1, 32>}, {pipeline_mode = #tpu.pipeline_mode<synchronous>, transform_indices = @transform_3, window_bounds = array<i64: 32, 128>}, {pipeline_mode = #tpu.pipeline_mode<synchronous>, transform_indices = @transform_4, window_bounds = array<i64: 1, 128>}, {pipeline_mode = #tpu.pipeline_mode<synchronous>, transform_indices = @transform_5, window_bounds = array<i64: 128, 32>}, {pipeline_mode = #tpu.pipeline_mode<synchronous>, transform_indices = @transform_6, window_bounds = array<i64: 1, 32>}, {transform_indices = @transform_7, window_bounds = array<i64: 20, 32>}]} {
    %c0 = arith.constant 0 : index
    %c0_0 = arith.constant 0 : index
    %0 = vector.load %arg1[%c0, %c0_0] : memref<20x32xf32, #tpu.memory_space<vmem>>, vector<20x32xf32>
    %cst = arith.constant dense<0.000000e+00> : vector<20xf32>
    %1 = vector.multi_reduction <add>, %0, %cst [1] : vector<20x32xf32> to vector<20xf32>
    %2 = vector.shape_cast %1 : vector<20xf32> to vector<20x1xf32>
    %cst_1 = arith.constant 3.200000e+01 : f32
    %3 = vector.broadcast %cst_1 : f32 to vector<20x1xf32>
    %4 = arith.divf %2, %3 : vector<20x1xf32>
    %5 = vector.broadcast %4 : vector<20x1xf32> to vector<20x32xf32>
    %6 = arith.subf %0, %5 : vector<20x32xf32>
    %7 = arith.mulf %6, %6 : vector<20x32xf32>
    %cst_2 = arith.constant dense<0.000000e+00> : vector<20xf32>
    %8 = vector.multi_reduction <add>, %7, %cst_2 [1] : vector<20x32xf32> to vector<20xf32>
    %9 = vector.shape_cast %8 : vector<20xf32> to vector<20x1xf32>
    %cst_3 = arith.constant 3.200000e+01 : f32
    %10 = vector.broadcast %cst_3 : f32 to vector<20x1xf32>
    %11 = arith.divf %9, %10 : vector<20x1xf32>
    %12 = vector.broadcast %4 : vector<20x1xf32> to vector<20x32xf32>
    %13 = arith.subf %0, %12 : vector<20x32xf32>
    %cst_4 = arith.constant 9.99999974E-6 : f32
    %14 = vector.broadcast %cst_4 : f32 to vector<20x1xf32>
    %15 = arith.addf %11, %14 : vector<20x1xf32>
    %16 = math.rsqrt %15 : vector<20x1xf32>
    %17 = vector.broadcast %16 : vector<20x1xf32> to vector<20x32xf32>
    %18 = arith.mulf %13, %17 : vector<20x32xf32>
    %c0_5 = arith.constant 0 : index
    %c0_6 = arith.constant 0 : index
    %19 = vector.load %arg2[%c0_5, %c0_6] : memref<1x32xf32, #tpu.memory_space<vmem>>, vector<1x32xf32>
    %20 = vector.broadcast %19 : vector<1x32xf32> to vector<20x32xf32>
    %21 = arith.mulf %18, %20 : vector<20x32xf32>
    %c0_7 = arith.constant 0 : index
    %c0_8 = arith.constant 0 : index
    %22 = vector.load %arg3[%c0_7, %c0_8] : memref<1x32xf32, #tpu.memory_space<vmem>>, vector<1x32xf32>
    %23 = vector.broadcast %22 : vector<1x32xf32> to vector<20x32xf32>
    %24 = arith.addf %21, %23 : vector<20x32xf32>
    %25 = arith.truncf %24 : vector<20x32xf32> to vector<20x32xbf16>
    %c0_9 = arith.constant 0 : index
    %c0_10 = arith.constant 0 : index
    %26 = vector.load %arg4[%c0_9, %c0_10] : memref<32x128xbf16, #tpu.memory_space<vmem>>, vector<32x128xbf16>
    %cst_11 = arith.constant dense<0.000000e+00> : vector<20x128xf32>
    %27 = tpu.matmul %25, %26, %cst_11 {dimension_numbers = #tpu.dot_dimension_numbers<[1], [0], [0], [1], [0, 0, 1, 1], [], []>} : vector<20x32xbf16>, vector<32x128xbf16>, vector<20x128xf32> -> vector<20x128xf32>
    %c0_12 = arith.constant 0 : index
    %c0_13 = arith.constant 0 : index
    %28 = vector.load %arg5[%c0_12, %c0_13] : memref<1x128xf32, #tpu.memory_space<vmem>>, vector<1x128xf32>
    %29 = vector.broadcast %28 : vector<1x128xf32> to vector<20x128xf32>
    %30 = arith.addf %27, %29 : vector<20x128xf32>
    %31 = arith.negf %30 : vector<20x128xf32>
    %32 = math.exp %31 : vector<20x128xf32>
    %cst_14 = arith.constant 1.000000e+00 : f32
    %33 = vector.broadcast %cst_14 : f32 to vector<20x128xf32>
    %34 = arith.addf %33, %32 : vector<20x128xf32>
    %35 = arith.divf %33, %34 : vector<20x128xf32>
    %36 = arith.mulf %30, %35 : vector<20x128xf32>
    %37 = arith.truncf %36 : vector<20x128xf32> to vector<20x128xbf16>
    %c0_15 = arith.constant 0 : index
    %c0_16 = arith.constant 0 : index
    %38 = vector.load %arg6[%c0_15, %c0_16] : memref<128x32xbf16, #tpu.memory_space<vmem>>, vector<128x32xbf16>
    %cst_17 = arith.constant dense<0.000000e+00> : vector<20x32xf32>
    %39 = tpu.matmul %37, %38, %cst_17 {dimension_numbers = #tpu.dot_dimension_numbers<[1], [0], [0], [1], [0, 0, 1, 1], [], []>} : vector<20x128xbf16>, vector<128x32xbf16>, vector<20x32xf32> -> vector<20x32xf32>
    %c0_18 = arith.constant 0 : index
    %c0_19 = arith.constant 0 : index
    %40 = vector.load %arg7[%c0_18, %c0_19] : memref<1x32xf32, #tpu.memory_space<vmem>>, vector<1x32xf32>
    %41 = vector.broadcast %40 : vector<1x32xf32> to vector<20x32xf32>
    %42 = arith.addf %39, %41 : vector<20x32xf32>
    %cst_20 = arith.constant 5.000000e-01 : f32
    %43 = vector.broadcast %cst_20 : f32 to vector<20x32xf32>
    %44 = arith.mulf %43, %42 : vector<20x32xf32>
    %45 = arith.addf %0, %44 : vector<20x32xf32>
    %c0_21 = arith.constant 0 : index
    %c0_22 = arith.constant 0 : index
    %46 = vector.load %arg8[%c0_21, %c0_22] : memref<20x32xf32, #tpu.memory_space<vmem>>, vector<20x32xf32>
    tpu.vector_store %arg8[%c0_21, %c0_22], %45 {strides = array<i32>} : memref<20x32xf32, #tpu.memory_space<vmem>>, vector<20x32xf32>,
    return
  }
  func.func @transform_0(%arg0: i32) -> (i32, i32) {
    %c0_i32 = arith.constant 0 : i32
    %c0_i32_0 = arith.constant 0 : i32
    return %arg0, %c0_i32 : i32, i32
  }
  func.func @transform_1(%arg0: i32) -> (i32, i32) {
    %c0_i32 = arith.constant 0 : i32
    %c0_i32_0 = arith.constant 0 : i32
    %c0_i32_1 = arith.constant 0 : i32
    return %c0_i32, %c0_i32_0 : i32, i32
  }
  func.func @transform_2(%arg0: i32) -> (i32, i32) {
    %c0_i32 = arith.constant 0 : i32
    %c0_i32_0 = arith.constant 0 : i32
    %c0_i32_1 = arith.constant 0 : i32
    return %c0_i32, %c0_i32_0 : i32, i32
  }
  func.func @transform_3(%arg0: i32) -> (i32, i32) {
    %c0_i32 = arith.constant 0 : i32
    %c0_i32_0 = arith.constant 0 : i32
    %c0_i32_1 = arith.constant 0 : i32
    return %c0_i32, %c0_i32_0 : i32, i32
  }
  func.func @transform_4(%arg0: i32) -> (i32, i32) {
    %c0_i32 = arith.constant 0 : i32
    %c0_i32_0 = arith.constant 0 : i32
    %c0_i32_1 = arith.constant 0 : i32
    return %c0_i32, %c0_i32_0 : i32, i32
  }
  func.func @transform_5(%arg0: i32) -> (i32, i32) {
    %c0_i32 = arith.constant 0 : i32
    %c0_i32_0 = arith.constant 0 : i32
    %c0_i32_1 = arith.constant 0 : i32
    return %c0_i32, %c0_i32_0 : i32, i32
  }
  func.func @transform_6(%arg0: i32) -> (i32, i32) {
    %c0_i32 = arith.constant 0 : i32
    %c0_i32_0 = arith.constant 0 : i32
    %c0_i32_1 = arith.constant 0 : i32
    return %c0_i32, %c0_i32_0 : i32, i32
  }
  func.func @transform_7(%arg0: i32) -> (i32, i32) {
    %c0_i32 = arith.constant 0 : i32
    %c0_i32_0 = arith.constant 0 : i32
    return %arg0, %c0_i32 : i32, i32
  }
}

module attributes {stable_mosaic.version = 11 : i64} {
  func.func @_linear_kernel(%arg0: i32, %arg1: memref<8x8xf32, #tpu.memory_space<vmem>>, %arg2: memref<8x32xbf16, #tpu.memory_space<vmem>>, %arg3: memref<1x32xf32, #tpu.memory_space<vmem>>, %arg4: memref<8x32xf32, #tpu.memory_space<vmem>>) attributes {dimension_semantics = [#tpu.dimension_semantics<parallel>], iteration_bounds = array<i64: 1>, scalar_prefetch = 0 : i64, scratch_operands = 0 : i64, tpu.core_type = #tpu.core_type<tc>, window_params = [{transform_indices = @transform_0, window_bounds = array<i64: 8, 8>}, {pipeline_mode = #tpu.pipeline_mode<synchronous>, transform_indices = @transform_1, window_bounds = array<i64: 8, 32>}, {pipeline_mode = #tpu.pipeline_mode<synchronous>, transform_indices = @transform_2, window_bounds = array<i64: 1, 32>}, {transform_indices = @transform_3, window_bounds = array<i64: 8, 32>}]} {
    %c0 = arith.constant 0 : index
    %c0_0 = arith.constant 0 : index
    %0 = vector.load %arg1[%c0, %c0_0] : memref<8x8xf32, #tpu.memory_space<vmem>>, vector<8x8xf32>
    %1 = arith.truncf %0 : vector<8x8xf32> to vector<8x8xbf16>
    %c0_1 = arith.constant 0 : index
    %c0_2 = arith.constant 0 : index
    %2 = vector.load %arg2[%c0_1, %c0_2] : memref<8x32xbf16, #tpu.memory_space<vmem>>, vector<8x32xbf16>
    %cst = arith.constant dense<0.000000e+00> : vector<8x32xf32>
    %3 = tpu.matmul %1, %2, %cst {dimension_numbers = #tpu.dot_dimension_numbers<[1], [0], [0], [1], [0, 0, 1, 1], [], []>} : vector<8x8xbf16>, vector<8x32xbf16>, vector<8x32xf32> -> vector<8x32xf32>
    %c0_3 = arith.constant 0 : index
    %c0_4 = arith.constant 0 : index
    %4 = vector.load %arg3[%c0_3, %c0_4] : memref<1x32xf32, #tpu.memory_space<vmem>>, vector<1x32xf32>
    %5 = vector.broadcast %4 : vector<1x32xf32> to vector<8x32xf32>
    %6 = arith.addf %3, %5 : vector<8x32xf32>
    %c0_5 = arith.constant 0 : index
    %c0_6 = arith.constant 0 : index
    %7 = vector.load %arg4[%c0_5, %c0_6] : memref<8x32xf32, #tpu.memory_space<vmem>>, vector<8x32xf32>
    tpu.vector_store %arg4[%c0_5, %c0_6], %6 {strides = array<i32>} : memref<8x32xf32, #tpu.memory_space<vmem>>, vector<8x32xf32>,
    return
  }
  func.func @transform_0(%arg0: i32) -> (i32, i32) {
    %c0_i32 = arith.constant 0 : i32
    %c0_i32_0 = arith.constant 0 : i32
    return %arg0, %c0_i32 : i32, i32
  }
  func.func @transform_1(%arg0: i32) -> (i32, i32) {
    %c0_i32 = arith.constant 0 : i32
    %c0_i32_0 = arith.constant 0 : i32
    %c0_i32_1 = arith.constant 0 : i32
    return %c0_i32, %c0_i32_0 : i32, i32
  }
  func.func @transform_2(%arg0: i32) -> (i32, i32) {
    %c0_i32 = arith.constant 0 : i32
    %c0_i32_0 = arith.constant 0 : i32
    %c0_i32_1 = arith.constant 0 : i32
    return %c0_i32, %c0_i32_0 : i32, i32
  }
  func.func @transform_3(%arg0: i32) -> (i32, i32) {
    %c0_i32 = arith.constant 0 : i32
    %c0_i32_0 = arith.constant 0 : i32
    return %arg0, %c0_i32 : i32, i32
  }
}

module attributes {stable_mosaic.version = 11 : i64} {
  func.func @_ln_kernel(%arg0: i32, %arg1: memref<32x8xf32, #tpu.memory_space<vmem>>, %arg2: memref<1x8xf32, #tpu.memory_space<vmem>>, %arg3: memref<1x8xf32, #tpu.memory_space<vmem>>, %arg4: memref<32x8xf32, #tpu.memory_space<vmem>>) attributes {dimension_semantics = [#tpu.dimension_semantics<parallel>], iteration_bounds = array<i64: 1>, scalar_prefetch = 0 : i64, scratch_operands = 0 : i64, tpu.core_type = #tpu.core_type<tc>, window_params = [{transform_indices = @transform_0, window_bounds = array<i64: 32, 8>}, {pipeline_mode = #tpu.pipeline_mode<synchronous>, transform_indices = @transform_1, window_bounds = array<i64: 1, 8>}, {pipeline_mode = #tpu.pipeline_mode<synchronous>, transform_indices = @transform_2, window_bounds = array<i64: 1, 8>}, {transform_indices = @transform_3, window_bounds = array<i64: 32, 8>}]} {
    %c0 = arith.constant 0 : index
    %c0_0 = arith.constant 0 : index
    %0 = vector.load %arg1[%c0, %c0_0] : memref<32x8xf32, #tpu.memory_space<vmem>>, vector<32x8xf32>
    %cst = arith.constant dense<0.000000e+00> : vector<32xf32>
    %1 = vector.multi_reduction <add>, %0, %cst [1] : vector<32x8xf32> to vector<32xf32>
    %2 = vector.shape_cast %1 : vector<32xf32> to vector<32x1xf32>
    %cst_1 = arith.constant 8.000000e+00 : f32
    %3 = vector.broadcast %cst_1 : f32 to vector<32x1xf32>
    %4 = arith.divf %2, %3 : vector<32x1xf32>
    %5 = vector.broadcast %4 : vector<32x1xf32> to vector<32x8xf32>
    %6 = arith.subf %0, %5 : vector<32x8xf32>
    %7 = arith.mulf %6, %6 : vector<32x8xf32>
    %cst_2 = arith.constant dense<0.000000e+00> : vector<32xf32>
    %8 = vector.multi_reduction <add>, %7, %cst_2 [1] : vector<32x8xf32> to vector<32xf32>
    %9 = vector.shape_cast %8 : vector<32xf32> to vector<32x1xf32>
    %cst_3 = arith.constant 8.000000e+00 : f32
    %10 = vector.broadcast %cst_3 : f32 to vector<32x1xf32>
    %11 = arith.divf %9, %10 : vector<32x1xf32>
    %12 = vector.broadcast %4 : vector<32x1xf32> to vector<32x8xf32>
    %13 = arith.subf %0, %12 : vector<32x8xf32>
    %cst_4 = arith.constant 9.99999974E-6 : f32
    %14 = vector.broadcast %cst_4 : f32 to vector<32x1xf32>
    %15 = arith.addf %11, %14 : vector<32x1xf32>
    %16 = math.rsqrt %15 : vector<32x1xf32>
    %17 = vector.broadcast %16 : vector<32x1xf32> to vector<32x8xf32>
    %18 = arith.mulf %13, %17 : vector<32x8xf32>
    %c0_5 = arith.constant 0 : index
    %c0_6 = arith.constant 0 : index
    %19 = vector.load %arg2[%c0_5, %c0_6] : memref<1x8xf32, #tpu.memory_space<vmem>>, vector<1x8xf32>
    %20 = vector.broadcast %19 : vector<1x8xf32> to vector<32x8xf32>
    %21 = arith.mulf %18, %20 : vector<32x8xf32>
    %c0_7 = arith.constant 0 : index
    %c0_8 = arith.constant 0 : index
    %22 = vector.load %arg3[%c0_7, %c0_8] : memref<1x8xf32, #tpu.memory_space<vmem>>, vector<1x8xf32>
    %23 = vector.broadcast %22 : vector<1x8xf32> to vector<32x8xf32>
    %24 = arith.addf %21, %23 : vector<32x8xf32>
    %c0_9 = arith.constant 0 : index
    %c0_10 = arith.constant 0 : index
    %25 = vector.load %arg4[%c0_9, %c0_10] : memref<32x8xf32, #tpu.memory_space<vmem>>, vector<32x8xf32>
    tpu.vector_store %arg4[%c0_9, %c0_10], %24 {strides = array<i32>} : memref<32x8xf32, #tpu.memory_space<vmem>>, vector<32x8xf32>,
    return
  }
  func.func @transform_0(%arg0: i32) -> (i32, i32) {
    %c0_i32 = arith.constant 0 : i32
    %c0_i32_0 = arith.constant 0 : i32
    return %arg0, %c0_i32 : i32, i32
  }
  func.func @transform_1(%arg0: i32) -> (i32, i32) {
    %c0_i32 = arith.constant 0 : i32
    %c0_i32_0 = arith.constant 0 : i32
    %c0_i32_1 = arith.constant 0 : i32
    return %c0_i32, %c0_i32_0 : i32, i32
  }
  func.func @transform_2(%arg0: i32) -> (i32, i32) {
    %c0_i32 = arith.constant 0 : i32
    %c0_i32_0 = arith.constant 0 : i32
    %c0_i32_1 = arith.constant 0 : i32
    return %c0_i32, %c0_i32_0 : i32, i32
  }
  func.func @transform_3(%arg0: i32) -> (i32, i32) {
    %c0_i32 = arith.constant 0 : i32
    %c0_i32_0 = arith.constant 0 : i32
    return %arg0, %c0_i32 : i32, i32
  }
}

module attributes {stable_mosaic.version = 11 : i64} {
  func.func @_ln_glu_kernel(%arg0: i32, %arg1: memref<20x32xf32, #tpu.memory_space<vmem>>, %arg2: memref<1x32xf32, #tpu.memory_space<vmem>>, %arg3: memref<1x32xf32, #tpu.memory_space<vmem>>, %arg4: memref<32x64xbf16, #tpu.memory_space<vmem>>, %arg5: memref<1x64xf32, #tpu.memory_space<vmem>>, %arg6: memref<32x64xbf16, #tpu.memory_space<vmem>>, %arg7: memref<1x64xf32, #tpu.memory_space<vmem>>, %arg8: memref<20x64xf32, #tpu.memory_space<vmem>>) attributes {dimension_semantics = [#tpu.dimension_semantics<parallel>], iteration_bounds = array<i64: 1>, scalar_prefetch = 0 : i64, scratch_operands = 0 : i64, tpu.core_type = #tpu.core_type<tc>, window_params = [{transform_indices = @transform_0, window_bounds = array<i64: 20, 32>}, {pipeline_mode = #tpu.pipeline_mode<synchronous>, transform_indices = @transform_1, window_bounds = array<i64: 1, 32>}, {pipeline_mode = #tpu.pipeline_mode<synchronous>, transform_indices = @transform_2, window_bounds = array<i64: 1, 32>}, {pipeline_mode = #tpu.pipeline_mode<synchronous>, transform_indices = @transform_3, window_bounds = array<i64: 32, 64>}, {pipeline_mode = #tpu.pipeline_mode<synchronous>, transform_indices = @transform_4, window_bounds = array<i64: 1, 64>}, {pipeline_mode = #tpu.pipeline_mode<synchronous>, transform_indices = @transform_5, window_bounds = array<i64: 32, 64>}, {pipeline_mode = #tpu.pipeline_mode<synchronous>, transform_indices = @transform_6, window_bounds = array<i64: 1, 64>}, {transform_indices = @transform_7, window_bounds = array<i64: 20, 64>}]} {
    %c0 = arith.constant 0 : index
    %c0_0 = arith.constant 0 : index
    %0 = vector.load %arg1[%c0, %c0_0] : memref<20x32xf32, #tpu.memory_space<vmem>>, vector<20x32xf32>
    %cst = arith.constant dense<0.000000e+00> : vector<20xf32>
    %1 = vector.multi_reduction <add>, %0, %cst [1] : vector<20x32xf32> to vector<20xf32>
    %2 = vector.shape_cast %1 : vector<20xf32> to vector<20x1xf32>
    %cst_1 = arith.constant 3.200000e+01 : f32
    %3 = vector.broadcast %cst_1 : f32 to vector<20x1xf32>
    %4 = arith.divf %2, %3 : vector<20x1xf32>
    %5 = vector.broadcast %4 : vector<20x1xf32> to vector<20x32xf32>
    %6 = arith.subf %0, %5 : vector<20x32xf32>
    %7 = arith.mulf %6, %6 : vector<20x32xf32>
    %cst_2 = arith.constant dense<0.000000e+00> : vector<20xf32>
    %8 = vector.multi_reduction <add>, %7, %cst_2 [1] : vector<20x32xf32> to vector<20xf32>
    %9 = vector.shape_cast %8 : vector<20xf32> to vector<20x1xf32>
    %cst_3 = arith.constant 3.200000e+01 : f32
    %10 = vector.broadcast %cst_3 : f32 to vector<20x1xf32>
    %11 = arith.divf %9, %10 : vector<20x1xf32>
    %12 = vector.broadcast %4 : vector<20x1xf32> to vector<20x32xf32>
    %13 = arith.subf %0, %12 : vector<20x32xf32>
    %cst_4 = arith.constant 9.99999974E-6 : f32
    %14 = vector.broadcast %cst_4 : f32 to vector<20x1xf32>
    %15 = arith.addf %11, %14 : vector<20x1xf32>
    %16 = math.rsqrt %15 : vector<20x1xf32>
    %17 = vector.broadcast %16 : vector<20x1xf32> to vector<20x32xf32>
    %18 = arith.mulf %13, %17 : vector<20x32xf32>
    %c0_5 = arith.constant 0 : index
    %c0_6 = arith.constant 0 : index
    %19 = vector.load %arg2[%c0_5, %c0_6] : memref<1x32xf32, #tpu.memory_space<vmem>>, vector<1x32xf32>
    %20 = vector.broadcast %19 : vector<1x32xf32> to vector<20x32xf32>
    %21 = arith.mulf %18, %20 : vector<20x32xf32>
    %c0_7 = arith.constant 0 : index
    %c0_8 = arith.constant 0 : index
    %22 = vector.load %arg3[%c0_7, %c0_8] : memref<1x32xf32, #tpu.memory_space<vmem>>, vector<1x32xf32>
    %23 = vector.broadcast %22 : vector<1x32xf32> to vector<20x32xf32>
    %24 = arith.addf %21, %23 : vector<20x32xf32>
    %25 = arith.truncf %24 : vector<20x32xf32> to vector<20x32xbf16>
    %c0_9 = arith.constant 0 : index
    %c0_10 = arith.constant 0 : index
    %26 = vector.load %arg4[%c0_9, %c0_10] : memref<32x64xbf16, #tpu.memory_space<vmem>>, vector<32x64xbf16>
    %cst_11 = arith.constant dense<0.000000e+00> : vector<20x64xf32>
    %27 = tpu.matmul %25, %26, %cst_11 {dimension_numbers = #tpu.dot_dimension_numbers<[1], [0], [0], [1], [0, 0, 1, 1], [], []>} : vector<20x32xbf16>, vector<32x64xbf16>, vector<20x64xf32> -> vector<20x64xf32>
    %c0_12 = arith.constant 0 : index
    %c0_13 = arith.constant 0 : index
    %28 = vector.load %arg5[%c0_12, %c0_13] : memref<1x64xf32, #tpu.memory_space<vmem>>, vector<1x64xf32>
    %29 = vector.broadcast %28 : vector<1x64xf32> to vector<20x64xf32>
    %30 = arith.addf %27, %29 : vector<20x64xf32>
    %c0_14 = arith.constant 0 : index
    %c0_15 = arith.constant 0 : index
    %31 = vector.load %arg6[%c0_14, %c0_15] : memref<32x64xbf16, #tpu.memory_space<vmem>>, vector<32x64xbf16>
    %cst_16 = arith.constant dense<0.000000e+00> : vector<20x64xf32>
    %32 = tpu.matmul %25, %31, %cst_16 {dimension_numbers = #tpu.dot_dimension_numbers<[1], [0], [0], [1], [0, 0, 1, 1], [], []>} : vector<20x32xbf16>, vector<32x64xbf16>, vector<20x64xf32> -> vector<20x64xf32>
    %c0_17 = arith.constant 0 : index
    %c0_18 = arith.constant 0 : index
    %33 = vector.load %arg7[%c0_17, %c0_18] : memref<1x64xf32, #tpu.memory_space<vmem>>, vector<1x64xf32>
    %34 = vector.broadcast %33 : vector<1x64xf32> to vector<20x64xf32>
    %35 = arith.addf %32, %34 : vector<20x64xf32>
    %36 = arith.negf %35 : vector<20x64xf32>
    %37 = math.exp %36 : vector<20x64xf32>
    %cst_19 = arith.constant 1.000000e+00 : f32
    %38 = vector.broadcast %cst_19 : f32 to vector<20x64xf32>
    %39 = arith.addf %38, %37 : vector<20x64xf32>
    %40 = arith.divf %38, %39 : vector<20x64xf32>
    %41 = arith.mulf %30, %40 : vector<20x64xf32>
    %c0_20 = arith.constant 0 : index
    %c0_21 = arith.constant 0 : index
    %42 = vector.load %arg8[%c0_20, %c0_21] : memref<20x64xf32, #tpu.memory_space<vmem>>, vector<20x64xf32>
    tpu.vector_store %arg8[%c0_20, %c0_21], %41 {strides = array<i32>} : memref<20x64xf32, #tpu.memory_space<vmem>>, vector<20x64xf32>,
    return
  }
  func.func @transform_0(%arg0: i32) -> (i32, i32) {
    %c0_i32 = arith.constant 0 : i32
    %c0_i32_0 = arith.constant 0 : i32
    return %arg0, %c0_i32 : i32, i32
  }
  func.func @transform_1(%arg0: i32) -> (i32, i32) {
    %c0_i32 = arith.constant 0 : i32
    %c0_i32_0 = arith.constant 0 : i32
    %c0_i32_1 = arith.constant 0 : i32
    return %c0_i32, %c0_i32_0 : i32, i32
  }
  func.func @transform_2(%arg0: i32) -> (i32, i32) {
    %c0_i32 = arith.constant 0 : i32
    %c0_i32_0 = arith.constant 0 : i32
    %c0_i32_1 = arith.constant 0 : i32
    return %c0_i32, %c0_i32_0 : i32, i32
  }
  func.func @transform_3(%arg0: i32) -> (i32, i32) {
    %c0_i32 = arith.constant 0 : i32
    %c0_i32_0 = arith.constant 0 : i32
    %c0_i32_1 = arith.constant 0 : i32
    return %c0_i32, %c0_i32_0 : i32, i32
  }
  func.func @transform_4(%arg0: i32) -> (i32, i32) {
    %c0_i32 = arith.constant 0 : i32
    %c0_i32_0 = arith.constant 0 : i32
    %c0_i32_1 = arith.constant 0 : i32
    return %c0_i32, %c0_i32_0 : i32, i32
  }
  func.func @transform_5(%arg0: i32) -> (i32, i32) {
    %c0_i32 = arith.constant 0 : i32
    %c0_i32_0 = arith.constant 0 : i32
    %c0_i32_1 = arith.constant 0 : i32
    return %c0_i32, %c0_i32_0 : i32, i32
  }
  func.func @transform_6(%arg0: i32) -> (i32, i32) {
    %c0_i32 = arith.constant 0 : i32
    %c0_i32_0 = arith.constant 0 : i32
    %c0_i32_1 = arith.constant 0 : i32
    return %c0_i32, %c0_i32_0 : i32, i32
  }
  func.func @transform_7(%arg0: i32) -> (i32, i32) {
    %c0_i32 = arith.constant 0 : i32
    %c0_i32_0 = arith.constant 0 : i32
    return %arg0, %c0_i32 : i32, i32
  }
}

module attributes {stable_mosaic.version = 11 : i64} {
  func.func @_attn_kernel(%arg0: i32, %arg1: memref<1x14x32xf32, #tpu.memory_space<vmem>>, %arg2: memref<32x96xbf16, #tpu.memory_space<vmem>>, %arg3: memref<32x32xbf16, #tpu.memory_space<vmem>>, %arg4: memref<1x32xf32, #tpu.memory_space<vmem>>, %arg5: memref<1x10x32xf32, #tpu.memory_space<vmem>>, %arg6: memref<1x10x32xf32, #tpu.memory_space<vmem>>, %arg7: memref<1x4x14x14xf32, #tpu.memory_space<vmem>>) attributes {dimension_semantics = [#tpu.dimension_semantics<parallel>], iteration_bounds = array<i64: 2>, scalar_prefetch = 0 : i64, scratch_operands = 0 : i64, tpu.core_type = #tpu.core_type<tc>, window_params = [{transform_indices = @transform_0, window_bounds = array<i64: 1, 14, 32>}, {pipeline_mode = #tpu.pipeline_mode<synchronous>, transform_indices = @transform_1, window_bounds = array<i64: 32, 96>}, {pipeline_mode = #tpu.pipeline_mode<synchronous>, transform_indices = @transform_2, window_bounds = array<i64: 32, 32>}, {pipeline_mode = #tpu.pipeline_mode<synchronous>, transform_indices = @transform_3, window_bounds = array<i64: 1, 32>}, {transform_indices = @transform_4, window_bounds = array<i64: 1, 10, 32>}, {transform_indices = @transform_5, window_bounds = array<i64: 1, 10, 32>}, {transform_indices = @transform_6, window_bounds = array<i64: 1, 4, 14, 14>}]} {
    %c0 = arith.constant 0 : index
    %c0_0 = arith.constant 0 : index
    %c0_1 = arith.constant 0 : index
    %0 = vector.load %arg1[%c0, %c0_0, %c0_1] : memref<1x14x32xf32, #tpu.memory_space<vmem>>, vector<1x14x32xf32>
    %1 = vector.shape_cast %0 : vector<1x14x32xf32> to vector<14x32xf32>
    %2 = arith.truncf %1 : vector<14x32xf32> to vector<14x32xbf16>
    %c0_2 = arith.constant 0 : index
    %c0_3 = arith.constant 0 : index
    %3 = vector.load %arg2[%c0_2, %c0_3] : memref<32x96xbf16, #tpu.memory_space<vmem>>, vector<32x96xbf16>
    %cst = arith.constant dense<0.000000e+00> : vector<14x96xf32>
    %4 = tpu.matmul %2, %3, %cst {dimension_numbers = #tpu.dot_dimension_numbers<[1], [0], [0], [1], [0, 0, 1, 1], [], []>} : vector<14x32xbf16>, vector<32x96xbf16>, vector<14x96xf32> -> vector<14x96xf32>
    %5 = arith.truncf %4 : vector<14x96xf32> to vector<14x96xbf16>
    %6 = vector.extract_strided_slice %5 {offsets = [0, 0], sizes = [14, 8], strides = [1, 1]} : vector<14x96xbf16> to vector<14x8xbf16>
    %7 = vector.extract_strided_slice %5 {offsets = [0, 32], sizes = [14, 8], strides = [1, 1]} : vector<14x96xbf16> to vector<14x8xbf16>
    %8 = vector.extract_strided_slice %5 {offsets = [0, 64], sizes = [14, 8], strides = [1, 1]} : vector<14x96xbf16> to vector<14x8xbf16>
    %9 = tpu.transpose %7, [1, 0] : vector<14x8xbf16> -> vector<8x14xbf16>
    %cst_4 = arith.constant dense<0.000000e+00> : vector<14x14xf32>
    %10 = tpu.matmul %6, %9, %cst_4 {dimension_numbers = #tpu.dot_dimension_numbers<[1], [0], [0], [1], [0, 0, 1, 1], [], []>} : vector<14x8xbf16>, vector<8x14xbf16>, vector<14x14xf32> -> vector<14x14xf32>
    %cst_5 = arith.constant 0.353553385 : f32
    %11 = vector.broadcast %cst_5 : f32 to vector<14x14xf32>
    %12 = arith.mulf %10, %11 : vector<14x14xf32>
    %cst_6 = arith.constant dense<0xFF800000> : vector<14xf32>
    %13 = vector.multi_reduction <maximumf>, %12, %cst_6 [1] : vector<14x14xf32> to vector<14xf32>
    %14 = vector.shape_cast %13 : vector<14xf32> to vector<14x1xf32>
    %15 = vector.broadcast %14 : vector<14x1xf32> to vector<14x14xf32>
    %16 = arith.subf %12, %15 : vector<14x14xf32>
    %17 = math.exp %16 : vector<14x14xf32>
    %cst_7 = arith.constant dense<0.000000e+00> : vector<14xf32>
    %18 = vector.multi_reduction <add>, %17, %cst_7 [1] : vector<14x14xf32> to vector<14xf32>
    %19 = vector.shape_cast %18 : vector<14xf32> to vector<14x1xf32>
    %20 = tpu.reciprocal %19 {approx = true} : vector<14x1xf32> -> vector<14x1xf32>
    %21 = vector.broadcast %20 : vector<14x1xf32> to vector<14x14xf32>
    %22 = arith.mulf %17, %21 : vector<14x14xf32>
    %c0_8 = arith.constant 0 : index
    %c0_9 = arith.constant 0 : index
    %c0_10 = arith.constant 0 : index
    %c0_11 = arith.constant 0 : index
    %23 = vector.load %arg7[%c0_8, %c0_9, %c0_10, %c0_11] : memref<1x4x14x14xf32, #tpu.memory_space<vmem>>, vector<1x1x14x14xf32>
    %24 = vector.shape_cast %23 : vector<1x1x14x14xf32> to vector<14x14xf32>
    %25 = vector.shape_cast %22 : vector<14x14xf32> to vector<1x1x14x14xf32>
    tpu.vector_store %arg7[%c0_8, %c0_9, %c0_10, %c0_11], %25 {strides = array<i32>} : memref<1x4x14x14xf32, #tpu.memory_space<vmem>>, vector<1x1x14x14xf32>,
    %26 = arith.truncf %22 : vector<14x14xf32> to vector<14x14xbf16>
    %cst_12 = arith.constant dense<0.000000e+00> : vector<14x8xf32>
    %27 = tpu.matmul %26, %8, %cst_12 {dimension_numbers = #tpu.dot_dimension_numbers<[1], [0], [0], [1], [0, 0, 1, 1], [], []>} : vector<14x14xbf16>, vector<14x8xbf16>, vector<14x8xf32> -> vector<14x8xf32>
    %28 = vector.extract_strided_slice %5 {offsets = [0, 8], sizes = [14, 8], strides = [1, 1]} : vector<14x96xbf16> to vector<14x8xbf16>
    %29 = vector.extract_strided_slice %5 {offsets = [0, 40], sizes = [14, 8], strides = [1, 1]} : vector<14x96xbf16> to vector<14x8xbf16>
    %30 = vector.extract_strided_slice %5 {offsets = [0, 72], sizes = [14, 8], strides = [1, 1]} : vector<14x96xbf16> to vector<14x8xbf16>
    %31 = tpu.transpose %29, [1, 0] : vector<14x8xbf16> -> vector<8x14xbf16>
    %cst_13 = arith.constant dense<0.000000e+00> : vector<14x14xf32>
    %32 = tpu.matmul %28, %31, %cst_13 {dimension_numbers = #tpu.dot_dimension_numbers<[1], [0], [0], [1], [0, 0, 1, 1], [], []>} : vector<14x8xbf16>, vector<8x14xbf16>, vector<14x14xf32> -> vector<14x14xf32>
    %cst_14 = arith.constant 0.353553385 : f32
    %33 = vector.broadcast %cst_14 : f32 to vector<14x14xf32>
    %34 = arith.mulf %32, %33 : vector<14x14xf32>
    %cst_15 = arith.constant dense<0xFF800000> : vector<14xf32>
    %35 = vector.multi_reduction <maximumf>, %34, %cst_15 [1] : vector<14x14xf32> to vector<14xf32>
    %36 = vector.shape_cast %35 : vector<14xf32> to vector<14x1xf32>
    %37 = vector.broadcast %36 : vector<14x1xf32> to vector<14x14xf32>
    %38 = arith.subf %34, %37 : vector<14x14xf32>
    %39 = math.exp %38 : vector<14x14xf32>
    %cst_16 = arith.constant dense<0.000000e+00> : vector<14xf32>
    %40 = vector.multi_reduction <add>, %39, %cst_16 [1] : vector<14x14xf32> to vector<14xf32>
    %41 = vector.shape_cast %40 : vector<14xf32> to vector<14x1xf32>
    %42 = tpu.reciprocal %41 {approx = true} : vector<14x1xf32> -> vector<14x1xf32>
    %43 = vector.broadcast %42 : vector<14x1xf32> to vector<14x14xf32>
    %44 = arith.mulf %39, %43 : vector<14x14xf32>
    %c0_17 = arith.constant 0 : index
    %c1 = arith.constant 1 : index
    %c0_18 = arith.constant 0 : index
    %c0_19 = arith.constant 0 : index
    %45 = vector.load %arg7[%c0_17, %c1, %c0_18, %c0_19] : memref<1x4x14x14xf32, #tpu.memory_space<vmem>>, vector<1x1x14x14xf32>
    %46 = vector.shape_cast %45 : vector<1x1x14x14xf32> to vector<14x14xf32>
    %47 = vector.shape_cast %44 : vector<14x14xf32> to vector<1x1x14x14xf32>
    tpu.vector_store %arg7[%c0_17, %c1, %c0_18, %c0_19], %47 {strides = array<i32>} : memref<1x4x14x14xf32, #tpu.memory_space<vmem>>, vector<1x1x14x14xf32>,
    %48 = arith.truncf %44 : vector<14x14xf32> to vector<14x14xbf16>
    %cst_20 = arith.constant dense<0.000000e+00> : vector<14x8xf32>
    %49 = tpu.matmul %48, %30, %cst_20 {dimension_numbers = #tpu.dot_dimension_numbers<[1], [0], [0], [1], [0, 0, 1, 1], [], []>} : vector<14x14xbf16>, vector<14x8xbf16>, vector<14x8xf32> -> vector<14x8xf32>
    %50 = vector.extract_strided_slice %5 {offsets = [0, 16], sizes = [14, 8], strides = [1, 1]} : vector<14x96xbf16> to vector<14x8xbf16>
    %51 = vector.extract_strided_slice %5 {offsets = [0, 48], sizes = [14, 8], strides = [1, 1]} : vector<14x96xbf16> to vector<14x8xbf16>
    %52 = vector.extract_strided_slice %5 {offsets = [0, 80], sizes = [14, 8], strides = [1, 1]} : vector<14x96xbf16> to vector<14x8xbf16>
    %53 = tpu.transpose %51, [1, 0] : vector<14x8xbf16> -> vector<8x14xbf16>
    %cst_21 = arith.constant dense<0.000000e+00> : vector<14x14xf32>
    %54 = tpu.matmul %50, %53, %cst_21 {dimension_numbers = #tpu.dot_dimension_numbers<[1], [0], [0], [1], [0, 0, 1, 1], [], []>} : vector<14x8xbf16>, vector<8x14xbf16>, vector<14x14xf32> -> vector<14x14xf32>
    %cst_22 = arith.constant 0.353553385 : f32
    %55 = vector.broadcast %cst_22 : f32 to vector<14x14xf32>
    %56 = arith.mulf %54, %55 : vector<14x14xf32>
    %cst_23 = arith.constant dense<0xFF800000> : vector<14xf32>
    %57 = vector.multi_reduction <maximumf>, %56, %cst_23 [1] : vector<14x14xf32> to vector<14xf32>
    %58 = vector.shape_cast %57 : vector<14xf32> to vector<14x1xf32>
    %59 = vector.broadcast %58 : vector<14x1xf32> to vector<14x14xf32>
    %60 = arith.subf %56, %59 : vector<14x14xf32>
    %61 = math.exp %60 : vector<14x14xf32>
    %cst_24 = arith.constant dense<0.000000e+00> : vector<14xf32>
    %62 = vector.multi_reduction <add>, %61, %cst_24 [1] : vector<14x14xf32> to vector<14xf32>
    %63 = vector.shape_cast %62 : vector<14xf32> to vector<14x1xf32>
    %64 = tpu.reciprocal %63 {approx = true} : vector<14x1xf32> -> vector<14x1xf32>
    %65 = vector.broadcast %64 : vector<14x1xf32> to vector<14x14xf32>
    %66 = arith.mulf %61, %65 : vector<14x14xf32>
    %c0_25 = arith.constant 0 : index
    %c2 = arith.constant 2 : index
    %c0_26 = arith.constant 0 : index
    %c0_27 = arith.constant 0 : index
    %67 = vector.load %arg7[%c0_25, %c2, %c0_26, %c0_27] : memref<1x4x14x14xf32, #tpu.memory_space<vmem>>, vector<1x1x14x14xf32>
    %68 = vector.shape_cast %67 : vector<1x1x14x14xf32> to vector<14x14xf32>
    %69 = vector.shape_cast %66 : vector<14x14xf32> to vector<1x1x14x14xf32>
    tpu.vector_store %arg7[%c0_25, %c2, %c0_26, %c0_27], %69 {strides = array<i32>} : memref<1x4x14x14xf32, #tpu.memory_space<vmem>>, vector<1x1x14x14xf32>,
    %70 = arith.truncf %66 : vector<14x14xf32> to vector<14x14xbf16>
    %cst_28 = arith.constant dense<0.000000e+00> : vector<14x8xf32>
    %71 = tpu.matmul %70, %52, %cst_28 {dimension_numbers = #tpu.dot_dimension_numbers<[1], [0], [0], [1], [0, 0, 1, 1], [], []>} : vector<14x14xbf16>, vector<14x8xbf16>, vector<14x8xf32> -> vector<14x8xf32>
    %72 = vector.extract_strided_slice %5 {offsets = [0, 24], sizes = [14, 8], strides = [1, 1]} : vector<14x96xbf16> to vector<14x8xbf16>
    %73 = vector.extract_strided_slice %5 {offsets = [0, 56], sizes = [14, 8], strides = [1, 1]} : vector<14x96xbf16> to vector<14x8xbf16>
    %74 = vector.extract_strided_slice %5 {offsets = [0, 88], sizes = [14, 8], strides = [1, 1]} : vector<14x96xbf16> to vector<14x8xbf16>
    %75 = tpu.transpose %73, [1, 0] : vector<14x8xbf16> -> vector<8x14xbf16>
    %cst_29 = arith.constant dense<0.000000e+00> : vector<14x14xf32>
    %76 = tpu.matmul %72, %75, %cst_29 {dimension_numbers = #tpu.dot_dimension_numbers<[1], [0], [0], [1], [0, 0, 1, 1], [], []>} : vector<14x8xbf16>, vector<8x14xbf16>, vector<14x14xf32> -> vector<14x14xf32>
    %cst_30 = arith.constant 0.353553385 : f32
    %77 = vector.broadcast %cst_30 : f32 to vector<14x14xf32>
    %78 = arith.mulf %76, %77 : vector<14x14xf32>
    %cst_31 = arith.constant dense<0xFF800000> : vector<14xf32>
    %79 = vector.multi_reduction <maximumf>, %78, %cst_31 [1] : vector<14x14xf32> to vector<14xf32>
    %80 = vector.shape_cast %79 : vector<14xf32> to vector<14x1xf32>
    %81 = vector.broadcast %80 : vector<14x1xf32> to vector<14x14xf32>
    %82 = arith.subf %78, %81 : vector<14x14xf32>
    %83 = math.exp %82 : vector<14x14xf32>
    %cst_32 = arith.constant dense<0.000000e+00> : vector<14xf32>
    %84 = vector.multi_reduction <add>, %83, %cst_32 [1] : vector<14x14xf32> to vector<14xf32>
    %85 = vector.shape_cast %84 : vector<14xf32> to vector<14x1xf32>
    %86 = tpu.reciprocal %85 {approx = true} : vector<14x1xf32> -> vector<14x1xf32>
    %87 = vector.broadcast %86 : vector<14x1xf32> to vector<14x14xf32>
    %88 = arith.mulf %83, %87 : vector<14x14xf32>
    %c0_33 = arith.constant 0 : index
    %c3 = arith.constant 3 : index
    %c0_34 = arith.constant 0 : index
    %c0_35 = arith.constant 0 : index
    %89 = vector.load %arg7[%c0_33, %c3, %c0_34, %c0_35] : memref<1x4x14x14xf32, #tpu.memory_space<vmem>>, vector<1x1x14x14xf32>
    %90 = vector.shape_cast %89 : vector<1x1x14x14xf32> to vector<14x14xf32>
    %91 = vector.shape_cast %88 : vector<14x14xf32> to vector<1x1x14x14xf32>
    tpu.vector_store %arg7[%c0_33, %c3, %c0_34, %c0_35], %91 {strides = array<i32>} : memref<1x4x14x14xf32, #tpu.memory_space<vmem>>, vector<1x1x14x14xf32>,
    %92 = arith.truncf %88 : vector<14x14xf32> to vector<14x14xbf16>
    %cst_36 = arith.constant dense<0.000000e+00> : vector<14x8xf32>
    %93 = tpu.matmul %92, %74, %cst_36 {dimension_numbers = #tpu.dot_dimension_numbers<[1], [0], [0], [1], [0, 0, 1, 1], [], []>} : vector<14x14xbf16>, vector<14x8xbf16>, vector<14x8xf32> -> vector<14x8xf32>
    %94 = tpu.concatenate %27, %49, %71, %93 in 1 : vector<14x8xf32>, vector<14x8xf32>, vector<14x8xf32>, vector<14x8xf32> -> vector<14x32xf32>
    %95 = arith.truncf %94 : vector<14x32xf32> to vector<14x32xbf16>
    %c0_37 = arith.constant 0 : index
    %c0_38 = arith.constant 0 : index
    %96 = vector.load %arg3[%c0_37, %c0_38] : memref<32x32xbf16, #tpu.memory_space<vmem>>, vector<32x32xbf16>
    %cst_39 = arith.constant dense<0.000000e+00> : vector<14x32xf32>
    %97 = tpu.matmul %95, %96, %cst_39 {dimension_numbers = #tpu.dot_dimension_numbers<[1], [0], [0], [1], [0, 0, 1, 1], [], []>} : vector<14x32xbf16>, vector<32x32xbf16>, vector<14x32xf32> -> vector<14x32xf32>
    %c0_40 = arith.constant 0 : index
    %c0_41 = arith.constant 0 : index
    %98 = vector.load %arg4[%c0_40, %c0_41] : memref<1x32xf32, #tpu.memory_space<vmem>>, vector<1x32xf32>
    %99 = vector.broadcast %98 : vector<1x32xf32> to vector<14x32xf32>
    %100 = arith.addf %97, %99 : vector<14x32xf32>
    %101 = vector.extract_strided_slice %100 {offsets = [0, 0], sizes = [1, 32], strides = [1, 1]} : vector<14x32xf32> to vector<1x32xf32>
    %102 = vector.extract_strided_slice %100 {offsets = [10, 0], sizes = [4, 32], strides = [1, 1]} : vector<14x32xf32> to vector<4x32xf32>
    %cst_42 = arith.constant dense<0.000000e+00> : vector<32xf32>
    %103 = vector.multi_reduction <add>, %102, %cst_42 [0] : vector<4x32xf32> to vector<32xf32>
    %104 = vector.shape_cast %103 : vector<32xf32> to vector<1x32xf32>
    %cst_43 = arith.constant 4.000000e+00 : f32
    %105 = vector.broadcast %cst_43 : f32 to vector<1x32xf32>
    %106 = arith.divf %104, %105 : vector<1x32xf32>
    %107 = arith.addf %101, %106 : vector<1x32xf32>
    %108 = vector.extract_strided_slice %100 {offsets = [1, 0], sizes = [9, 32], strides = [1, 1]} : vector<14x32xf32> to vector<9x32xf32>
    %cst_44 = arith.constant dense<0.000000e+00> : vector<32xf32>
    %109 = vector.multi_reduction <add>, %108, %cst_44 [0] : vector<9x32xf32> to vector<32xf32>
    %110 = vector.shape_cast %109 : vector<32xf32> to vector<1x32xf32>
    %cst_45 = arith.constant 9.000000e+00 : f32
    %111 = vector.broadcast %cst_45 : f32 to vector<1x32xf32>
    %112 = arith.divf %110, %111 : vector<1x32xf32>
    %113 = arith.addf %107, %112 : vector<1x32xf32>
    %114 = vector.extract_strided_slice %100 {offsets = [1, 0], sizes = [9, 32], strides = [1, 1]} : vector<14x32xf32> to vector<9x32xf32>
    %115 = tpu.concatenate %113, %114 in 0 : vector<1x32xf32>, vector<9x32xf32> -> vector<10x32xf32>
    %c0_46 = arith.constant 0 : index
    %c0_47 = arith.constant 0 : index
    %c0_48 = arith.constant 0 : index
    %116 = vector.load %arg5[%c0_46, %c0_47, %c0_48] : memref<1x10x32xf32, #tpu.memory_space<vmem>>, vector<1x10x32xf32>
    %117 = vector.shape_cast %116 : vector<1x10x32xf32> to vector<10x32xf32>
    %118 = arith.addf %115, %117 : vector<10x32xf32>
    %c0_49 = arith.constant 0 : index
    %c0_50 = arith.constant 0 : index
    %c0_51 = arith.constant 0 : index
    %119 = vector.load %arg6[%c0_49, %c0_50, %c0_51] : memref<1x10x32xf32, #tpu.memory_space<vmem>>, vector<1x10x32xf32>
    %120 = vector.shape_cast %119 : vector<1x10x32xf32> to vector<10x32xf32>
    %121 = vector.shape_cast %118 : vector<10x32xf32> to vector<1x10x32xf32>
    tpu.vector_store %arg6[%c0_49, %c0_50, %c0_51], %121 {strides = array<i32>} : memref<1x10x32xf32, #tpu.memory_space<vmem>>, vector<1x10x32xf32>,
    return
  }
  func.func @transform_0(%arg0: i32) -> (i32, i32, i32) {
    %c0_i32 = arith.constant 0 : i32
    %c0_i32_0 = arith.constant 0 : i32
    %c0_i32_1 = arith.constant 0 : i32
    return %arg0, %c0_i32, %c0_i32_0 : i32, i32, i32
  }
  func.func @transform_1(%arg0: i32) -> (i32, i32) {
    %c0_i32 = arith.constant 0 : i32
    %c0_i32_0 = arith.constant 0 : i32
    %c0_i32_1 = arith.constant 0 : i32
    return %c0_i32, %c0_i32_0 : i32, i32
  }
  func.func @transform_2(%arg0: i32) -> (i32, i32) {
    %c0_i32 = arith.constant 0 : i32
    %c0_i32_0 = arith.constant 0 : i32
    %c0_i32_1 = arith.constant 0 : i32
    return %c0_i32, %c0_i32_0 : i32, i32
  }
  func.func @transform_3(%arg0: i32) -> (i32, i32) {
    %c0_i32 = arith.constant 0 : i32
    %c0_i32_0 = arith.constant 0 : i32
    %c0_i32_1 = arith.constant 0 : i32
    return %c0_i32, %c0_i32_0 : i32, i32
  }
  func.func @transform_4(%arg0: i32) -> (i32, i32, i32) {
    %c0_i32 = arith.constant 0 : i32
    %c0_i32_0 = arith.constant 0 : i32
    %c0_i32_1 = arith.constant 0 : i32
    return %arg0, %c0_i32, %c0_i32_0 : i32, i32, i32
  }
  func.func @transform_5(%arg0: i32) -> (i32, i32, i32) {
    %c0_i32 = arith.constant 0 : i32
    %c0_i32_0 = arith.constant 0 : i32
    %c0_i32_1 = arith.constant 0 : i32
    return %arg0, %c0_i32, %c0_i32_0 : i32, i32, i32
  }
  func.func @transform_6(%arg0: i32) -> (i32, i32, i32, i32) {
    %c0_i32 = arith.constant 0 : i32
    %c0_i32_0 = arith.constant 0 : i32
    %c0_i32_1 = arith.constant 0 : i32
    %c0_i32_2 = arith.constant 0 : i32
    return %arg0, %c0_i32, %c0_i32_0, %c0_i32_1 : i32, i32, i32, i32
  }
}

module attributes {stable_mosaic.version = 11 : i64} {
  func.func @_dwconv_kernel(%arg0: i32, %arg1: memref<1x10x64xf32, #tpu.memory_space<vmem>>, %arg2: memref<7x64xf32, #tpu.memory_space<vmem>>, %arg3: memref<1x64xf32, #tpu.memory_space<vmem>>, %arg4: memref<1x10x64xf32, #tpu.memory_space<vmem>>, %arg5: memref<1x1x64xf32, #tpu.memory_space<vmem>>, %arg6: memref<1x1x64xf32, #tpu.memory_space<vmem>>) attributes {dimension_semantics = [#tpu.dimension_semantics<parallel>], iteration_bounds = array<i64: 2>, scalar_prefetch = 0 : i64, scratch_operands = 0 : i64, tpu.core_type = #tpu.core_type<tc>, window_params = [{transform_indices = @transform_0, window_bounds = array<i64: 1, 10, 64>}, {pipeline_mode = #tpu.pipeline_mode<synchronous>, transform_indices = @transform_1, window_bounds = array<i64: 7, 64>}, {pipeline_mode = #tpu.pipeline_mode<synchronous>, transform_indices = @transform_2, window_bounds = array<i64: 1, 64>}, {transform_indices = @transform_3, window_bounds = array<i64: 1, 10, 64>}, {transform_indices = @transform_4, window_bounds = array<i64: 1, 1, 64>}, {transform_indices = @transform_5, window_bounds = array<i64: 1, 1, 64>}]} {
    %c0 = arith.constant 0 : index
    %c0_0 = arith.constant 0 : index
    %c0_1 = arith.constant 0 : index
    %0 = vector.load %arg1[%c0, %c0_0, %c0_1] : memref<1x10x64xf32, #tpu.memory_space<vmem>>, vector<1x10x64xf32>
    %1 = vector.shape_cast %0 : vector<1x10x64xf32> to vector<10x64xf32>
    %cst = arith.constant 0.000000e+00 : f32
    %2 = vector.broadcast %cst : f32 to vector<3x64xf32>
    %cst_2 = arith.constant 0.000000e+00 : f32
    %3 = vector.broadcast %cst_2 : f32 to vector<3x64xf32>
    %4 = tpu.concatenate %2, %1, %3 in 0 : vector<3x64xf32>, vector<10x64xf32>, vector<3x64xf32> -> vector<16x64xf32>
    %c0_3 = arith.constant 0 : index
    %c0_4 = arith.constant 0 : index
    %5 = vector.load %arg2[%c0_3, %c0_4] : memref<7x64xf32, #tpu.memory_space<vmem>>, vector<7x64xf32>
    %6 = vector.extract_strided_slice %4 {offsets = [0, 0], sizes = [10, 64], strides = [1, 1]} : vector<16x64xf32> to vector<10x64xf32>
    %7 = vector.extract_strided_slice %5 {offsets = [0, 0], sizes = [1, 64], strides = [1, 1]} : vector<7x64xf32> to vector<1x64xf32>
    %8 = vector.broadcast %7 : vector<1x64xf32> to vector<10x64xf32>
    %9 = arith.mulf %6, %8 : vector<10x64xf32>
    %10 = vector.extract_strided_slice %4 {offsets = [1, 0], sizes = [10, 64], strides = [1, 1]} : vector<16x64xf32> to vector<10x64xf32>
    %11 = vector.extract_strided_slice %5 {offsets = [1, 0], sizes = [1, 64], strides = [1, 1]} : vector<7x64xf32> to vector<1x64xf32>
    %12 = vector.broadcast %11 : vector<1x64xf32> to vector<10x64xf32>
    %13 = arith.mulf %10, %12 : vector<10x64xf32>
    %14 = arith.addf %9, %13 : vector<10x64xf32>
    %15 = vector.extract_strided_slice %4 {offsets = [2, 0], sizes = [10, 64], strides = [1, 1]} : vector<16x64xf32> to vector<10x64xf32>
    %16 = vector.extract_strided_slice %5 {offsets = [2, 0], sizes = [1, 64], strides = [1, 1]} : vector<7x64xf32> to vector<1x64xf32>
    %17 = vector.broadcast %16 : vector<1x64xf32> to vector<10x64xf32>
    %18 = arith.mulf %15, %17 : vector<10x64xf32>
    %19 = arith.addf %14, %18 : vector<10x64xf32>
    %20 = vector.extract_strided_slice %4 {offsets = [3, 0], sizes = [10, 64], strides = [1, 1]} : vector<16x64xf32> to vector<10x64xf32>
    %21 = vector.extract_strided_slice %5 {offsets = [3, 0], sizes = [1, 64], strides = [1, 1]} : vector<7x64xf32> to vector<1x64xf32>
    %22 = vector.broadcast %21 : vector<1x64xf32> to vector<10x64xf32>
    %23 = arith.mulf %20, %22 : vector<10x64xf32>
    %24 = arith.addf %19, %23 : vector<10x64xf32>
    %25 = vector.extract_strided_slice %4 {offsets = [4, 0], sizes = [10, 64], strides = [1, 1]} : vector<16x64xf32> to vector<10x64xf32>
    %26 = vector.extract_strided_slice %5 {offsets = [4, 0], sizes = [1, 64], strides = [1, 1]} : vector<7x64xf32> to vector<1x64xf32>
    %27 = vector.broadcast %26 : vector<1x64xf32> to vector<10x64xf32>
    %28 = arith.mulf %25, %27 : vector<10x64xf32>
    %29 = arith.addf %24, %28 : vector<10x64xf32>
    %30 = vector.extract_strided_slice %4 {offsets = [5, 0], sizes = [10, 64], strides = [1, 1]} : vector<16x64xf32> to vector<10x64xf32>
    %31 = vector.extract_strided_slice %5 {offsets = [5, 0], sizes = [1, 64], strides = [1, 1]} : vector<7x64xf32> to vector<1x64xf32>
    %32 = vector.broadcast %31 : vector<1x64xf32> to vector<10x64xf32>
    %33 = arith.mulf %30, %32 : vector<10x64xf32>
    %34 = arith.addf %29, %33 : vector<10x64xf32>
    %35 = vector.extract_strided_slice %4 {offsets = [6, 0], sizes = [10, 64], strides = [1, 1]} : vector<16x64xf32> to vector<10x64xf32>
    %36 = vector.extract_strided_slice %5 {offsets = [6, 0], sizes = [1, 64], strides = [1, 1]} : vector<7x64xf32> to vector<1x64xf32>
    %37 = vector.broadcast %36 : vector<1x64xf32> to vector<10x64xf32>
    %38 = arith.mulf %35, %37 : vector<10x64xf32>
    %39 = arith.addf %34, %38 : vector<10x64xf32>
    %c0_5 = arith.constant 0 : index
    %c0_6 = arith.constant 0 : index
    %40 = vector.load %arg3[%c0_5, %c0_6] : memref<1x64xf32, #tpu.memory_space<vmem>>, vector<1x64xf32>
    %41 = vector.broadcast %40 : vector<1x64xf32> to vector<10x64xf32>
    %42 = arith.addf %39, %41 : vector<10x64xf32>
    %c0_7 = arith.constant 0 : index
    %c0_8 = arith.constant 0 : index
    %c0_9 = arith.constant 0 : index
    %43 = vector.load %arg4[%c0_7, %c0_8, %c0_9] : memref<1x10x64xf32, #tpu.memory_space<vmem>>, vector<1x10x64xf32>
    %44 = vector.shape_cast %43 : vector<1x10x64xf32> to vector<10x64xf32>
    %45 = vector.shape_cast %42 : vector<10x64xf32> to vector<1x10x64xf32>
    tpu.vector_store %arg4[%c0_7, %c0_8, %c0_9], %45 {strides = array<i32>} : memref<1x10x64xf32, #tpu.memory_space<vmem>>, vector<1x10x64xf32>,
    %cst_10 = arith.constant dense<0.000000e+00> : vector<64xf32>
    %46 = vector.multi_reduction <add>, %42, %cst_10 [0] : vector<10x64xf32> to vector<64xf32>
    %47 = vector.shape_cast %46 : vector<64xf32> to vector<1x64xf32>
    %c0_11 = arith.constant 0 : index
    %c0_12 = arith.constant 0 : index
    %c0_13 = arith.constant 0 : index
    %48 = vector.load %arg5[%c0_11, %c0_12, %c0_13] : memref<1x1x64xf32, #tpu.memory_space<vmem>>, vector<1x1x64xf32>
    %49 = vector.shape_cast %48 : vector<1x1x64xf32> to vector<1x64xf32>
    %50 = vector.shape_cast %47 : vector<1x64xf32> to vector<1x1x64xf32>
    tpu.vector_store %arg5[%c0_11, %c0_12, %c0_13], %50 {strides = array<i32>} : memref<1x1x64xf32, #tpu.memory_space<vmem>>, vector<1x1x64xf32>,
    %51 = arith.mulf %42, %42 : vector<10x64xf32>
    %cst_14 = arith.constant dense<0.000000e+00> : vector<64xf32>
    %52 = vector.multi_reduction <add>, %51, %cst_14 [0] : vector<10x64xf32> to vector<64xf32>
    %53 = vector.shape_cast %52 : vector<64xf32> to vector<1x64xf32>
    %c0_15 = arith.constant 0 : index
    %c0_16 = arith.constant 0 : index
    %c0_17 = arith.constant 0 : index
    %54 = vector.load %arg6[%c0_15, %c0_16, %c0_17] : memref<1x1x64xf32, #tpu.memory_space<vmem>>, vector<1x1x64xf32>
    %55 = vector.shape_cast %54 : vector<1x1x64xf32> to vector<1x64xf32>
    %56 = vector.shape_cast %53 : vector<1x64xf32> to vector<1x1x64xf32>
    tpu.vector_store %arg6[%c0_15, %c0_16, %c0_17], %56 {strides = array<i32>} : memref<1x1x64xf32, #tpu.memory_space<vmem>>, vector<1x1x64xf32>,
    return
  }
  func.func @transform_0(%arg0: i32) -> (i32, i32, i32) {
    %c0_i32 = arith.constant 0 : i32
    %c0_i32_0 = arith.constant 0 : i32
    %c0_i32_1 = arith.constant 0 : i32
    return %arg0, %c0_i32, %c0_i32_0 : i32, i32, i32
  }
  func.func @transform_1(%arg0: i32) -> (i32, i32) {
    %c0_i32 = arith.constant 0 : i32
    %c0_i32_0 = arith.constant 0 : i32
    %c0_i32_1 = arith.constant 0 : i32
    return %c0_i32, %c0_i32_0 : i32, i32
  }
  func.func @transform_2(%arg0: i32) -> (i32, i32) {
    %c0_i32 = arith.constant 0 : i32
    %c0_i32_0 = arith.constant 0 : i32
    %c0_i32_1 = arith.constant 0 : i32
    return %c0_i32, %c0_i32_0 : i32, i32
  }
  func.func @transform_3(%arg0: i32) -> (i32, i32, i32) {
    %c0_i32 = arith.constant 0 : i32
    %c0_i32_0 = arith.constant 0 : i32
    %c0_i32_1 = arith.constant 0 : i32
    return %arg0, %c0_i32, %c0_i32_0 : i32, i32, i32
  }
  func.func @transform_4(%arg0: i32) -> (i32, i32, i32) {
    %c0_i32 = arith.constant 0 : i32
    %c0_i32_0 = arith.constant 0 : i32
    %c0_i32_1 = arith.constant 0 : i32
    return %arg0, %c0_i32, %c0_i32_0 : i32, i32, i32
  }
  func.func @transform_5(%arg0: i32) -> (i32, i32, i32) {
    %c0_i32 = arith.constant 0 : i32
    %c0_i32_0 = arith.constant 0 : i32
    %c0_i32_1 = arith.constant 0 : i32
    return %arg0, %c0_i32, %c0_i32_0 : i32, i32, i32
  }
}

module attributes {stable_mosaic.version = 11 : i64} {
  func.func @_bn_pw2_kernel(%arg0: i32, %arg1: memref<20x64xf32, #tpu.memory_space<vmem>>, %arg2: memref<1x64xf32, #tpu.memory_space<vmem>>, %arg3: memref<1x64xf32, #tpu.memory_space<vmem>>, %arg4: memref<1x64xf32, #tpu.memory_space<vmem>>, %arg5: memref<1x64xf32, #tpu.memory_space<vmem>>, %arg6: memref<64x32xbf16, #tpu.memory_space<vmem>>, %arg7: memref<1x32xf32, #tpu.memory_space<vmem>>, %arg8: memref<20x32xf32, #tpu.memory_space<vmem>>, %arg9: memref<20x32xf32, #tpu.memory_space<vmem>>) attributes {dimension_semantics = [#tpu.dimension_semantics<parallel>], iteration_bounds = array<i64: 1>, scalar_prefetch = 0 : i64, scratch_operands = 0 : i64, tpu.core_type = #tpu.core_type<tc>, window_params = [{transform_indices = @transform_0, window_bounds = array<i64: 20, 64>}, {pipeline_mode = #tpu.pipeline_mode<synchronous>, transform_indices = @transform_1, window_bounds = array<i64: 1, 64>}, {pipeline_mode = #tpu.pipeline_mode<synchronous>, transform_indices = @transform_2, window_bounds = array<i64: 1, 64>}, {pipeline_mode = #tpu.pipeline_mode<synchronous>, transform_indices = @transform_3, window_bounds = array<i64: 1, 64>}, {pipeline_mode = #tpu.pipeline_mode<synchronous>, transform_indices = @transform_4, window_bounds = array<i64: 1, 64>}, {pipeline_mode = #tpu.pipeline_mode<synchronous>, transform_indices = @transform_5, window_bounds = array<i64: 64, 32>}, {pipeline_mode = #tpu.pipeline_mode<synchronous>, transform_indices = @transform_6, window_bounds = array<i64: 1, 32>}, {transform_indices = @transform_7, window_bounds = array<i64: 20, 32>}, {transform_indices = @transform_8, window_bounds = array<i64: 20, 32>}]} {
    %c0 = arith.constant 0 : index
    %c0_0 = arith.constant 0 : index
    %0 = vector.load %arg1[%c0, %c0_0] : memref<20x64xf32, #tpu.memory_space<vmem>>, vector<20x64xf32>
    %c0_1 = arith.constant 0 : index
    %c0_2 = arith.constant 0 : index
    %1 = vector.load %arg2[%c0_1, %c0_2] : memref<1x64xf32, #tpu.memory_space<vmem>>, vector<1x64xf32>
    %2 = vector.broadcast %1 : vector<1x64xf32> to vector<20x64xf32>
    %3 = arith.subf %0, %2 : vector<20x64xf32>
    %c0_3 = arith.constant 0 : index
    %c0_4 = arith.constant 0 : index
    %4 = vector.load %arg3[%c0_3, %c0_4] : memref<1x64xf32, #tpu.memory_space<vmem>>, vector<1x64xf32>
    %cst = arith.constant 9.99999974E-6 : f32
    %5 = vector.broadcast %cst : f32 to vector<1x64xf32>
    %6 = arith.addf %4, %5 : vector<1x64xf32>
    %7 = math.rsqrt %6 : vector<1x64xf32>
    %8 = vector.broadcast %7 : vector<1x64xf32> to vector<20x64xf32>
    %9 = arith.mulf %3, %8 : vector<20x64xf32>
    %c0_5 = arith.constant 0 : index
    %c0_6 = arith.constant 0 : index
    %10 = vector.load %arg4[%c0_5, %c0_6] : memref<1x64xf32, #tpu.memory_space<vmem>>, vector<1x64xf32>
    %11 = vector.broadcast %10 : vector<1x64xf32> to vector<20x64xf32>
    %12 = arith.mulf %9, %11 : vector<20x64xf32>
    %c0_7 = arith.constant 0 : index
    %c0_8 = arith.constant 0 : index
    %13 = vector.load %arg5[%c0_7, %c0_8] : memref<1x64xf32, #tpu.memory_space<vmem>>, vector<1x64xf32>
    %14 = vector.broadcast %13 : vector<1x64xf32> to vector<20x64xf32>
    %15 = arith.addf %12, %14 : vector<20x64xf32>
    %16 = arith.negf %15 : vector<20x64xf32>
    %17 = math.exp %16 : vector<20x64xf32>
    %cst_9 = arith.constant 1.000000e+00 : f32
    %18 = vector.broadcast %cst_9 : f32 to vector<20x64xf32>
    %19 = arith.addf %18, %17 : vector<20x64xf32>
    %20 = arith.divf %18, %19 : vector<20x64xf32>
    %21 = arith.mulf %15, %20 : vector<20x64xf32>
    %22 = arith.truncf %21 : vector<20x64xf32> to vector<20x64xbf16>
    %c0_10 = arith.constant 0 : index
    %c0_11 = arith.constant 0 : index
    %23 = vector.load %arg6[%c0_10, %c0_11] : memref<64x32xbf16, #tpu.memory_space<vmem>>, vector<64x32xbf16>
    %cst_12 = arith.constant dense<0.000000e+00> : vector<20x32xf32>
    %24 = tpu.matmul %22, %23, %cst_12 {dimension_numbers = #tpu.dot_dimension_numbers<[1], [0], [0], [1], [0, 0, 1, 1], [], []>} : vector<20x64xbf16>, vector<64x32xbf16>, vector<20x32xf32> -> vector<20x32xf32>
    %c0_13 = arith.constant 0 : index
    %c0_14 = arith.constant 0 : index
    %25 = vector.load %arg7[%c0_13, %c0_14] : memref<1x32xf32, #tpu.memory_space<vmem>>, vector<1x32xf32>
    %26 = vector.broadcast %25 : vector<1x32xf32> to vector<20x32xf32>
    %27 = arith.addf %24, %26 : vector<20x32xf32>
    %c0_15 = arith.constant 0 : index
    %c0_16 = arith.constant 0 : index
    %28 = vector.load %arg8[%c0_15, %c0_16] : memref<20x32xf32, #tpu.memory_space<vmem>>, vector<20x32xf32>
    %29 = arith.addf %27, %28 : vector<20x32xf32>
    %c0_17 = arith.constant 0 : index
    %c0_18 = arith.constant 0 : index
    %30 = vector.load %arg9[%c0_17, %c0_18] : memref<20x32xf32, #tpu.memory_space<vmem>>, vector<20x32xf32>
    tpu.vector_store %arg9[%c0_17, %c0_18], %29 {strides = array<i32>} : memref<20x32xf32, #tpu.memory_space<vmem>>, vector<20x32xf32>,
    return
  }
  func.func @transform_0(%arg0: i32) -> (i32, i32) {
    %c0_i32 = arith.constant 0 : i32
    %c0_i32_0 = arith.constant 0 : i32
    return %arg0, %c0_i32 : i32, i32
  }
  func.func @transform_1(%arg0: i32) -> (i32, i32) {
    %c0_i32 = arith.constant 0 : i32
    %c0_i32_0 = arith.constant 0 : i32
    %c0_i32_1 = arith.constant 0 : i32
    return %c0_i32, %c0_i32_0 : i32, i32
  }
  func.func @transform_2(%arg0: i32) -> (i32, i32) {
    %c0_i32 = arith.constant 0 : i32
    %c0_i32_0 = arith.constant 0 : i32
    %c0_i32_1 = arith.constant 0 : i32
    return %c0_i32, %c0_i32_0 : i32, i32
  }
  func.func @transform_3(%arg0: i32) -> (i32, i32) {
    %c0_i32 = arith.constant 0 : i32
    %c0_i32_0 = arith.constant 0 : i32
    %c0_i32_1 = arith.constant 0 : i32
    return %c0_i32, %c0_i32_0 : i32, i32
  }
  func.func @transform_4(%arg0: i32) -> (i32, i32) {
    %c0_i32 = arith.constant 0 : i32
    %c0_i32_0 = arith.constant 0 : i32
    %c0_i32_1 = arith.constant 0 : i32
    return %c0_i32, %c0_i32_0 : i32, i32
  }
  func.func @transform_5(%arg0: i32) -> (i32, i32) {
    %c0_i32 = arith.constant 0 : i32
    %c0_i32_0 = arith.constant 0 : i32
    %c0_i32_1 = arith.constant 0 : i32
    return %c0_i32, %c0_i32_0 : i32, i32
  }
  func.func @transform_6(%arg0: i32) -> (i32, i32) {
    %c0_i32 = arith.constant 0 : i32
    %c0_i32_0 = arith.constant 0 : i32
    %c0_i32_1 = arith.constant 0 : i32
    return %c0_i32, %c0_i32_0 : i32, i32
  }
  func.func @transform_7(%arg0: i32) -> (i32, i32) {
    %c0_i32 = arith.constant 0 : i32
    %c0_i32_0 = arith.constant 0 : i32
    return %arg0, %c0_i32 : i32, i32
  }
  func.func @transform_8(%arg0: i32) -> (i32, i32) {
    %c0_i32 = arith.constant 0 : i32
    %c0_i32_0 = arith.constant 0 : i32
    return %arg0, %c0_i32 : i32, i32
  }
}

</mosaic_0001>

<llo_original>
// kernel: conformer_forward.11
$region0: #{conformer_forward.11}
  #allocation0 [shape = 'u32[]', space=smem, size = 0x4, offset = 0x4, fixed_abs, tag = 'smem constant byte address 0x4 - core index']
  #allocation1 [shape = 'u32[72,128]{1,0:T(1,128)}', space=vmem, size = 0x9000, scoped, tag = 'internal scratch']
  %s0 = inlined_call_operand.vmem [shape: f32[20,32], index: 0, kind: input, shape index: {}]
  %s1 = inlined_call_operand.vmem [shape: f32[1,32], index: 1, kind: input, shape index: {}]
  %s2 = inlined_call_operand.vmem [shape: f32[1,32], index: 2, kind: input, shape index: {}]
  %s3 = inlined_call_operand.vmem [shape: f32[20,32], index: 3, kind: output, shape index: {}]
  %s4 = sld [smem:[#allocation0]]
  $region22: #{conformer_forward.11} parent=0
    _
  %s6 = ssub.s32 1, %s4
  %s7 = scalar_select 0, %s6, %s4
  // Predicated region
  $region2: #{conformer_forward.11} parent=0 // pred_check
    _
  $region3: #{conformer_forward.11} parent=0 // pred_check_branch
    %9 = sbr.rel (0) target = $region5
  $region4: #{conformer_forward.11} parent=0 // pred_region
    _
  $region5: #{conformer_forward.11} parent=0 // pred_fallthru
    _
  // Predicated region
  $region6: #{conformer_forward.11} parent=0 // pred_check
    _
  $region7: #{conformer_forward.11} parent=0 // pred_check_branch
    %11 = sbr.rel (0) target = $region9
  $region8: #{conformer_forward.11} parent=0 // pred_region
    _
  $region9: #{conformer_forward.11} parent=0 // pred_fallthru
    _
  // Predicated region
  $region10: #{conformer_forward.11} parent=0 // pred_check
    _
  $region11: #{conformer_forward.11} parent=0 // pred_check_branch
    %13 = sbr.rel (0) target = $region13
  $region12: #{conformer_forward.11} parent=0 // pred_region
    _
  $region13: #{conformer_forward.11} parent=0 // pred_fallthru
    _
  %v14 = vld [vmem:[%s0] sm:$0xff]
  %v15 = vld [vmem:[%s0 + $0x8] sm:$0xff]
  %v16 = vld [vmem:[%s0 + $0x10] sm:$0xf]
  %vm17 = vcmask 261120
  %v18 = vsel %vm17, %v14, 0.0
  %19 = vadd.xlane.f32.xlu0 %v18
  %v20 = vpop.xlane.xlu0 %19
  %v21 = vsel %vm17, %v15, 0.0
  %22 = vadd.xlane.f32.xlu0 %v21
  %v23 = vpop.xlane.xlu0 %22
  %vm24 = vcmask 257024
  %v25 = vsel %vm24, %v16, 0.0
  %26 = vadd.xlane.f32.xlu0 %v25
  %v27 = vpop.xlane.xlu0 %26
  %v28 = vrcp.pop 32.0
  %v29 = vmul.f32 32.0, %v28
  %v30 = vsub.f32 1.0, %v29
  %v31 = vmul.f32 %v28, %v30
  %v32 = vadd.f32 %v28, %v31
  %vm33 = vweird.f32 %v28
  %v34 = vsel %vm33, %v28, %v32
  %v35 = vmul.f32 %v20, %v34
  %v36 = vmul.f32 %v23, %v34
  %v37 = vmul.f32 %v27, %v34
  %v38 = vsub.f32 %v14, %v35
  %v39 = vsub.f32 %v15, %v36
  %v40 = vsub.f32 %v16, %v37
  %v41 = vmul.f32 %v38, %v38
  %v42 = vmul.f32 %v39, %v39
  %v43 = vmul.f32 %v40, %v40
  %v44 = vsel %vm17, %v41, 0.0
  %45 = vadd.xlane.f32.xlu0 %v44
  %v46 = vpop.xlane.xlu0 %45
  %v47 = vsel %vm17, %v42, 0.0
  %48 = vadd.xlane.f32.xlu0 %v47
  %v49 = vpop.xlane.xlu0 %48
  %v50 = vsel %vm24, %v43, 0.0
  %51 = vadd.xlane.f32.xlu0 %v50
  %v52 = vpop.xlane.xlu0 %51
  %v53 = vmul.f32 %v46, %v34
  %v54 = vmul.f32 %v49, %v34
  %v55 = vmul.f32 %v52, %v34
  %v56 = vadd.f32 %v53, 1e-05
  %v57 = vadd.f32 %v54, 1e-05
  %v58 = vadd.f32 %v55, 1e-05
  %v59 = vrsqrt.pop %v56
  %v60 = vmul.f32 %v59, %v56
  %v61 = vmul.f32 %v60, %v59
  %v62 = vmul.f32 0.5, %v61
  %v63 = vsub.f32 1.5, %v62
  %v64 = vmul.f32 %v59, %v63
  %vm65 = vweird.f32 %v56
  %vm66 = vweird.f32 %v59
  %vm67 = vmor %vm65, %vm66
  %v68 = vsel %vm67, %v59, %v64
  %v69 = vrsqrt.pop %v57
  %v70 = vmul.f32 %v69, %v57
  %v71 = vmul.f32 %v70, %v69
  %v72 = vmul.f32 0.5, %v71
  %v73 = vsub.f32 1.5, %v72
  %v74 = vmul.f32 %v69, %v73
  %vm75 = vweird.f32 %v57
  %vm76 = vweird.f32 %v69
  %vm77 = vmor %vm75, %vm76
  %v78 = vsel %vm77, %v69, %v74
  %v79 = vrsqrt.pop %v58
  %v80 = vmul.f32 %v79, %v58
  %v81 = vmul.f32 %v80, %v79
  %v82 = vmul.f32 0.5, %v81
  %v83 = vsub.f32 1.5, %v82
  %v84 = vmul.f32 %v79, %v83
  %vm85 = vweird.f32 %v58
  %vm86 = vweird.f32 %v79
  %vm87 = vmor %vm85, %vm86
  %v88 = vsel %vm87, %v79, %v84
  %v89 = vmul.f32 %v38, %v68
  %v90 = vmul.f32 %v39, %v78
  %v91 = vmul.f32 %v40, %v88
  %v92 = vld [vmem:[%s1] sm:$0x1]
  %v94 = vperm.slane %v92, 0
  %v96 = vmul.f32 %v89, %v94
  %v97 = vmul.f32 %v90, %v94
  %v98 = vmul.f32 %v91, %v94
  %v99 = vld [vmem:[%s2] sm:$0x1]
  %v101 = vperm.slane %v99, 0
  %v103 = vadd.f32 %v96, %v101
  %v104 = vadd.f32 %v97, %v101
  %v105 = vadd.f32 %v98, %v101
  %106 = vst.msk [vmem:[%s3] sm:$0xff] %vm17, %v103
  %107 = vst.msk [vmem:[%s3 + $0x8] sm:$0xff] %vm17, %v104
  %108 = vst.msk [vmem:[%s3 + $0x10] sm:$0xf] %vm24, %v105
  // Predicated region
  $region14: #{conformer_forward.11} parent=0 // pred_check
    _
  $region15: #{conformer_forward.11} parent=0 // pred_check_branch
    %110 = sbr.rel (0) target = $region17
  $region16: #{conformer_forward.11} parent=0 // pred_region
    _
  $region17: #{conformer_forward.11} parent=0 // pred_fallthru
    _
  // Predicated region
  $region18: #{conformer_forward.11} parent=0 // pred_check
    _
  $region19: #{conformer_forward.11} parent=0 // pred_check_branch
    %112 = sbr.rel (0) target = $region21
  $region20: #{conformer_forward.11} parent=0 // pred_region
    _
  $region21: #{conformer_forward.11} parent=0 // pred_fallthru
    _

// kernel: conformer_forward.10
$region0: #{conformer_forward.10}
  #allocation0 [shape = 'u32[]', space=smem, size = 0x4, offset = 0x4, fixed_abs, tag = 'smem constant byte address 0x4 - core index']
  #allocation1 [shape = 'u32[72,128]{1,0:T(1,128)}', space=vmem, size = 0x9000, scoped, tag = 'internal scratch']
  %s0 = inlined_call_operand.vmem [shape: f32[20,32], index: 0, kind: input, shape index: {}]
  %s1 = inlined_call_operand.vmem [shape: f32[1,32], index: 1, kind: input, shape index: {}]
  %s2 = inlined_call_operand.vmem [shape: f32[1,32], index: 2, kind: input, shape index: {}]
  %s3 = inlined_call_operand.vmem [shape: bf16[32,128], index: 3, kind: input, shape index: {}]
  %s4 = inlined_call_operand.vmem [shape: f32[1,128], index: 4, kind: input, shape index: {}]
  %s5 = inlined_call_operand.vmem [shape: bf16[128,32], index: 5, kind: input, shape index: {}]
  %s6 = inlined_call_operand.vmem [shape: f32[1,32], index: 6, kind: input, shape index: {}]
  %s7 = inlined_call_operand.vmem [shape: f32[20,32], index: 7, kind: output, shape index: {}]
  %s8 = sld [smem:[#allocation0]]
  $region38: #{conformer_forward.10} parent=0
    _
  %s10 = ssub.s32 1, %s8
  %s11 = scalar_select 0, %s10, %s8
  // Predicated region
  $region2: #{conformer_forward.10} parent=0 // pred_check
    _
  $region3: #{conformer_forward.10} parent=0 // pred_check_branch
    %13 = sbr.rel (0) target = $region5
  $region4: #{conformer_forward.10} parent=0 // pred_region
    _
  $region5: #{conformer_forward.10} parent=0 // pred_fallthru
    _
  // Predicated region
  $region6: #{conformer_forward.10} parent=0 // pred_check
    _
  $region7: #{conformer_forward.10} parent=0 // pred_check_branch
    %15 = sbr.rel (0) target = $region9
  $region8: #{conformer_forward.10} parent=0 // pred_region
    _
  $region9: #{conformer_forward.10} parent=0 // pred_fallthru
    _
  // Predicated region
  $region10: #{conformer_forward.10} parent=0 // pred_check
    _
  $region11: #{conformer_forward.10} parent=0 // pred_check_branch
    %17 = sbr.rel (0) target = $region13
  $region12: #{conformer_forward.10} parent=0 // pred_region
    _
  $region13: #{conformer_forward.10} parent=0 // pred_fallthru
    _
  // Predicated region
  $region14: #{conformer_forward.10} parent=0 // pred_check
    _
  $region15: #{conformer_forward.10} parent=0 // pred_check_branch
    %19 = sbr.rel (0) target = $region17
  $region16: #{conformer_forward.10} parent=0 // pred_region
    _
  $region17: #{conformer_forward.10} parent=0 // pred_fallthru
    _
  // Predicated region
  $region18: #{conformer_forward.10} parent=0 // pred_check
    _
  $region19: #{conformer_forward.10} parent=0 // pred_check_branch
    %21 = sbr.rel (0) target = $region21
  $region20: #{conformer_forward.10} parent=0 // pred_region
    _
  $region21: #{conformer_forward.10} parent=0 // pred_fallthru
    _
  // Predicated region
  $region22: #{conformer_forward.10} parent=0 // pred_check
    _
  $region23: #{conformer_forward.10} parent=0 // pred_check_branch
    %23 = sbr.rel (0) target = $region25
  $region24: #{conformer_forward.10} parent=0 // pred_region
    _
  $region25: #{conformer_forward.10} parent=0 // pred_fallthru
    _
  // Predicated region
  $region26: #{conformer_forward.10} parent=0 // pred_check
    _
  $region27: #{conformer_forward.10} parent=0 // pred_check_branch
    %25 = sbr.rel (0) target = $region29
  $region28: #{conformer_forward.10} parent=0 // pred_region
    _
  $region29: #{conformer_forward.10} parent=0 // pred_fallthru
    _
  %v27 = vld [vmem:[%s0] sm:$0xff]
  %v28 = vld [vmem:[%s0 + $0x8] sm:$0xff]
  %v29 = vld [vmem:[%s0 + $0x10] sm:$0xf]
  %vm30 = vcmask 261120
  %v31 = vsel %vm30, %v27, 0.0
  %32 = vadd.xlane.f32.xlu0 %v31
  %v33 = vpop.xlane.xlu0 %32
  %v34 = vsel %vm30, %v28, 0.0
  %35 = vadd.xlane.f32.xlu0 %v34
  %v36 = vpop.xlane.xlu0 %35
  %vm37 = vcmask 257024
  %v38 = vsel %vm37, %v29, 0.0
  %39 = vadd.xlane.f32.xlu0 %v38
  %v40 = vpop.xlane.xlu0 %39
  %v41 = vrcp.pop 32.0
  %v42 = vmul.f32 32.0, %v41
  %v43 = vsub.f32 1.0, %v42
  %v44 = vmul.f32 %v41, %v43
  %v45 = vadd.f32 %v41, %v44
  %vm46 = vweird.f32 %v41
  %v47 = vsel %vm46, %v41, %v45
  %v48 = vmul.f32 %v33, %v47
  %v49 = vmul.f32 %v36, %v47
  %v50 = vmul.f32 %v40, %v47
  %v51 = vsub.f32 %v27, %v48
  %v52 = vsub.f32 %v28, %v49
  %v53 = vsub.f32 %v29, %v50
  %v54 = vmul.f32 %v51, %v51
  %v55 = vmul.f32 %v52, %v52
  %v56 = vmul.f32 %v53, %v53
  %v57 = vsel %vm30, %v54, 0.0
  %58 = vadd.xlane.f32.xlu0 %v57
  %v59 = vpop.xlane.xlu0 %58
  %v60 = vsel %vm30, %v55, 0.0
  %61 = vadd.xlane.f32.xlu0 %v60
  %v62 = vpop.xlane.xlu0 %61
  %v63 = vsel %vm37, %v56, 0.0
  %64 = vadd.xlane.f32.xlu0 %v63
  %v65 = vpop.xlane.xlu0 %64
  %v66 = vmul.f32 %v59, %v47
  %v67 = vmul.f32 %v62, %v47
  %v68 = vmul.f32 %v65, %v47
  %v69 = vadd.f32 %v66, 1e-05
  %v70 = vadd.f32 %v67, 1e-05
  %v71 = vadd.f32 %v68, 1e-05
  %v72 = vrsqrt.pop %v69
  %v73 = vmul.f32 %v72, %v69
  %v74 = vmul.f32 %v73, %v72
  %v75 = vmul.f32 0.5, %v74
  %v76 = vsub.f32 1.5, %v75
  %v77 = vmul.f32 %v72, %v76
  %vm78 = vweird.f32 %v69
  %vm79 = vweird.f32 %v72
  %vm80 = vmor %vm78, %vm79
  %v81 = vsel %vm80, %v72, %v77
  %v82 = vrsqrt.pop %v70
  %v83 = vmul.f32 %v82, %v70
  %v84 = vmul.f32 %v83, %v82
  %v85 = vmul.f32 0.5, %v84
  %v86 = vsub.f32 1.5, %v85
  %v87 = vmul.f32 %v82, %v86
  %vm88 = vweird.f32 %v70
  %vm89 = vweird.f32 %v82
  %vm90 = vmor %vm88, %vm89
  %v91 = vsel %vm90, %v82, %v87
  %v92 = vrsqrt.pop %v71
  %v93 = vmul.f32 %v92, %v71
  %v94 = vmul.f32 %v93, %v92
  %v95 = vmul.f32 0.5, %v94
  %v96 = vsub.f32 1.5, %v95
  %v97 = vmul.f32 %v92, %v96
  %vm98 = vweird.f32 %v71
  %vm99 = vweird.f32 %v92
  %vm100 = vmor %vm98, %vm99
  %v101 = vsel %vm100, %v92, %v97
  %v102 = vmul.f32 %v51, %v81
  %v103 = vmul.f32 %v52, %v91
  %v104 = vmul.f32 %v53, %v101
  %v105 = vld [vmem:[%s1] sm:$0x1]
  %v107 = vperm.slane %v105, 0
  %v109 = vmul.f32 %v102, %v107
  %v110 = vmul.f32 %v103, %v107
  %v111 = vmul.f32 %v104, %v107
  %v112 = vld [vmem:[%s2] sm:$0x1]
  %v114 = vperm.slane %v112, 0
  %v116 = vadd.f32 %v109, %v114
  %v117 = vadd.f32 %v110, %v114
  %v118 = vadd.f32 %v111, %v114
  %v119 = vpack.c.bf16 %v117, %v116
  %v120 = vpack.c.bf16 %v118, %v118
  %v121 = vld [vmem:[%s3] sm:$0xf]
  %v122 = vld [vmem:[%s3 + $0x4] sm:$0xf]
  %v123 = vld [vmem:[%s3 + $0x8] sm:$0xf]
  %v124 = vld [vmem:[%s3 + $0xc] sm:$0xf]
  %v125 = vld [vmem:[%s4] sm:$0x1]
  %v127 = vperm.slane %v125, 0
  %v133 = vunpack.c.l.b16 %v121
  %v134 = vunpack.c.l.b16 %v122
  %v135 = vunpack.c.l.b16 %v123
  %v136 = vunpack.c.l.b16 %v124
  %v137 = vpack.c.b16 %v134, %v133
  %v138 = vpack.c.b16 %v136, %v135
  %v142 = vsel %vm30, %v119, 0
  %v145 = vsel %vm30, %v120, 0
  %147 = vmatpush.bf16.msra.mxu0 0
  %148 = vmatpush.bf16.msra.mxu0 0
  %149 = vmatpush.bf16.msra.mxu0 0
  %150 = vmatpush.bf16.msra.mxu0 0
  %151 = vmatpush.bf16.msra.mxu0 0
  %152 = vmatpush.bf16.msra.mxu0 0
  %153 = vmatpush.bf16.msra.mxu0 %v138
  %154 = vmatpush.bf16.msra.mxu0 %v137
  %155 = vmatmul.bf16.gmra.mxu0 %v142
  %v156 = vpop.f32.mrf.mxu0
  %v157 = vadd.f32 %v127, %v156
  %v158 = vpop.f32.mrf.mxu0
  %v159 = vadd.f32 %v127, %v158
  %160 = vmatmul.bf16.gmra.mxu0 %v145
  %v161 = vpop.f32.mrf.mxu0
  %v162 = vadd.f32 %v127, %v161
  %v163 = vpop.f32.mrf.mxu0
  %164 = vdwg.mxu0
  %v165 = vxor.u32 %v157, 2147483648
  %v166 = vxor.u32 %v159, 2147483648
  %v167 = vxor.u32 %v162, 2147483648
  %v168 = vmul.f32 %v165, 1.442695
  %v169 = vpow.pop %v168
  %v170 = vmul.f32 %v166, 1.442695
  %v171 = vpow.pop %v170
  %v172 = vmul.f32 %v167, 1.442695
  %v173 = vpow.pop %v172
  %v174 = vadd.f32 %v169, 1.0
  %v175 = vadd.f32 %v171, 1.0
  %v176 = vadd.f32 %v173, 1.0
  %v177 = vrcp.pop %v174
  %v178 = vmul.f32 %v174, %v177
  %v179 = vsub.f32 1.0, %v178
  %v180 = vmul.f32 %v177, %v179
  %v181 = vadd.f32 %v177, %v180
  %vm182 = vweird.f32 %v174
  %vm183 = vweird.f32 %v177
  %vm184 = vmor %vm182, %vm183
  %v185 = vsel %vm184, %v177, %v181
  %v186 = vand.u32 2147483647, %v174
  %vm187 = vcmp.eq.f32.partialorder %v186, 8.507059e+37
  %v188 = vand.u32 %v174, 2147483648
  %v189 = vor.u32 1.1754944e-38, %v188
  %v190 = vsel %vm187, %v189, %v185
  %v191 = vmul.f32 1.0, %v190
  %v192 = vrcp.pop %v175
  %v193 = vmul.f32 %v175, %v192
  %v194 = vsub.f32 1.0, %v193
  %v195 = vmul.f32 %v192, %v194
  %v196 = vadd.f32 %v192, %v195
  %vm197 = vweird.f32 %v175
  %vm198 = vweird.f32 %v192
  %vm199 = vmor %vm197, %vm198
  %v200 = vsel %vm199, %v192, %v196
  %v201 = vand.u32 2147483647, %v175
  %vm202 = vcmp.eq.f32.partialorder %v201, 8.507059e+37
  %v203 = vand.u32 %v175, 2147483648
  %v204 = vor.u32 1.1754944e-38, %v203
  %v205 = vsel %vm202, %v204, %v200
  %v206 = vmul.f32 1.0, %v205
  %v207 = vrcp.pop %v176
  %v208 = vmul.f32 %v176, %v207
  %v209 = vsub.f32 1.0, %v208
  %v210 = vmul.f32 %v207, %v209
  %v211 = vadd.f32 %v207, %v210
  %vm212 = vweird.f32 %v176
  %vm213 = vweird.f32 %v207
  %vm214 = vmor %vm212, %vm213
  %v215 = vsel %vm214, %v207, %v211
  %v216 = vand.u32 2147483647, %v176
  %vm217 = vcmp.eq.f32.partialorder %v216, 8.507059e+37
  %v218 = vand.u32 %v176, 2147483648
  %v219 = vor.u32 1.1754944e-38, %v218
  %v220 = vsel %vm217, %v219, %v215
  %v221 = vmul.f32 1.0, %v220
  %v222 = vmul.f32 %v157, %v191
  %v223 = vmul.f32 %v159, %v206
  %v224 = vmul.f32 %v162, %v221
  %v225 = vpack.c.bf16 %v223, %v222
  %v226 = vpack.c.bf16 %v224, %v224
  %v227 = vld [vmem:[%s5] sm:$0xf]
  %v228 = vld [vmem:[%s5 + $0x4] sm:$0xf]
  %v229 = vld [vmem:[%s5 + $0x8] sm:$0xf]
  %v230 = vld [vmem:[%s5 + $0xc] sm:$0xf]
  %v231 = vld [vmem:[%s5 + $0x10] sm:$0xf]
  %v232 = vld [vmem:[%s5 + $0x14] sm:$0xf]
  %v233 = vld [vmem:[%s5 + $0x18] sm:$0xf]
  %v234 = vld [vmem:[%s5 + $0x1c] sm:$0xf]
  %v235 = vld [vmem:[%s5 + $0x20] sm:$0xf]
  %v236 = vld [vmem:[%s5 + $0x24] sm:$0xf]
  %v237 = vld [vmem:[%s5 + $0x28] sm:$0xf]
  %v238 = vld [vmem:[%s5 + $0x2c] sm:$0xf]
  %v239 = vld [vmem:[%s5 + $0x30] sm:$0xf]
  %v240 = vld [vmem:[%s5 + $0x34] sm:$0xf]
  %v241 = vld [vmem:[%s5 + $0x38] sm:$0xf]
  %v242 = vld [vmem:[%s5 + $0x3c] sm:$0xf]
  %v243 = vld [vmem:[%s6] sm:$0x1]
  %v245 = vperm.slane %v243, 0
  %v263 = vunpack.c.l.b16 %v227
  %v264 = vunpack.c.l.b16 %v228
  %v265 = vunpack.c.l.b16 %v229
  %v266 = vunpack.c.l.b16 %v230
  %v267 = vunpack.c.l.b16 %v231
  %v268 = vunpack.c.l.b16 %v232
  %v269 = vunpack.c.l.b16 %v233
  %v270 = vunpack.c.l.b16 %v234
  %v271 = vunpack.c.l.b16 %v235
  %v272 = vunpack.c.l.b16 %v236
  %v273 = vunpack.c.l.b16 %v237
  %v274 = vunpack.c.l.b16 %v238
  %v275 = vunpack.c.l.b16 %v239
  %v276 = vunpack.c.l.b16 %v240
  %v277 = vunpack.c.l.b16 %v241
  %v278 = vunpack.c.l.b16 %v242
  %v279 = vpack.c.b16 %v264, %v263
  %v280 = vpack.c.b16 %v266, %v265
  %v281 = vpack.c.b16 %v268, %v267
  %v282 = vpack.c.b16 %v270, %v269
  %v283 = vpack.c.b16 %v272, %v271
  %v284 = vpack.c.b16 %v274, %v273
  %v285 = vpack.c.b16 %v276, %v275
  %v286 = vpack.c.b16 %v278, %v277
  %295 = vmatpush.bf16.msra.mxu0 %v286
  %296 = vmatpush.bf16.msra.mxu0 %v285
  %297 = vmatpush.bf16.msra.mxu0 %v284
  %298 = vmatpush.bf16.msra.mxu0 %v283
  %299 = vmatpush.bf16.msra.mxu0 %v282
  %300 = vmatpush.bf16.msra.mxu0 %v281
  %301 = vmatpush.bf16.msra.mxu0 %v280
  %302 = vmatpush.bf16.msra.mxu0 %v279
  %303 = vmatmul.bf16.gmra.mxu0 %v225
  %v304 = vpop.f32.mrf.mxu0
  %v305 = vadd.f32 %v245, %v304
  %v306 = vpop.f32.mrf.mxu0
  %v307 = vadd.f32 %v245, %v306
  %308 = vmatmul.bf16.gmra.mxu0 %v226
  %v309 = vpop.f32.mrf.mxu0
  %v310 = vadd.f32 %v245, %v309
  %v311 = vpop.f32.mrf.mxu0
  %312 = vdwg.mxu0
  %v313 = vmul.f32 %v305, 0.5
  %v314 = vmul.f32 %v307, 0.5
  %v315 = vmul.f32 %v310, 0.5
  %v316 = vadd.f32 %v27, %v313
  %v317 = vadd.f32 %v28, %v314
  %v318 = vadd.f32 %v29, %v315
  %319 = vst.msk [vmem:[%s7] sm:$0xff] %vm30, %v316
  %320 = vst.msk [vmem:[%s7 + $0x8] sm:$0xff] %vm30, %v317
  %321 = vst.msk [vmem:[%s7 + $0x10] sm:$0xf] %vm37, %v318
  // Predicated region
  $region30: #{conformer_forward.10} parent=0 // pred_check
    _
  $region31: #{conformer_forward.10} parent=0 // pred_check_branch
    %323 = sbr.rel (0) target = $region33
  $region32: #{conformer_forward.10} parent=0 // pred_region
    _
  $region33: #{conformer_forward.10} parent=0 // pred_fallthru
    _
  // Predicated region
  $region34: #{conformer_forward.10} parent=0 // pred_check
    _
  $region35: #{conformer_forward.10} parent=0 // pred_check_branch
    %325 = sbr.rel (0) target = $region37
  $region36: #{conformer_forward.10} parent=0 // pred_region
    _
  $region37: #{conformer_forward.10} parent=0 // pred_fallthru
    _

// kernel: conformer_forward.12
$region0: #{conformer_forward.12}
  #allocation0 [shape = 'u32[]', space=smem, size = 0x4, offset = 0x4, fixed_abs, tag = 'smem constant byte address 0x4 - core index']
  #allocation1 [shape = 'u32[72,128]{1,0:T(1,128)}', space=vmem, size = 0x9000, scoped, tag = 'internal scratch']
  %s0 = inlined_call_operand.vmem [shape: f32[8,8], index: 0, kind: input, shape index: {}]
  %s1 = inlined_call_operand.vmem [shape: bf16[8,32], index: 1, kind: input, shape index: {}]
  %s2 = inlined_call_operand.vmem [shape: f32[1,32], index: 2, kind: input, shape index: {}]
  %s3 = inlined_call_operand.vmem [shape: f32[8,32], index: 3, kind: output, shape index: {}]
  %s4 = sld [smem:[#allocation0]]
  $region22: #{conformer_forward.12} parent=0
    _
  %s6 = ssub.s32 1, %s4
  %s7 = scalar_select 0, %s6, %s4
  // Predicated region
  $region2: #{conformer_forward.12} parent=0 // pred_check
    _
  $region3: #{conformer_forward.12} parent=0 // pred_check_branch
    %9 = sbr.rel (0) target = $region5
  $region4: #{conformer_forward.12} parent=0 // pred_region
    _
  $region5: #{conformer_forward.12} parent=0 // pred_fallthru
    _
  // Predicated region
  $region6: #{conformer_forward.12} parent=0 // pred_check
    _
  $region7: #{conformer_forward.12} parent=0 // pred_check_branch
    %11 = sbr.rel (0) target = $region9
  $region8: #{conformer_forward.12} parent=0 // pred_region
    _
  $region9: #{conformer_forward.12} parent=0 // pred_fallthru
    _
  // Predicated region
  $region10: #{conformer_forward.12} parent=0 // pred_check
    _
  $region11: #{conformer_forward.12} parent=0 // pred_check_branch
    %13 = sbr.rel (0) target = $region13
  $region12: #{conformer_forward.12} parent=0 // pred_region
    _
  $region13: #{conformer_forward.12} parent=0 // pred_fallthru
    _
  %v15 = vld [vmem:[%s0] sm:$0xff]
  %v16 = vpack.c.bf16 %v15, %v15
  %v17 = vld [vmem:[%s1] sm:$0xf]
  %v18 = vld [vmem:[%s2] sm:$0x1]
  %v20 = vperm.slane %v18, 0
  %vm22 = vcmask 64512
  %v24 = vsel %vm22, %v16, 0
  %vm26 = vcmask 1043456
  %v28 = vsel %vm26, %v17, 0
  %30 = vmatpush.bf16.msra.mxu0 0
  %31 = vmatpush.bf16.msra.mxu0 0
  %32 = vmatpush.bf16.msra.mxu0 0
  %33 = vmatpush.bf16.msra.mxu0 0
  %34 = vmatpush.bf16.msra.mxu0 0
  %35 = vmatpush.bf16.msra.mxu0 0
  %36 = vmatpush.bf16.msra.mxu0 0
  %37 = vmatpush.bf16.msra.mxu0 %v28
  %38 = vmatmul.bf16.gmra.mxu0 %v24
  %v39 = vpop.f32.mrf.mxu0
  %v40 = vadd.f32 %v20, %v39
  %v41 = vpop.f32.mrf.mxu0
  %42 = vdwg.mxu0
  %vm43 = vcmask 261120
  %44 = vst.msk [vmem:[%s3] sm:$0xff] %vm43, %v40
  // Predicated region
  $region14: #{conformer_forward.12} parent=0 // pred_check
    _
  $region15: #{conformer_forward.12} parent=0 // pred_check_branch
    %46 = sbr.rel (0) target = $region17
  $region16: #{conformer_forward.12} parent=0 // pred_region
    _
  $region17: #{conformer_forward.12} parent=0 // pred_fallthru
    _
  // Predicated region
  $region18: #{conformer_forward.12} parent=0 // pred_check
    _
  $region19: #{conformer_forward.12} parent=0 // pred_check_branch
    %48 = sbr.rel (0) target = $region21
  $region20: #{conformer_forward.12} parent=0 // pred_region
    _
  $region21: #{conformer_forward.12} parent=0 // pred_fallthru
    _

// kernel: conformer_forward.13
$region0: #{conformer_forward.13}
  #allocation0 [shape = 'u32[]', space=smem, size = 0x4, offset = 0x4, fixed_abs, tag = 'smem constant byte address 0x4 - core index']
  #allocation1 [shape = 'u32[72,128]{1,0:T(1,128)}', space=vmem, size = 0x9000, scoped, tag = 'internal scratch']
  %s0 = inlined_call_operand.vmem [shape: f32[32,8], index: 0, kind: input, shape index: {}]
  %s1 = inlined_call_operand.vmem [shape: f32[1,8], index: 1, kind: input, shape index: {}]
  %s2 = inlined_call_operand.vmem [shape: f32[1,8], index: 2, kind: input, shape index: {}]
  %s3 = inlined_call_operand.vmem [shape: f32[32,8], index: 3, kind: output, shape index: {}]
  %s4 = sld [smem:[#allocation0]]
  $region22: #{conformer_forward.13} parent=0
    _
  %s6 = ssub.s32 1, %s4
  %s7 = scalar_select 0, %s6, %s4
  // Predicated region
  $region2: #{conformer_forward.13} parent=0 // pred_check
    _
  $region3: #{conformer_forward.13} parent=0 // pred_check_branch
    %9 = sbr.rel (0) target = $region5
  $region4: #{conformer_forward.13} parent=0 // pred_region
    _
  $region5: #{conformer_forward.13} parent=0 // pred_fallthru
    _
  // Predicated region
  $region6: #{conformer_forward.13} parent=0 // pred_check
    _
  $region7: #{conformer_forward.13} parent=0 // pred_check_branch
    %11 = sbr.rel (0) target = $region9
  $region8: #{conformer_forward.13} parent=0 // pred_region
    _
  $region9: #{conformer_forward.13} parent=0 // pred_fallthru
    _
  // Predicated region
  $region10: #{conformer_forward.13} parent=0 // pred_check
    _
  $region11: #{conformer_forward.13} parent=0 // pred_check_branch
    %13 = sbr.rel (0) target = $region13
  $region12: #{conformer_forward.13} parent=0 // pred_region
    _
  $region13: #{conformer_forward.13} parent=0 // pred_fallthru
    _
  %v14 = vld [vmem:[%s0] sm:$0xff]
  %v15 = vld [vmem:[%s0 + $0x8] sm:$0xff]
  %v16 = vld [vmem:[%s0 + $0x10] sm:$0xff]
  %v17 = vld [vmem:[%s0 + $0x18] sm:$0xff]
  %vm18 = vcmask 64512
  %v19 = vsel %vm18, %v14, 0.0
  %20 = vadd.xlane.f32.xlu0 %v19
  %v21 = vpop.xlane.xlu0 %20
  %v22 = vsel %vm18, %v15, 0.0
  %23 = vadd.xlane.f32.xlu0 %v22
  %v24 = vpop.xlane.xlu0 %23
  %v25 = vsel %vm18, %v16, 0.0
  %26 = vadd.xlane.f32.xlu0 %v25
  %v27 = vpop.xlane.xlu0 %26
  %v28 = vsel %vm18, %v17, 0.0
  %29 = vadd.xlane.f32.xlu0 %v28
  %v30 = vpop.xlane.xlu0 %29
  %v31 = vrcp.pop 8.0
  %v32 = vmul.f32 8.0, %v31
  %v33 = vsub.f32 1.0, %v32
  %v34 = vmul.f32 %v31, %v33
  %v35 = vadd.f32 %v31, %v34
  %vm36 = vweird.f32 %v31
  %v37 = vsel %vm36, %v31, %v35
  %v38 = vmul.f32 %v21, %v37
  %v39 = vmul.f32 %v24, %v37
  %v40 = vmul.f32 %v27, %v37
  %v41 = vmul.f32 %v30, %v37
  %v42 = vsub.f32 %v14, %v38
  %v43 = vsub.f32 %v15, %v39
  %v44 = vsub.f32 %v16, %v40
  %v45 = vsub.f32 %v17, %v41
  %v46 = vmul.f32 %v42, %v42
  %v47 = vmul.f32 %v43, %v43
  %v48 = vmul.f32 %v44, %v44
  %v49 = vmul.f32 %v45, %v45
  %v50 = vsel %vm18, %v46, 0.0
  %51 = vadd.xlane.f32.xlu0 %v50
  %v52 = vpop.xlane.xlu0 %51
  %v53 = vsel %vm18, %v47, 0.0
  %54 = vadd.xlane.f32.xlu0 %v53
  %v55 = vpop.xlane.xlu0 %54
  %v56 = vsel %vm18, %v48, 0.0
  %57 = vadd.xlane.f32.xlu0 %v56
  %v58 = vpop.xlane.xlu0 %57
  %v59 = vsel %vm18, %v49, 0.0
  %60 = vadd.xlane.f32.xlu0 %v59
  %v61 = vpop.xlane.xlu0 %60
  %v62 = vmul.f32 %v52, %v37
  %v63 = vmul.f32 %v55, %v37
  %v64 = vmul.f32 %v58, %v37
  %v65 = vmul.f32 %v61, %v37
  %v66 = vadd.f32 %v62, 1e-05
  %v67 = vadd.f32 %v63, 1e-05
  %v68 = vadd.f32 %v64, 1e-05
  %v69 = vadd.f32 %v65, 1e-05
  %v70 = vrsqrt.pop %v66
  %v71 = vmul.f32 %v70, %v66
  %v72 = vmul.f32 %v71, %v70
  %v73 = vmul.f32 0.5, %v72
  %v74 = vsub.f32 1.5, %v73
  %v75 = vmul.f32 %v70, %v74
  %vm76 = vweird.f32 %v66
  %vm77 = vweird.f32 %v70
  %vm78 = vmor %vm76, %vm77
  %v79 = vsel %vm78, %v70, %v75
  %v80 = vrsqrt.pop %v67
  %v81 = vmul.f32 %v80, %v67
  %v82 = vmul.f32 %v81, %v80
  %v83 = vmul.f32 0.5, %v82
  %v84 = vsub.f32 1.5, %v83
  %v85 = vmul.f32 %v80, %v84
  %vm86 = vweird.f32 %v67
  %vm87 = vweird.f32 %v80
  %vm88 = vmor %vm86, %vm87
  %v89 = vsel %vm88, %v80, %v85
  %v90 = vrsqrt.pop %v68
  %v91 = vmul.f32 %v90, %v68
  %v92 = vmul.f32 %v91, %v90
  %v93 = vmul.f32 0.5, %v92
  %v94 = vsub.f32 1.5, %v93
  %v95 = vmul.f32 %v90, %v94
  %vm96 = vweird.f32 %v68
  %vm97 = vweird.f32 %v90
  %vm98 = vmor %vm96, %vm97
  %v99 = vsel %vm98, %v90, %v95
  %v100 = vrsqrt.pop %v69
  %v101 = vmul.f32 %v100, %v69
  %v102 = vmul.f32 %v101, %v100
  %v103 = vmul.f32 0.5, %v102
  %v104 = vsub.f32 1.5, %v103
  %v105 = vmul.f32 %v100, %v104
  %vm106 = vweird.f32 %v69
  %vm107 = vweird.f32 %v100
  %vm108 = vmor %vm106, %vm107
  %v109 = vsel %vm108, %v100, %v105
  %v110 = vmul.f32 %v42, %v79
  %v111 = vmul.f32 %v43, %v89
  %v112 = vmul.f32 %v44, %v99
  %v113 = vmul.f32 %v45, %v109
  %v114 = vld [vmem:[%s1] sm:$0x1]
  %v116 = vperm.slane %v114, 0
  %v118 = vmul.f32 %v110, %v116
  %v119 = vmul.f32 %v111, %v116
  %v120 = vmul.f32 %v112, %v116
  %v121 = vmul.f32 %v113, %v116
  %v122 = vld [vmem:[%s2] sm:$0x1]
  %v124 = vperm.slane %v122, 0
  %v126 = vadd.f32 %v118, %v124
  %v127 = vadd.f32 %v119, %v124
  %v128 = vadd.f32 %v120, %v124
  %v129 = vadd.f32 %v121, %v124
  %130 = vst.msk [vmem:[%s3] sm:$0xff] %vm18, %v126
  %131 = vst.msk [vmem:[%s3 + $0x8] sm:$0xff] %vm18, %v127
  %132 = vst.msk [vmem:[%s3 + $0x10] sm:$0xff] %vm18, %v128
  %133 = vst.msk [vmem:[%s3 + $0x18] sm:$0xff] %vm18, %v129
  // Predicated region
  $region14: #{conformer_forward.13} parent=0 // pred_check
    _
  $region15: #{conformer_forward.13} parent=0 // pred_check_branch
    %135 = sbr.rel (0) target = $region17
  $region16: #{conformer_forward.13} parent=0 // pred_region
    _
  $region17: #{conformer_forward.13} parent=0 // pred_fallthru
    _
  // Predicated region
  $region18: #{conformer_forward.13} parent=0 // pred_check
    _
  $region19: #{conformer_forward.13} parent=0 // pred_check_branch
    %137 = sbr.rel (0) target = $region21
  $region20: #{conformer_forward.13} parent=0 // pred_region
    _
  $region21: #{conformer_forward.13} parent=0 // pred_fallthru
    _

// kernel: conformer_forward.15
$region0: #{conformer_forward.15}
  #allocation0 [shape = 'u32[]', space=smem, size = 0x4, offset = 0x4, fixed_abs, tag = 'smem constant byte address 0x4 - core index']
  #allocation1 [shape = 'u32[72,128]{1,0:T(1,128)}', space=vmem, size = 0x9000, scoped, tag = 'internal scratch']
  %s0 = inlined_call_operand.vmem [shape: f32[20,32], index: 0, kind: input, shape index: {}]
  %s1 = inlined_call_operand.vmem [shape: f32[1,32], index: 1, kind: input, shape index: {}]
  %s2 = inlined_call_operand.vmem [shape: f32[1,32], index: 2, kind: input, shape index: {}]
  %s3 = inlined_call_operand.vmem [shape: bf16[32,64], index: 3, kind: input, shape index: {}]
  %s4 = inlined_call_operand.vmem [shape: f32[1,64], index: 4, kind: input, shape index: {}]
  %s5 = inlined_call_operand.vmem [shape: bf16[32,64], index: 5, kind: input, shape index: {}]
  %s6 = inlined_call_operand.vmem [shape: f32[1,64], index: 6, kind: input, shape index: {}]
  %s7 = inlined_call_operand.vmem [shape: f32[20,64], index: 7, kind: output, shape index: {}]
  %s8 = sld [smem:[#allocation0]]
  $region38: #{conformer_forward.15} parent=0
    _
  %s10 = ssub.s32 1, %s8
  %s11 = scalar_select 0, %s10, %s8
  // Predicated region
  $region2: #{conformer_forward.15} parent=0 // pred_check
    _
  $region3: #{conformer_forward.15} parent=0 // pred_check_branch
    %13 = sbr.rel (0) target = $region5
  $region4: #{conformer_forward.15} parent=0 // pred_region
    _
  $region5: #{conformer_forward.15} parent=0 // pred_fallthru
    _
  // Predicated region
  $region6: #{conformer_forward.15} parent=0 // pred_check
    _
  $region7: #{conformer_forward.15} parent=0 // pred_check_branch
    %15 = sbr.rel (0) target = $region9
  $region8: #{conformer_forward.15} parent=0 // pred_region
    _
  $region9: #{conformer_forward.15} parent=0 // pred_fallthru
    _
  // Predicated region
  $region10: #{conformer_forward.15} parent=0 // pred_check
    _
  $region11: #{conformer_forward.15} parent=0 // pred_check_branch
    %17 = sbr.rel (0) target = $region13
  $region12: #{conformer_forward.15} parent=0 // pred_region
    _
  $region13: #{conformer_forward.15} parent=0 // pred_fallthru
    _
  // Predicated region
  $region14: #{conformer_forward.15} parent=0 // pred_check
    _
  $region15: #{conformer_forward.15} parent=0 // pred_check_branch
    %19 = sbr.rel (0) target = $region17
  $region16: #{conformer_forward.15} parent=0 // pred_region
    _
  $region17: #{conformer_forward.15} parent=0 // pred_fallthru
    _
  // Predicated region
  $region18: #{conformer_forward.15} parent=0 // pred_check
    _
  $region19: #{conformer_forward.15} parent=0 // pred_check_branch
    %21 = sbr.rel (0) target = $region21
  $region20: #{conformer_forward.15} parent=0 // pred_region
    _
  $region21: #{conformer_forward.15} parent=0 // pred_fallthru
    _
  // Predicated region
  $region22: #{conformer_forward.15} parent=0 // pred_check
    _
  $region23: #{conformer_forward.15} parent=0 // pred_check_branch
    %23 = sbr.rel (0) target = $region25
  $region24: #{conformer_forward.15} parent=0 // pred_region
    _
  $region25: #{conformer_forward.15} parent=0 // pred_fallthru
    _
  // Predicated region
  $region26: #{conformer_forward.15} parent=0 // pred_check
    _
  $region27: #{conformer_forward.15} parent=0 // pred_check_branch
    %25 = sbr.rel (0) target = $region29
  $region28: #{conformer_forward.15} parent=0 // pred_region
    _
  $region29: #{conformer_forward.15} parent=0 // pred_fallthru
    _
  %v27 = vld [vmem:[%s0] sm:$0xff]
  %v28 = vld [vmem:[%s0 + $0x8] sm:$0xff]
  %v29 = vld [vmem:[%s0 + $0x10] sm:$0xf]
  %vm30 = vcmask 261120
  %v31 = vsel %vm30, %v27, 0.0
  %32 = vadd.xlane.f32.xlu0 %v31
  %v33 = vpop.xlane.xlu0 %32
  %v34 = vsel %vm30, %v28, 0.0
  %35 = vadd.xlane.f32.xlu0 %v34
  %v36 = vpop.xlane.xlu0 %35
  %vm37 = vcmask 257024
  %v38 = vsel %vm37, %v29, 0.0
  %39 = vadd.xlane.f32.xlu0 %v38
  %v40 = vpop.xlane.xlu0 %39
  %v41 = vrcp.pop 32.0
  %v42 = vmul.f32 32.0, %v41
  %v43 = vsub.f32 1.0, %v42
  %v44 = vmul.f32 %v41, %v43
  %v45 = vadd.f32 %v41, %v44
  %vm46 = vweird.f32 %v41
  %v47 = vsel %vm46, %v41, %v45
  %v48 = vmul.f32 %v33, %v47
  %v49 = vmul.f32 %v36, %v47
  %v50 = vmul.f32 %v40, %v47
  %v51 = vsub.f32 %v27, %v48
  %v52 = vsub.f32 %v28, %v49
  %v53 = vsub.f32 %v29, %v50
  %v54 = vmul.f32 %v51, %v51
  %v55 = vmul.f32 %v52, %v52
  %v56 = vmul.f32 %v53, %v53
  %v57 = vsel %vm30, %v54, 0.0
  %58 = vadd.xlane.f32.xlu0 %v57
  %v59 = vpop.xlane.xlu0 %58
  %v60 = vsel %vm30, %v55, 0.0
  %61 = vadd.xlane.f32.xlu0 %v60
  %v62 = vpop.xlane.xlu0 %61
  %v63 = vsel %vm37, %v56, 0.0
  %64 = vadd.xlane.f32.xlu0 %v63
  %v65 = vpop.xlane.xlu0 %64
  %v66 = vmul.f32 %v59, %v47
  %v67 = vmul.f32 %v62, %v47
  %v68 = vmul.f32 %v65, %v47
  %v69 = vadd.f32 %v66, 1e-05
  %v70 = vadd.f32 %v67, 1e-05
  %v71 = vadd.f32 %v68, 1e-05
  %v72 = vrsqrt.pop %v69
  %v73 = vmul.f32 %v72, %v69
  %v74 = vmul.f32 %v73, %v72
  %v75 = vmul.f32 0.5, %v74
  %v76 = vsub.f32 1.5, %v75
  %v77 = vmul.f32 %v72, %v76
  %vm78 = vweird.f32 %v69
  %vm79 = vweird.f32 %v72
  %vm80 = vmor %vm78, %vm79
  %v81 = vsel %vm80, %v72, %v77
  %v82 = vrsqrt.pop %v70
  %v83 = vmul.f32 %v82, %v70
  %v84 = vmul.f32 %v83, %v82
  %v85 = vmul.f32 0.5, %v84
  %v86 = vsub.f32 1.5, %v85
  %v87 = vmul.f32 %v82, %v86
  %vm88 = vweird.f32 %v70
  %vm89 = vweird.f32 %v82
  %vm90 = vmor %vm88, %vm89
  %v91 = vsel %vm90, %v82, %v87
  %v92 = vrsqrt.pop %v71
  %v93 = vmul.f32 %v92, %v71
  %v94 = vmul.f32 %v93, %v92
  %v95 = vmul.f32 0.5, %v94
  %v96 = vsub.f32 1.5, %v95
  %v97 = vmul.f32 %v92, %v96
  %vm98 = vweird.f32 %v71
  %vm99 = vweird.f32 %v92
  %vm100 = vmor %vm98, %vm99
  %v101 = vsel %vm100, %v92, %v97
  %v102 = vmul.f32 %v51, %v81
  %v103 = vmul.f32 %v52, %v91
  %v104 = vmul.f32 %v53, %v101
  %v105 = vld [vmem:[%s1] sm:$0x1]
  %v107 = vperm.slane %v105, 0
  %v109 = vmul.f32 %v102, %v107
  %v110 = vmul.f32 %v103, %v107
  %v111 = vmul.f32 %v104, %v107
  %v112 = vld [vmem:[%s2] sm:$0x1]
  %v114 = vperm.slane %v112, 0
  %v116 = vadd.f32 %v109, %v114
  %v117 = vadd.f32 %v110, %v114
  %v118 = vadd.f32 %v111, %v114
  %v119 = vpack.c.bf16 %v117, %v116
  %v120 = vpack.c.bf16 %v118, %v118
  %v121 = vld [vmem:[%s3] sm:$0xf]
  %v122 = vld [vmem:[%s3 + $0x4] sm:$0xf]
  %v123 = vld [vmem:[%s3 + $0x8] sm:$0xf]
  %v124 = vld [vmem:[%s3 + $0xc] sm:$0xf]
  %v125 = vld [vmem:[%s4] sm:$0x1]
  %v127 = vperm.slane %v125, 0
  %v133 = vunpack.c.l.b16 %v121
  %v134 = vunpack.c.l.b16 %v122
  %v135 = vunpack.c.l.b16 %v123
  %v136 = vunpack.c.l.b16 %v124
  %v137 = vpack.c.b16 %v134, %v133
  %v138 = vpack.c.b16 %v136, %v135
  %v142 = vsel %vm30, %v119, 0
  %v145 = vsel %vm30, %v120, 0
  %147 = vmatpush.bf16.msra.mxu0 0
  %148 = vmatpush.bf16.msra.mxu0 0
  %149 = vmatpush.bf16.msra.mxu0 0
  %150 = vmatpush.bf16.msra.mxu0 0
  %151 = vmatpush.bf16.msra.mxu0 0
  %152 = vmatpush.bf16.msra.mxu0 0
  %153 = vmatpush.bf16.msra.mxu0 %v138
  %154 = vmatpush.bf16.msra.mxu0 %v137
  %155 = vmatmul.bf16.gmra.mxu0 %v142
  %v156 = vpop.f32.mrf.mxu0
  %v157 = vadd.f32 %v127, %v156
  %v158 = vpop.f32.mrf.mxu0
  %v159 = vadd.f32 %v127, %v158
  %160 = vmatmul.bf16.gmra.mxu0 %v145
  %v161 = vpop.f32.mrf.mxu0
  %v162 = vadd.f32 %v127, %v161
  %v163 = vpop.f32.mrf.mxu0
  %164 = vdwg.mxu0
  %v165 = vld [vmem:[%s5] sm:$0xf]
  %v166 = vld [vmem:[%s5 + $0x4] sm:$0xf]
  %v167 = vld [vmem:[%s5 + $0x8] sm:$0xf]
  %v168 = vld [vmem:[%s5 + $0xc] sm:$0xf]
  %v169 = vld [vmem:[%s6] sm:$0x1]
  %v171 = vperm.slane %v169, 0
  %v177 = vunpack.c.l.b16 %v165
  %v178 = vunpack.c.l.b16 %v166
  %v179 = vunpack.c.l.b16 %v167
  %v180 = vunpack.c.l.b16 %v168
  %v181 = vpack.c.b16 %v178, %v177
  %v182 = vpack.c.b16 %v180, %v179
  %185 = vmatpush.bf16.msra.mxu0 0
  %186 = vmatpush.bf16.msra.mxu0 0
  %187 = vmatpush.bf16.msra.mxu0 0
  %188 = vmatpush.bf16.msra.mxu0 0
  %189 = vmatpush.bf16.msra.mxu0 0
  %190 = vmatpush.bf16.msra.mxu0 0
  %191 = vmatpush.bf16.msra.mxu0 %v182
  %192 = vmatpush.bf16.msra.mxu0 %v181
  %193 = vmatmul.bf16.gmra.mxu0 %v142
  %v194 = vpop.f32.mrf.mxu0
  %v195 = vadd.f32 %v171, %v194
  %v196 = vpop.f32.mrf.mxu0
  %v197 = vadd.f32 %v171, %v196
  %198 = vmatmul.bf16.gmra.mxu0 %v145
  %v199 = vpop.f32.mrf.mxu0
  %v200 = vadd.f32 %v171, %v199
  %v201 = vpop.f32.mrf.mxu0
  %202 = vdwg.mxu0
  %v203 = vxor.u32 %v195, 2147483648
  %v204 = vxor.u32 %v197, 2147483648
  %v205 = vxor.u32 %v200, 2147483648
  %v206 = vmul.f32 %v203, 1.442695
  %v207 = vpow.pop %v206
  %v208 = vmul.f32 %v204, 1.442695
  %v209 = vpow.pop %v208
  %v210 = vmul.f32 %v205, 1.442695
  %v211 = vpow.pop %v210
  %v212 = vadd.f32 %v207, 1.0
  %v213 = vadd.f32 %v209, 1.0
  %v214 = vadd.f32 %v211, 1.0
  %v215 = vrcp.pop %v212
  %v216 = vmul.f32 %v212, %v215
  %v217 = vsub.f32 1.0, %v216
  %v218 = vmul.f32 %v215, %v217
  %v219 = vadd.f32 %v215, %v218
  %vm220 = vweird.f32 %v212
  %vm221 = vweird.f32 %v215
  %vm222 = vmor %vm220, %vm221
  %v223 = vsel %vm222, %v215, %v219
  %v224 = vand.u32 2147483647, %v212
  %vm225 = vcmp.eq.f32.partialorder %v224, 8.507059e+37
  %v226 = vand.u32 %v212, 2147483648
  %v227 = vor.u32 1.1754944e-38, %v226
  %v228 = vsel %vm225, %v227, %v223
  %v229 = vmul.f32 1.0, %v228
  %v230 = vrcp.pop %v213
  %v231 = vmul.f32 %v213, %v230
  %v232 = vsub.f32 1.0, %v231
  %v233 = vmul.f32 %v230, %v232
  %v234 = vadd.f32 %v230, %v233
  %vm235 = vweird.f32 %v213
  %vm236 = vweird.f32 %v230
  %vm237 = vmor %vm235, %vm236
  %v238 = vsel %vm237, %v230, %v234
  %v239 = vand.u32 2147483647, %v213
  %vm240 = vcmp.eq.f32.partialorder %v239, 8.507059e+37
  %v241 = vand.u32 %v213, 2147483648
  %v242 = vor.u32 1.1754944e-38, %v241
  %v243 = vsel %vm240, %v242, %v238
  %v244 = vmul.f32 1.0, %v243
  %v245 = vrcp.pop %v214
  %v246 = vmul.f32 %v214, %v245
  %v247 = vsub.f32 1.0, %v246
  %v248 = vmul.f32 %v245, %v247
  %v249 = vadd.f32 %v245, %v248
  %vm250 = vweird.f32 %v214
  %vm251 = vweird.f32 %v245
  %vm252 = vmor %vm250, %vm251
  %v253 = vsel %vm252, %v245, %v249
  %v254 = vand.u32 2147483647, %v214
  %vm255 = vcmp.eq.f32.partialorder %v254, 8.507059e+37
  %v256 = vand.u32 %v214, 2147483648
  %v257 = vor.u32 1.1754944e-38, %v256
  %v258 = vsel %vm255, %v257, %v253
  %v259 = vmul.f32 1.0, %v258
  %v260 = vmul.f32 %v157, %v229
  %v261 = vmul.f32 %v159, %v244
  %v262 = vmul.f32 %v162, %v259
  %vm263 = vcmask 523264
  %264 = vst.msk [vmem:[%s7] sm:$0xff] %vm263, %v260
  %265 = vst.msk [vmem:[%s7 + $0x8] sm:$0xff] %vm263, %v261
  %vm266 = vcmask 519168
  %267 = vst.msk [vmem:[%s7 + $0x10] sm:$0xf] %vm266, %v262
  // Predicated region
  $region30: #{conformer_forward.15} parent=0 // pred_check
    _
  $region31: #{conformer_forward.15} parent=0 // pred_check_branch
    %269 = sbr.rel (0) target = $region33
  $region32: #{conformer_forward.15} parent=0 // pred_region
    _
  $region33: #{conformer_forward.15} parent=0 // pred_fallthru
    _
  // Predicated region
  $region34: #{conformer_forward.15} parent=0 // pred_check
    _
  $region35: #{conformer_forward.15} parent=0 // pred_check_branch
    %271 = sbr.rel (0) target = $region37
  $region36: #{conformer_forward.15} parent=0 // pred_region
    _
  $region37: #{conformer_forward.15} parent=0 // pred_fallthru
    _

// kernel: conformer_forward.16
$region0: #{conformer_forward.16}
  #allocation0 [shape = 'u32[]', space=smem, size = 0x4, offset = 0x4, fixed_abs, tag = 'smem constant byte address 0x4 - core index']
  #allocation1 [shape = 'u32[72,128]{1,0:T(1,128)}', space=vmem, size = 0x9000, scoped, tag = 'internal scratch']
  %s0 = inlined_call_operand.vmem [shape: f32[2,10,64], index: 0, kind: input, shape index: {}]
  %s1 = inlined_call_operand.vmem [shape: f32[7,64], index: 1, kind: input, shape index: {}]
  %s2 = inlined_call_operand.vmem [shape: f32[1,64], index: 2, kind: input, shape index: {}]
  %s3 = inlined_call_operand.vmem [shape: f32[2,10,64], index: 3, kind: output, shape index: {0}]
  %s4 = inlined_call_operand.vmem [shape: f32[2,1,64], index: 4, kind: output, shape index: {1}]
  %s5 = inlined_call_operand.vmem [shape: f32[2,1,64], index: 5, kind: output, shape index: {2}]
  %6 = xla_tuple %s3, %s4, %s5
  %s7 = sld [smem:[#allocation0]]
  $region61: #{conformer_forward.16} parent=0
    _
  %s9 = ssub.s32 1, %s7
  %s10 = scalar_select 0, %s9, %s7
  loop: start=0, step=1, limit=4
  $region2: #{conformer_forward.16} parent=0 // loop_pre_header
    _
  $region3: #{conformer_forward.16} parent=0 // loop_header
    %s12 = sphi 0, %s16
    %p13 = scmp.ge.s32.totalorder %s12, 4
    %s22 = sphi 0, %s24
    %s25 = sphi 0, %s22
    %s26 = sphi 0, %s25
    %s42 = sphi 0, %s26
    %s46 = sphi 0, %s46
    %s48 = sphi 0, %s46
    %s49 = sphi 0, %s48
    %s63 = sphi 0, %s49
    %s67 = sphi 0, %s67
    %s69 = sphi 0, %s67
    %s70 = sphi 0, %s69
    %s84 = sphi 0, %s70
    %s90 = sphi 0, %s92
    %s93 = sphi 0, %s90
    %s94 = sphi 0, %s93
    %s110 = sphi 0, %s94
    %s116 = sphi 0, %s118
    %s119 = sphi 0, %s116
    %s120 = sphi 0, %s119
    %s136 = sphi 0, %s120
    %s142 = sphi 0, %s144
    %s145 = sphi 0, %s142
    %s146 = sphi 0, %s145
    %s162 = sphi 0, %s146
  $region4: #{conformer_forward.16} parent=0 // loop_header_branch
    %15 = sbr.rel (%p13) target = $region8
  $region5: #{conformer_forward.16} parent=0 // loop_body
    %s17 = ssub.s32 %s12, 1
    %s18 = ssub.s32 %s12, 2
    %s19 = sadd.s32 %s12, 1
    %s20 = ssub.s32 %s12, %s19
    %p21 = scmp.eq.s32.totalorder %s20, 0
    %s23 = sadd.s32 %s22, 1
    %s24 = scalar_select %p21, %s22, %s23
    %p27 = pneg %p21
    %p28 = scmp.eq.s32.totalorder %s12, 1
    %p29 = por %p27, %p28
    %p30 = scmp.ne.s32.totalorder %s22, %s25
    %p31 = scmp.eq.s32.totalorder %s12, 0
    %p32 = por %p30, %p31
    %p33 = scmp.ne.s32.totalorder %s22, %s25
    %p34 = scmp.eq.s32.totalorder %s17, 1
    %p35 = por %p33, %p34
    %p36 = scmp.ne.s32.totalorder %s25, %s26
    %p37 = scmp.eq.s32.totalorder %s17, 0
    %p38 = por %p36, %p37
    %p39 = scmp.ne.s32.totalorder %s25, %s26
    %p40 = scmp.eq.s32.totalorder %s18, 1
    %p41 = por %p39, %p40
    %p43 = scmp.ne.s32.totalorder %s26, %s42
    %p44 = scmp.eq.s32.totalorder %s18, 0
    %p45 = por %p43, %p44
    %s47 = sadd.s32 %s46, 1
    %p50 = scmp.eq.s32.totalorder %s12, 1
    %p51 = scmp.ne.s32.totalorder %s46, %s48
    %p52 = scmp.eq.s32.totalorder %s12, 0
    %p53 = por %p51, %p52
    %p54 = scmp.ne.s32.totalorder %s46, %s48
    %p55 = scmp.eq.s32.totalorder %s17, 1
    %p56 = por %p54, %p55
    %p57 = scmp.ne.s32.totalorder %s48, %s49
    %p58 = scmp.eq.s32.totalorder %s17, 0
    %p59 = por %p57, %p58
    %p60 = scmp.ne.s32.totalorder %s48, %s49
    %p61 = scmp.eq.s32.totalorder %s18, 1
    %p62 = por %p60, %p61
    %p64 = scmp.ne.s32.totalorder %s49, %s63
    %p65 = scmp.eq.s32.totalorder %s18, 0
    %p66 = por %p64, %p65
    %s68 = sadd.s32 %s67, 1
    %p71 = scmp.eq.s32.totalorder %s12, 1
    %p72 = scmp.ne.s32.totalorder %s67, %s69
    %p73 = scmp.eq.s32.totalorder %s12, 0
    %p74 = por %p72, %p73
    %p75 = scmp.ne.s32.totalorder %s67, %s69
    %p76 = scmp.eq.s32.totalorder %s17, 1
    %p77 = por %p75, %p76
    %p78 = scmp.ne.s32.totalorder %s69, %s70
    %p79 = scmp.eq.s32.totalorder %s17, 0
    %p80 = por %p78, %p79
    %p81 = scmp.ne.s32.totalorder %s69, %s70
    %p82 = scmp.eq.s32.totalorder %s18, 1
    %p83 = por %p81, %p82
    %p85 = scmp.ne.s32.totalorder %s70, %s84
    %p86 = scmp.eq.s32.totalorder %s18, 0
    %p87 = por %p85, %p86
    %s88 = ssub.s32 %s12, %s19
    %p89 = scmp.eq.s32.totalorder %s88, 0
    %s91 = sadd.s32 %s90, 1
    %s92 = scalar_select %p89, %s90, %s91
    %p95 = pneg %p89
    %p96 = scmp.eq.s32.totalorder %s12, 1
    %p97 = por %p95, %p96
    %p98 = scmp.ne.s32.totalorder %s90, %s93
    %p99 = scmp.eq.s32.totalorder %s12, 0
    %p100 = por %p98, %p99
    %p101 = scmp.ne.s32.totalorder %s90, %s93
    %p102 = scmp.eq.s32.totalorder %s17, 1
    %p103 = por %p101, %p102
    %p104 = scmp.ne.s32.totalorder %s93, %s94
    %p105 = scmp.eq.s32.totalorder %s17, 0
    %p106 = por %p104, %p105
    %p107 = scmp.ne.s32.totalorder %s93, %s94
    %p108 = scmp.eq.s32.totalorder %s18, 1
    %p109 = por %p107, %p108
    %p111 = scmp.ne.s32.totalorder %s94, %s110
    %p112 = scmp.eq.s32.totalorder %s18, 0
    %p113 = por %p111, %p112
    %s114 = ssub.s32 %s12, %s19
    %p115 = scmp.eq.s32.totalorder %s114, 0
    %s117 = sadd.s32 %s116, 1
    %s118 = scalar_select %p115, %s116, %s117
    %p121 = pneg %p115
    %p122 = scmp.eq.s32.totalorder %s12, 1
    %p123 = por %p121, %p122
    %p124 = scmp.ne.s32.totalorder %s116, %s119
    %p125 = scmp.eq.s32.totalorder %s12, 0
    %p126 = por %p124, %p125
    %p127 = scmp.ne.s32.totalorder %s116, %s119
    %p128 = scmp.eq.s32.totalorder %s17, 1
    %p129 = por %p127, %p128
    %p130 = scmp.ne.s32.totalorder %s119, %s120
    %p131 = scmp.eq.s32.totalorder %s17, 0
    %p132 = por %p130, %p131
    %p133 = scmp.ne.s32.totalorder %s119, %s120
    %p134 = scmp.eq.s32.totalorder %s18, 1
    %p135 = por %p133, %p134
    %p137 = scmp.ne.s32.totalorder %s120, %s136
    %p138 = scmp.eq.s32.totalorder %s18, 0
    %p139 = por %p137, %p138
    %s140 = ssub.s32 %s12, %s19
    %p141 = scmp.eq.s32.totalorder %s140, 0
    %s143 = sadd.s32 %s142, 1
    %s144 = scalar_select %p141, %s142, %s143
    %p147 = pneg %p141
    %p148 = scmp.eq.s32.totalorder %s12, 1
    %p149 = por %p147, %p148
    %p150 = scmp.ne.s32.totalorder %s142, %s145
    %p151 = scmp.eq.s32.totalorder %s12, 0
    %p152 = por %p150, %p151
    %p153 = scmp.ne.s32.totalorder %s142, %s145
    %p154 = scmp.eq.s32.totalorder %s17, 1
    %p155 = por %p153, %p154
    %p156 = scmp.ne.s32.totalorder %s145, %s146
    %p157 = scmp.eq.s32.totalorder %s17, 0
    %p158 = por %p156, %p157
    %p159 = scmp.ne.s32.totalorder %s145, %s146
    %p160 = scmp.eq.s32.totalorder %s18, 1
    %p161 = por %p159, %p160
    %p163 = scmp.ne.s32.totalorder %s146, %s162
    %p164 = scmp.eq.s32.totalorder %s18, 0
    %p165 = por %p163, %p164
    %p166 = scmp.le.s32.totalorder 1, %s12
    %p167 = scmp.lt.s32.totalorder %s12, 3
    %p168 = pnand %p166, %p167
    %p169 = pneg %p168
    // Predicated region
    $region9: #{conformer_forward.16} parent=5 // pred_check
      _
    $region10: #{conformer_forward.16} parent=5 // pred_check_branch
      %171 = sbr.rel (%p168) target = $region12
    $region11: #{conformer_forward.16} parent=5 // pred_region
      %s172 = ssub.s32 %s12, 1
      // Predicated region
      $region13: #{conformer_forward.16} parent=11 // pred_check
        %p173 = pneg %p59
      $region14: #{conformer_forward.16} parent=11 // pred_check_branch
        %175 = sbr.rel (%p173) target = $region16
      $region15: #{conformer_forward.16} parent=11 // pred_region
        _
      $region16: #{conformer_forward.16} parent=11 // pred_fallthru
        _
      // Predicated region
      $region17: #{conformer_forward.16} parent=11 // pred_check
        %p176 = pneg %p80
      $region18: #{conformer_forward.16} parent=11 // pred_check_branch
        %178 = sbr.rel (%p176) target = $region20
      $region19: #{conformer_forward.16} parent=11 // pred_region
        _
      $region20: #{conformer_forward.16} parent=11 // pred_fallthru
        _
    $region12: #{conformer_forward.16} parent=5 // pred_fallthru
      _
    %p179 = scmp.lt.s32.totalorder %s12, 2
    // Predicated region
    $region21: #{conformer_forward.16} parent=5 // pred_check
      %p180 = pneg %p179
    $region22: #{conformer_forward.16} parent=5 // pred_check_branch
      %182 = sbr.rel (%p180) target = $region24
    $region23: #{conformer_forward.16} parent=5 // pred_region
      // Predicated region
      $region25: #{conformer_forward.16} parent=23 // pred_check
        %p183 = pneg %p32
      $region26: #{conformer_forward.16} parent=23 // pred_check_branch
        %185 = sbr.rel (%p183) target = $region28
      $region27: #{conformer_forward.16} parent=23 // pred_region
        %p186 = scmp.lt.s32.totalorder %s12, 1
        %s187 = scalar_select %p186, %s12, 1
        %s188 = smul.addr %s187, 2
        %s189 = smul.addr %s188, 8
        %s190 = scalar_lea.vmem %s0, %s189
      $region28: #{conformer_forward.16} parent=23 // pred_fallthru
        _
    $region24: #{conformer_forward.16} parent=5 // pred_fallthru
      _
    %p191 = scmp.le.s32.totalorder 1, %s12
    %p192 = scmp.lt.s32.totalorder %s12, 3
    %p193 = pnand %p191, %p192
    %p194 = pneg %p193
    // Predicated region
    $region29: #{conformer_forward.16} parent=5 // pred_check
      _
    $region30: #{conformer_forward.16} parent=5 // pred_check_branch
      %196 = sbr.rel (%p193) target = $region32
    $region31: #{conformer_forward.16} parent=5 // pred_region
      %s197 = ssub.s32 %s12, 1
      %p198 = scmp.lt.s32.totalorder %s17, 1
      %s199 = scalar_select %p198, %s17, 1
      %s200 = smul.addr %s199, 2
      %s201 = smul.addr %s200, 8
      %s202 = scalar_lea.vmem %s0, %s201
      %p203 = pneg %p38
      %p204 = pneg %p35
      %p205 = pneg %p59
      %p206 = pneg %p56
      %p207 = pneg %p80
      %p208 = pneg %p77
      %p209 = pneg %p106
      %p210 = pneg %p103
      %p211 = scmp.lt.s32.totalorder %s17, 1
      %s212 = scalar_select %p211, %s17, 1
      %s213 = smul.addr %s212, 2
      %s214 = smul.addr %s213, 8
      %s215 = scalar_lea.vmem %s3, %s214
      %p216 = pneg %p132
      %p217 = pneg %p129
      %p218 = scmp.lt.s32.totalorder %s17, 1
      %s219 = scalar_select %p218, %s17, 1
      %s220 = scalar_lea.vmem %s4, %s219
      %p221 = pneg %p158
      %p222 = pneg %p155
      %p223 = scmp.lt.s32.totalorder %s17, 1
      %s224 = scalar_select %p223, %s17, 1
      %s225 = scalar_lea.vmem %s5, %s224
      %p226 = scmp.lt.s32.totalorder %s17, 1
      %s227 = scalar_select %p226, %s17, 1
      %s228 = smul.addr %s227, 2
      %s229 = smul.addr %s228, 8
      %s230 = scalar_lea.vmem %s0, %s229
      %p231 = scmp.lt.s32.totalorder %s17, 1
      %s232 = scalar_select %p231, %s17, 1
      %s233 = smul.addr %s232, 2
      %s234 = smul.addr %s233, 8
      %s235 = scalar_lea.vmem %s3, %s234
      %p236 = scmp.lt.s32.totalorder %s17, 1
      %s237 = scalar_select %p236, %s17, 1
      %s238 = scalar_lea.vmem %s4, %s237
      %p239 = scmp.lt.s32.totalorder %s17, 1
      %s240 = scalar_select %p239, %s17, 1
      %s241 = scalar_lea.vmem %s5, %s240
      %v242 = vld [vmem:[%s230] sm:$0xff]
      %v243 = vld [vmem:[%s230 + $0x8] sm:$0x3]
      %vm246 = vcmask 1042432
      %v247 = vrot.slane %v242, 5
      %v248 = vrot.slane %v243, 5
      %v249 = vsel %vm246, %v247, %v248
      %v252 = vsel %vm246, 0.0, %v247
      %vm253 = vcmask 1044480
      %v254 = vsel %vm253, %v249, 0.0
      %v255 = vld [vmem:[%s1] sm:$0x7f]
      %v256 = vperm.slane %v255, 0
      %v257 = vmul.f32 %v252, %v256
      %v258 = vmul.f32 %v254, %v256
      %v259 = vperm.slane %v255, 1
      %v260 = vmul.f32 %v252, %v259
      %v261 = vmul.f32 %v254, %v259
      %vm264 = vcmask 1046528
      %v265 = vrot.slane %v260, 1
      %v266 = vrot.slane %v261, 1
      %v267 = vsel %vm264, %v265, %v266
      %v270 = vadd.f32 %v257, %v267
      %v271 = vadd.f32 %v258, %v266
      %v272 = vperm.slane %v255, 2
      %v273 = vmul.f32 %v252, %v272
      %v274 = vmul.f32 %v254, %v272
      %vm277 = vcmask 1045504
      %v278 = vrot.slane %v273, 2
      %v279 = vrot.slane %v274, 2
      %v280 = vsel %vm277, %v278, %v279
      %v283 = vadd.f32 %v270, %v280
      %v284 = vadd.f32 %v271, %v279
      %v285 = vperm.slane %v255, 3
      %v286 = vmul.f32 %v252, %v285
      %v287 = vmul.f32 %v254, %v285
      %v290 = vrot.slane %v286, 3
      %v291 = vrot.slane %v287, 3
      %v292 = vsel %vm253, %v290, %v291
      %v295 = vadd.f32 %v283, %v292
      %v296 = vadd.f32 %v284, %v291
      %v297 = vperm.slane %v255, 4
      %v298 = vmul.f32 %v252, %v297
      %v299 = vmul.f32 %v254, %v297
      %vm302 = vcmask 1043456
      %v303 = vrot.slane %v298, 4
      %v304 = vrot.slane %v299, 4
      %v305 = vsel %vm302, %v303, %v304
      %v308 = vadd.f32 %v295, %v305
      %v309 = vadd.f32 %v296, %v304
      %v310 = vperm.slane %v255, 5
      %v311 = vmul.f32 %v252, %v310
      %v312 = vmul.f32 %v254, %v310
      %v315 = vrot.slane %v311, 5
      %v316 = vrot.slane %v312, 5
      %v317 = vsel %vm246, %v315, %v316
      %v320 = vadd.f32 %v308, %v317
      %v321 = vadd.f32 %v309, %v316
      %v322 = vperm.slane %v255, 6
      %v323 = vmul.f32 %v252, %v322
      %v324 = vmul.f32 %v254, %v322
      %vm327 = vcmask 1041408
      %v328 = vrot.slane %v323, 6
      %v329 = vrot.slane %v324, 6
      %v330 = vsel %vm327, %v328, %v329
      %v333 = vadd.f32 %v320, %v330
      %v334 = vadd.f32 %v321, %v329
      %v335 = vld [vmem:[%s2] sm:$0x1]
      %v337 = vperm.slane %v335, 0
      %v339 = vadd.f32 %v333, %v337
      %v340 = vadd.f32 %v334, %v337
      %vm341 = vcmask 523264
      %342 = vst.msk [vmem:[%s235] sm:$0xff] %vm341, %v339
      %vm343 = vcmask 517120
      %344 = vst.msk [vmem:[%s235 + $0x8] sm:$0x3] %vm343, %v340
      %v345 = vsel %vm341, %v339, 0.0
      %v346 = vsel %vm343, %v340, 0.0
      %v347 = vadd.f32 %v345, %v346
      %v348 = vrot.slane %v347, 4
      %v349 = vadd.f32 %v347, %v348
      %v350 = vrot.slane %v349, 2
      %v351 = vadd.f32 %v349, %v350
      %v352 = vrot.slane %v351, 1
      %v353 = vadd.f32 %v351, %v352
      %vm354 = vcmask 516096
      %355 = vst.msk [vmem:[%s238] sm:$0x1] %vm354, %v353
      %v356 = vmul.f32 %v339, %v339
      %v357 = vmul.f32 %v340, %v340
      %v358 = vsel %vm341, %v356, 0.0
      %v359 = vsel %vm343, %v357, 0.0
      %v360 = vadd.f32 %v358, %v359
      %v361 = vrot.slane %v360, 4
      %v362 = vadd.f32 %v360, %v361
      %v363 = vrot.slane %v362, 2
      %v364 = vadd.f32 %v362, %v363
      %v365 = vrot.slane %v364, 1
      %v366 = vadd.f32 %v364, %v365
      %367 = vst.msk [vmem:[%s241] sm:$0x1] %vm354, %v366
      %p368 = scmp.lt.s32.totalorder %s17, 1
      %s369 = scalar_select %p368, %s17, 1
      %s370 = smul.addr %s369, 2
      %s371 = smul.addr %s370, 8
      %s372 = scalar_lea.vmem %s3, %s371
      %p373 = scmp.lt.s32.totalorder %s17, 1
      %s374 = scalar_select %p373, %s17, 1
      %s375 = scalar_lea.vmem %s4, %s374
      %p376 = scmp.lt.s32.totalorder %s17, 1
      %s377 = scalar_select %p376, %s17, 1
      %s378 = scalar_lea.vmem %s5, %s377
      // Predicated region
      $region33: #{conformer_forward.16} parent=31 // pred_check
        %p379 = pneg %p103
      $region34: #{conformer_forward.16} parent=31 // pred_check_branch
        %381 = sbr.rel (%p379) target = $region36
      $region35: #{conformer_forward.16} parent=31 // pred_region
        _
      $region36: #{conformer_forward.16} parent=31 // pred_fallthru
        _
      // Predicated region
      $region37: #{conformer_forward.16} parent=31 // pred_check
        %p382 = pneg %p129
      $region38: #{conformer_forward.16} parent=31 // pred_check_branch
        %384 = sbr.rel (%p382) target = $region40
      $region39: #{conformer_forward.16} parent=31 // pred_region
        _
      $region40: #{conformer_forward.16} parent=31 // pred_fallthru
        _
      // Predicated region
      $region41: #{conformer_forward.16} parent=31 // pred_check
        %p385 = pneg %p155
      $region42: #{conformer_forward.16} parent=31 // pred_check_branch
        %387 = sbr.rel (%p385) target = $region44
      $region43: #{conformer_forward.16} parent=31 // pred_region
        _
      $region44: #{conformer_forward.16} parent=31 // pred_fallthru
        _
    $region32: #{conformer_forward.16} parent=5 // pred_fallthru
      _
    %p388 = scmp.le.s32.totalorder 2, %s12
    // Predicated region
    $region45: #{conformer_forward.16} parent=5 // pred_check
      %p389 = pneg %p388
    $region46: #{conformer_forward.16} parent=5 // pred_check_branch
      %391 = sbr.rel (%p389) target = $region48
    $region47: #{conformer_forward.16} parent=5 // pred_region
      %s392 = ssub.s32 %s12, 2
      // Predicated region
      $region49: #{conformer_forward.16} parent=47 // pred_check
        %p393 = pneg %p109
      $region50: #{conformer_forward.16} parent=47 // pred_check_branch
        %395 = sbr.rel (%p393) target = $region52
      $region51: #{conformer_forward.16} parent=47 // pred_region
        %p396 = scmp.lt.s32.totalorder %s18, 1
        %s397 = scalar_select %p396, %s18, 1
        %s398 = smul.addr %s397, 2
        %s399 = smul.addr %s398, 8
        %s400 = scalar_lea.vmem %s3, %s399
      $region52: #{conformer_forward.16} parent=47 // pred_fallthru
        _
      // Predicated region
      $region53: #{conformer_forward.16} parent=47 // pred_check
        %p401 = pneg %p135
      $region54: #{conformer_forward.16} parent=47 // pred_check_branch
        %403 = sbr.rel (%p401) target = $region56
      $region55: #{conformer_forward.16} parent=47 // pred_region
        %p404 = scmp.lt.s32.totalorder %s18, 1
        %s405 = scalar_select %p404, %s18, 1
        %s406 = scalar_lea.vmem %s4, %s405
      $region56: #{conformer_forward.16} parent=47 // pred_fallthru
        _
      // Predicated region
      $region57: #{conformer_forward.16} parent=47 // pred_check
        %p407 = pneg %p161
      $region58: #{conformer_forward.16} parent=47 // pred_check_branch
        %409 = sbr.rel (%p407) target = $region60
      $region59: #{conformer_forward.16} parent=47 // pred_region
        %p410 = scmp.lt.s32.totalorder %s18, 1
        %s411 = scalar_select %p410, %s18, 1
        %s412 = scalar_lea.vmem %s5, %s411
      $region60: #{conformer_forward.16} parent=47 // pred_fallthru
        _
    $region48: #{conformer_forward.16} parent=5 // pred_fallthru
      _
  $region6: #{conformer_forward.16} parent=0 // loop_footer
    %s16 = sadd.s32 1, %s12
  $region7: #{conformer_forward.16} parent=0 // loop_footer_branch
    %11 = sbr.rel target = $region3
  $region8: #{conformer_forward.16} parent=0 // loop_exit
    _

// kernel: conformer_forward.17
$region0: #{conformer_forward.17}
  #allocation0 [shape = 'u32[]', space=smem, size = 0x4, offset = 0x4, fixed_abs, tag = 'smem constant byte address 0x4 - core index']
  #allocation1 [shape = 'u32[72,128]{1,0:T(1,128)}', space=vmem, size = 0x9000, scoped, tag = 'internal scratch']
  %s0 = inlined_call_operand.vmem [shape: f32[20,64], index: 0, kind: input, shape index: {}]
  %s1 = inlined_call_operand.vmem [shape: f32[1,64], index: 1, kind: input, shape index: {}]
  %s2 = inlined_call_operand.vmem [shape: f32[1,64], index: 2, kind: input, shape index: {}]
  %s3 = inlined_call_operand.vmem [shape: f32[1,64], index: 3, kind: input, shape index: {}]
  %s4 = inlined_call_operand.vmem [shape: f32[1,64], index: 4, kind: input, shape index: {}]
  %s5 = inlined_call_operand.vmem [shape: bf16[64,32], index: 5, kind: input, shape index: {}]
  %s6 = inlined_call_operand.vmem [shape: f32[1,32], index: 6, kind: input, shape index: {}]
  %s7 = inlined_call_operand.vmem [shape: f32[20,32], index: 7, kind: input, shape index: {}]
  %s8 = inlined_call_operand.vmem [shape: f32[20,32], index: 8, kind: output, shape index: {}]
  %s9 = sld [smem:[#allocation0]]
  $region42: #{conformer_forward.17} parent=0
    _
  %s11 = ssub.s32 1, %s9
  %s12 = scalar_select 0, %s11, %s9
  // Predicated region
  $region2: #{conformer_forward.17} parent=0 // pred_check
    _
  $region3: #{conformer_forward.17} parent=0 // pred_check_branch
    %14 = sbr.rel (0) target = $region5
  $region4: #{conformer_forward.17} parent=0 // pred_region
    _
  $region5: #{conformer_forward.17} parent=0 // pred_fallthru
    _
  // Predicated region
  $region6: #{conformer_forward.17} parent=0 // pred_check
    _
  $region7: #{conformer_forward.17} parent=0 // pred_check_branch
    %16 = sbr.rel (0) target = $region9
  $region8: #{conformer_forward.17} parent=0 // pred_region
    _
  $region9: #{conformer_forward.17} parent=0 // pred_fallthru
    _
  // Predicated region
  $region10: #{conformer_forward.17} parent=0 // pred_check
    _
  $region11: #{conformer_forward.17} parent=0 // pred_check_branch
    %18 = sbr.rel (0) target = $region13
  $region12: #{conformer_forward.17} parent=0 // pred_region
    _
  $region13: #{conformer_forward.17} parent=0 // pred_fallthru
    _
  // Predicated region
  $region14: #{conformer_forward.17} parent=0 // pred_check
    _
  $region15: #{conformer_forward.17} parent=0 // pred_check_branch
    %20 = sbr.rel (0) target = $region17
  $region16: #{conformer_forward.17} parent=0 // pred_region
    _
  $region17: #{conformer_forward.17} parent=0 // pred_fallthru
    _
  // Predicated region
  $region18: #{conformer_forward.17} parent=0 // pred_check
    _
  $region19: #{conformer_forward.17} parent=0 // pred_check_branch
    %22 = sbr.rel (0) target = $region21
  $region20: #{conformer_forward.17} parent=0 // pred_region
    _
  $region21: #{conformer_forward.17} parent=0 // pred_fallthru
    _
  // Predicated region
  $region22: #{conformer_forward.17} parent=0 // pred_check
    _
  $region23: #{conformer_forward.17} parent=0 // pred_check_branch
    %24 = sbr.rel (0) target = $region25
  $region24: #{conformer_forward.17} parent=0 // pred_region
    _
  $region25: #{conformer_forward.17} parent=0 // pred_fallthru
    _
  // Predicated region
  $region26: #{conformer_forward.17} parent=0 // pred_check
    _
  $region27: #{conformer_forward.17} parent=0 // pred_check_branch
    %26 = sbr.rel (0) target = $region29
  $region28: #{conformer_forward.17} parent=0 // pred_region
    _
  $region29: #{conformer_forward.17} parent=0 // pred_fallthru
    _
  // Predicated region
  $region30: #{conformer_forward.17} parent=0 // pred_check
    _
  $region31: #{conformer_forward.17} parent=0 // pred_check_branch
    %28 = sbr.rel (0) target = $region33
  $region32: #{conformer_forward.17} parent=0 // pred_region
    _
  $region33: #{conformer_forward.17} parent=0 // pred_fallthru
    _
  %v30 = vld [vmem:[%s0] sm:$0xff]
  %v31 = vld [vmem:[%s0 + $0x8] sm:$0xff]
  %v32 = vld [vmem:[%s0 + $0x10] sm:$0xf]
  %v33 = vld [vmem:[%s1] sm:$0x1]
  %v35 = vperm.slane %v33, 0
  %v37 = vsub.f32 %v30, %v35
  %v38 = vsub.f32 %v31, %v35
  %v39 = vsub.f32 %v32, %v35
  %v40 = vld [vmem:[%s2] sm:$0x1]
  %v41 = vadd.f32 %v40, 1e-05
  %v42 = vrsqrt.pop %v41
  %v43 = vmul.f32 %v42, %v41
  %v44 = vmul.f32 %v43, %v42
  %v45 = vmul.f32 0.5, %v44
  %v46 = vsub.f32 1.5, %v45
  %v47 = vmul.f32 %v42, %v46
  %vm48 = vweird.f32 %v41
  %vm49 = vweird.f32 %v42
  %vm50 = vmor %vm48, %vm49
  %v51 = vsel %vm50, %v42, %v47
  %v53 = vperm.slane %v51, 0
  %v55 = vmul.f32 %v37, %v53
  %v56 = vmul.f32 %v38, %v53
  %v57 = vmul.f32 %v39, %v53
  %v58 = vld [vmem:[%s3] sm:$0x1]
  %v60 = vperm.slane %v58, 0
  %v62 = vmul.f32 %v55, %v60
  %v63 = vmul.f32 %v56, %v60
  %v64 = vmul.f32 %v57, %v60
  %v65 = vld [vmem:[%s4] sm:$0x1]
  %v67 = vperm.slane %v65, 0
  %v69 = vadd.f32 %v62, %v67
  %v70 = vadd.f32 %v63, %v67
  %v71 = vadd.f32 %v64, %v67
  %v72 = vxor.u32 %v69, 2147483648
  %v73 = vxor.u32 %v70, 2147483648
  %v74 = vxor.u32 %v71, 2147483648
  %v75 = vmul.f32 %v72, 1.442695
  %v76 = vpow.pop %v75
  %v77 = vmul.f32 %v73, 1.442695
  %v78 = vpow.pop %v77
  %v79 = vmul.f32 %v74, 1.442695
  %v80 = vpow.pop %v79
  %v81 = vadd.f32 %v76, 1.0
  %v82 = vadd.f32 %v78, 1.0
  %v83 = vadd.f32 %v80, 1.0
  %v84 = vrcp.pop %v81
  %v85 = vmul.f32 %v81, %v84
  %v86 = vsub.f32 1.0, %v85
  %v87 = vmul.f32 %v84, %v86
  %v88 = vadd.f32 %v84, %v87
  %vm89 = vweird.f32 %v81
  %vm90 = vweird.f32 %v84
  %vm91 = vmor %vm89, %vm90
  %v92 = vsel %vm91, %v84, %v88
  %v93 = vand.u32 2147483647, %v81
  %vm94 = vcmp.eq.f32.partialorder %v93, 8.507059e+37
  %v95 = vand.u32 %v81, 2147483648
  %v96 = vor.u32 1.1754944e-38, %v95
  %v97 = vsel %vm94, %v96, %v92
  %v98 = vmul.f32 1.0, %v97
  %v99 = vrcp.pop %v82
  %v100 = vmul.f32 %v82, %v99
  %v101 = vsub.f32 1.0, %v100
  %v102 = vmul.f32 %v99, %v101
  %v103 = vadd.f32 %v99, %v102
  %vm104 = vweird.f32 %v82
  %vm105 = vweird.f32 %v99
  %vm106 = vmor %vm104, %vm105
  %v107 = vsel %vm106, %v99, %v103
  %v108 = vand.u32 2147483647, %v82
  %vm109 = vcmp.eq.f32.partialorder %v108, 8.507059e+37
  %v110 = vand.u32 %v82, 2147483648
  %v111 = vor.u32 1.1754944e-38, %v110
  %v112 = vsel %vm109, %v111, %v107
  %v113 = vmul.f32 1.0, %v112
  %v114 = vrcp.pop %v83
  %v115 = vmul.f32 %v83, %v114
  %v116 = vsub.f32 1.0, %v115
  %v117 = vmul.f32 %v114, %v116
  %v118 = vadd.f32 %v114, %v117
  %vm119 = vweird.f32 %v83
  %vm120 = vweird.f32 %v114
  %vm121 = vmor %vm119, %vm120
  %v122 = vsel %vm121, %v114, %v118
  %v123 = vand.u32 2147483647, %v83
  %vm124 = vcmp.eq.f32.partialorder %v123, 8.507059e+37
  %v125 = vand.u32 %v83, 2147483648
  %v126 = vor.u32 1.1754944e-38, %v125
  %v127 = vsel %vm124, %v126, %v122
  %v128 = vmul.f32 1.0, %v127
  %v129 = vmul.f32 %v69, %v98
  %v130 = vmul.f32 %v70, %v113
  %v131 = vmul.f32 %v71, %v128
  %v132 = vpack.c.bf16 %v130, %v129
  %v133 = vpack.c.bf16 %v131, %v131
  %v134 = vld [vmem:[%s5] sm:$0xf]
  %v135 = vld [vmem:[%s5 + $0x4] sm:$0xf]
  %v136 = vld [vmem:[%s5 + $0x8] sm:$0xf]
  %v137 = vld [vmem:[%s5 + $0xc] sm:$0xf]
  %v138 = vld [vmem:[%s5 + $0x10] sm:$0xf]
  %v139 = vld [vmem:[%s5 + $0x14] sm:$0xf]
  %v140 = vld [vmem:[%s5 + $0x18] sm:$0xf]
  %v141 = vld [vmem:[%s5 + $0x1c] sm:$0xf]
  %v142 = vld [vmem:[%s6] sm:$0x1]
  %v144 = vperm.slane %v142, 0
  %v154 = vunpack.c.l.b16 %v134
  %v155 = vunpack.c.l.b16 %v135
  %v156 = vunpack.c.l.b16 %v136
  %v157 = vunpack.c.l.b16 %v137
  %v158 = vunpack.c.l.b16 %v138
  %v159 = vunpack.c.l.b16 %v139
  %v160 = vunpack.c.l.b16 %v140
  %v161 = vunpack.c.l.b16 %v141
  %v162 = vpack.c.b16 %v155, %v154
  %v163 = vpack.c.b16 %v157, %v156
  %v164 = vpack.c.b16 %v159, %v158
  %v165 = vpack.c.b16 %v161, %v160
  %vm170 = vcmask 523264
  %v172 = vsel %vm170, %v132, 0
  %v175 = vsel %vm170, %v133, 0
  %177 = vmatpush.bf16.msra.mxu0 0
  %178 = vmatpush.bf16.msra.mxu0 0
  %179 = vmatpush.bf16.msra.mxu0 0
  %180 = vmatpush.bf16.msra.mxu0 0
  %181 = vmatpush.bf16.msra.mxu0 %v165
  %182 = vmatpush.bf16.msra.mxu0 %v164
  %183 = vmatpush.bf16.msra.mxu0 %v163
  %184 = vmatpush.bf16.msra.mxu0 %v162
  %185 = vmatmul.bf16.gmra.mxu0 %v172
  %v186 = vpop.f32.mrf.mxu0
  %v187 = vadd.f32 %v144, %v186
  %v188 = vpop.f32.mrf.mxu0
  %v189 = vadd.f32 %v144, %v188
  %190 = vmatmul.bf16.gmra.mxu0 %v175
  %v191 = vpop.f32.mrf.mxu0
  %v192 = vadd.f32 %v144, %v191
  %v193 = vpop.f32.mrf.mxu0
  %194 = vdwg.mxu0
  %v195 = vld [vmem:[%s7] sm:$0xff]
  %v196 = vld [vmem:[%s7 + $0x8] sm:$0xff]
  %v197 = vld [vmem:[%s7 + $0x10] sm:$0xf]
  %v198 = vadd.f32 %v187, %v195
  %v199 = vadd.f32 %v189, %v196
  %v200 = vadd.f32 %v192, %v197
  %vm201 = vcmask 261120
  %202 = vst.msk [vmem:[%s8] sm:$0xff] %vm201, %v198
  %203 = vst.msk [vmem:[%s8 + $0x8] sm:$0xff] %vm201, %v199
  %vm204 = vcmask 257024
  %205 = vst.msk [vmem:[%s8 + $0x10] sm:$0xf] %vm204, %v200
  // Predicated region
  $region34: #{conformer_forward.17} parent=0 // pred_check
    _
  $region35: #{conformer_forward.17} parent=0 // pred_check_branch
    %207 = sbr.rel (0) target = $region37
  $region36: #{conformer_forward.17} parent=0 // pred_region
    _
  $region37: #{conformer_forward.17} parent=0 // pred_fallthru
    _
  // Predicated region
  $region38: #{conformer_forward.17} parent=0 // pred_check
    _
  $region39: #{conformer_forward.17} parent=0 // pred_check_branch
    %209 = sbr.rel (0) target = $region41
  $region40: #{conformer_forward.17} parent=0 // pred_region
    _
  $region41: #{conformer_forward.17} parent=0 // pred_fallthru
    _

// kernel: conformer_forward.14
$region0: #{conformer_forward.14}
  #allocation0 [shape = 'u32[]', space=smem, size = 0x4, offset = 0x4, fixed_abs, tag = 'smem constant byte address 0x4 - core index']
  #allocation1 [shape = 'u32[72,128]{1,0:T(1,128)}', space=vmem, size = 0x9000, scoped, tag = 'internal scratch']
  %s0 = inlined_call_operand.vmem [shape: f32[2,14,32], index: 0, kind: input, shape index: {}]
  %s1 = inlined_call_operand.vmem [shape: bf16[32,96], index: 1, kind: input, shape index: {}]
  %s2 = inlined_call_operand.vmem [shape: bf16[32,32], index: 2, kind: input, shape index: {}]
  %s3 = inlined_call_operand.vmem [shape: f32[1,32], index: 3, kind: input, shape index: {}]
  %s4 = inlined_call_operand.vmem [shape: f32[2,10,32], index: 4, kind: input, shape index: {}]
  %s5 = inlined_call_operand.vmem [shape: f32[2,10,32], index: 5, kind: output, shape index: {0}]
  %s6 = inlined_call_operand.vmem [shape: f32[2,4,14,14], index: 6, kind: output, shape index: {1}]
  %7 = xla_tuple %s5, %s6
  %s8 = sld [smem:[#allocation0]]
  $region61: #{conformer_forward.14} parent=0
    _
  %s10 = ssub.s32 1, %s8
  %s11 = scalar_select 0, %s10, %s8
  loop: start=0, step=1, limit=4
  $region2: #{conformer_forward.14} parent=0 // loop_pre_header
    _
  $region3: #{conformer_forward.14} parent=0 // loop_header
    %s13 = sphi 0, %s17
    %p14 = scmp.ge.s32.totalorder %s13, 4
    %s23 = sphi 0, %s25
    %s26 = sphi 0, %s23
    %s27 = sphi 0, %s26
    %s43 = sphi 0, %s27
    %s47 = sphi 0, %s47
    %s49 = sphi 0, %s47
    %s50 = sphi 0, %s49
    %s64 = sphi 0, %s50
    %s68 = sphi 0, %s68
    %s70 = sphi 0, %s68
    %s71 = sphi 0, %s70
    %s85 = sphi 0, %s71
    %s89 = sphi 0, %s89
    %s91 = sphi 0, %s89
    %s92 = sphi 0, %s91
    %s106 = sphi 0, %s92
    %s112 = sphi 0, %s114
    %s115 = sphi 0, %s112
    %s116 = sphi 0, %s115
    %s132 = sphi 0, %s116
    %s138 = sphi 0, %s140
    %s141 = sphi 0, %s138
    %s142 = sphi 0, %s141
    %s158 = sphi 0, %s142
    %s164 = sphi 0, %s166
    %s167 = sphi 0, %s164
    %s168 = sphi 0, %s167
    %s184 = sphi 0, %s168
  $region4: #{conformer_forward.14} parent=0 // loop_header_branch
    %16 = sbr.rel (%p14) target = $region8
  $region5: #{conformer_forward.14} parent=0 // loop_body
    %s18 = ssub.s32 %s13, 1
    %s19 = ssub.s32 %s13, 2
    %s20 = sadd.s32 %s13, 1
    %s21 = ssub.s32 %s13, %s20
    %p22 = scmp.eq.s32.totalorder %s21, 0
    %s24 = sadd.s32 %s23, 1
    %s25 = scalar_select %p22, %s23, %s24
    %p28 = pneg %p22
    %p29 = scmp.eq.s32.totalorder %s13, 1
    %p30 = por %p28, %p29
    %p31 = scmp.ne.s32.totalorder %s23, %s26
    %p32 = scmp.eq.s32.totalorder %s13, 0
    %p33 = por %p31, %p32
    %p34 = scmp.ne.s32.totalorder %s23, %s26
    %p35 = scmp.eq.s32.totalorder %s18, 1
    %p36 = por %p34, %p35
    %p37 = scmp.ne.s32.totalorder %s26, %s27
    %p38 = scmp.eq.s32.totalorder %s18, 0
    %p39 = por %p37, %p38
    %p40 = scmp.ne.s32.totalorder %s26, %s27
    %p41 = scmp.eq.s32.totalorder %s19, 1
    %p42 = por %p40, %p41
    %p44 = scmp.ne.s32.totalorder %s27, %s43
    %p45 = scmp.eq.s32.totalorder %s19, 0
    %p46 = por %p44, %p45
    %s48 = sadd.s32 %s47, 1
    %p51 = scmp.eq.s32.totalorder %s13, 1
    %p52 = scmp.ne.s32.totalorder %s47, %s49
    %p53 = scmp.eq.s32.totalorder %s13, 0
    %p54 = por %p52, %p53
    %p55 = scmp.ne.s32.totalorder %s47, %s49
    %p56 = scmp.eq.s32.totalorder %s18, 1
    %p57 = por %p55, %p56
    %p58 = scmp.ne.s32.totalorder %s49, %s50
    %p59 = scmp.eq.s32.totalorder %s18, 0
    %p60 = por %p58, %p59
    %p61 = scmp.ne.s32.totalorder %s49, %s50
    %p62 = scmp.eq.s32.totalorder %s19, 1
    %p63 = por %p61, %p62
    %p65 = scmp.ne.s32.totalorder %s50, %s64
    %p66 = scmp.eq.s32.totalorder %s19, 0
    %p67 = por %p65, %p66
    %s69 = sadd.s32 %s68, 1
    %p72 = scmp.eq.s32.totalorder %s13, 1
    %p73 = scmp.ne.s32.totalorder %s68, %s70
    %p74 = scmp.eq.s32.totalorder %s13, 0
    %p75 = por %p73, %p74
    %p76 = scmp.ne.s32.totalorder %s68, %s70
    %p77 = scmp.eq.s32.totalorder %s18, 1
    %p78 = por %p76, %p77
    %p79 = scmp.ne.s32.totalorder %s70, %s71
    %p80 = scmp.eq.s32.totalorder %s18, 0
    %p81 = por %p79, %p80
    %p82 = scmp.ne.s32.totalorder %s70, %s71
    %p83 = scmp.eq.s32.totalorder %s19, 1
    %p84 = por %p82, %p83
    %p86 = scmp.ne.s32.totalorder %s71, %s85
    %p87 = scmp.eq.s32.totalorder %s19, 0
    %p88 = por %p86, %p87
    %s90 = sadd.s32 %s89, 1
    %p93 = scmp.eq.s32.totalorder %s13, 1
    %p94 = scmp.ne.s32.totalorder %s89, %s91
    %p95 = scmp.eq.s32.totalorder %s13, 0
    %p96 = por %p94, %p95
    %p97 = scmp.ne.s32.totalorder %s89, %s91
    %p98 = scmp.eq.s32.totalorder %s18, 1
    %p99 = por %p97, %p98
    %p100 = scmp.ne.s32.totalorder %s91, %s92
    %p101 = scmp.eq.s32.totalorder %s18, 0
    %p102 = por %p100, %p101
    %p103 = scmp.ne.s32.totalorder %s91, %s92
    %p104 = scmp.eq.s32.totalorder %s19, 1
    %p105 = por %p103, %p104
    %p107 = scmp.ne.s32.totalorder %s92, %s106
    %p108 = scmp.eq.s32.totalorder %s19, 0
    %p109 = por %p107, %p108
    %s110 = ssub.s32 %s13, %s20
    %p111 = scmp.eq.s32.totalorder %s110, 0
    %s113 = sadd.s32 %s112, 1
    %s114 = scalar_select %p111, %s112, %s113
    %p117 = pneg %p111
    %p118 = scmp.eq.s32.totalorder %s13, 1
    %p119 = por %p117, %p118
    %p120 = scmp.ne.s32.totalorder %s112, %s115
    %p121 = scmp.eq.s32.totalorder %s13, 0
    %p122 = por %p120, %p121
    %p123 = scmp.ne.s32.totalorder %s112, %s115
    %p124 = scmp.eq.s32.totalorder %s18, 1
    %p125 = por %p123, %p124
    %p126 = scmp.ne.s32.totalorder %s115, %s116
    %p127 = scmp.eq.s32.totalorder %s18, 0
    %p128 = por %p126, %p127
    %p129 = scmp.ne.s32.totalorder %s115, %s116
    %p130 = scmp.eq.s32.totalorder %s19, 1
    %p131 = por %p129, %p130
    %p133 = scmp.ne.s32.totalorder %s116, %s132
    %p134 = scmp.eq.s32.totalorder %s19, 0
    %p135 = por %p133, %p134
    %s136 = ssub.s32 %s13, %s20
    %p137 = scmp.eq.s32.totalorder %s136, 0
    %s139 = sadd.s32 %s138, 1
    %s140 = scalar_select %p137, %s138, %s139
    %p143 = pneg %p137
    %p144 = scmp.eq.s32.totalorder %s13, 1
    %p145 = por %p143, %p144
    %p146 = scmp.ne.s32.totalorder %s138, %s141
    %p147 = scmp.eq.s32.totalorder %s13, 0
    %p148 = por %p146, %p147
    %p149 = scmp.ne.s32.totalorder %s138, %s141
    %p150 = scmp.eq.s32.totalorder %s18, 1
    %p151 = por %p149, %p150
    %p152 = scmp.ne.s32.totalorder %s141, %s142
    %p153 = scmp.eq.s32.totalorder %s18, 0
    %p154 = por %p152, %p153
    %p155 = scmp.ne.s32.totalorder %s141, %s142
    %p156 = scmp.eq.s32.totalorder %s19, 1
    %p157 = por %p155, %p156
    %p159 = scmp.ne.s32.totalorder %s142, %s158
    %p160 = scmp.eq.s32.totalorder %s19, 0
    %p161 = por %p159, %p160
    %s162 = ssub.s32 %s13, %s20
    %p163 = scmp.eq.s32.totalorder %s162, 0
    %s165 = sadd.s32 %s164, 1
    %s166 = scalar_select %p163, %s164, %s165
    %p169 = pneg %p163
    %p170 = scmp.eq.s32.totalorder %s13, 1
    %p171 = por %p169, %p170
    %p172 = scmp.ne.s32.totalorder %s164, %s167
    %p173 = scmp.eq.s32.totalorder %s13, 0
    %p174 = por %p172, %p173
    %p175 = scmp.ne.s32.totalorder %s164, %s167
    %p176 = scmp.eq.s32.totalorder %s18, 1
    %p177 = por %p175, %p176
    %p178 = scmp.ne.s32.totalorder %s167, %s168
    %p179 = scmp.eq.s32.totalorder %s18, 0
    %p180 = por %p178, %p179
    %p181 = scmp.ne.s32.totalorder %s167, %s168
    %p182 = scmp.eq.s32.totalorder %s19, 1
    %p183 = por %p181, %p182
    %p185 = scmp.ne.s32.totalorder %s168, %s184
    %p186 = scmp.eq.s32.totalorder %s19, 0
    %p187 = por %p185, %p186
    %p188 = scmp.le.s32.totalorder 1, %s13
    %p189 = scmp.lt.s32.totalorder %s13, 3
    %p190 = pnand %p188, %p189
    %p191 = pneg %p190
    // Predicated region
    $region9: #{conformer_forward.14} parent=5 // pred_check
      _
    $region10: #{conformer_forward.14} parent=5 // pred_check_branch
      %193 = sbr.rel (%p190) target = $region12
    $region11: #{conformer_forward.14} parent=5 // pred_region
      %s194 = ssub.s32 %s13, 1
      // Predicated region
      $region13: #{conformer_forward.14} parent=11 // pred_check
        %p195 = pneg %p60
      $region14: #{conformer_forward.14} parent=11 // pred_check_branch
        %197 = sbr.rel (%p195) target = $region16
      $region15: #{conformer_forward.14} parent=11 // pred_region
        _
      $region16: #{conformer_forward.14} parent=11 // pred_fallthru
        _
      // Predicated region
      $region17: #{conformer_forward.14} parent=11 // pred_check
        %p198 = pneg %p81
      $region18: #{conformer_forward.14} parent=11 // pred_check_branch
        %200 = sbr.rel (%p198) target = $region20
      $region19: #{conformer_forward.14} parent=11 // pred_region
        _
      $region20: #{conformer_forward.14} parent=11 // pred_fallthru
        _
      // Predicated region
      $region21: #{conformer_forward.14} parent=11 // pred_check
        %p201 = pneg %p102
      $region22: #{conformer_forward.14} parent=11 // pred_check_branch
        %203 = sbr.rel (%p201) target = $region24
      $region23: #{conformer_forward.14} parent=11 // pred_region
        _
      $region24: #{conformer_forward.14} parent=11 // pred_fallthru
        _
    $region12: #{conformer_forward.14} parent=5 // pred_fallthru
      _
    %p204 = scmp.lt.s32.totalorder %s13, 2
    // Predicated region
    $region25: #{conformer_forward.14} parent=5 // pred_check
      %p205 = pneg %p204
    $region26: #{conformer_forward.14} parent=5 // pred_check_branch
      %207 = sbr.rel (%p205) target = $region28
    $region27: #{conformer_forward.14} parent=5 // pred_region
      // Predicated region
      $region29: #{conformer_forward.14} parent=27 // pred_check
        %p208 = pneg %p33
      $region30: #{conformer_forward.14} parent=27 // pred_check_branch
        %210 = sbr.rel (%p208) target = $region32
      $region31: #{conformer_forward.14} parent=27 // pred_region
        %p211 = scmp.lt.s32.totalorder %s13, 1
        %s212 = scalar_select %p211, %s13, 1
        %s213 = smul.addr %s212, 2
        %s214 = smul.addr %s213, 8
        %s215 = scalar_lea.vmem %s0, %s214
      $region32: #{conformer_forward.14} parent=27 // pred_fallthru
        _
      // Predicated region
      $region33: #{conformer_forward.14} parent=27 // pred_check
        %p216 = pneg %p122
      $region34: #{conformer_forward.14} parent=27 // pred_check_branch
        %218 = sbr.rel (%p216) target = $region36
      $region35: #{conformer_forward.14} parent=27 // pred_region
        %p219 = scmp.lt.s32.totalorder %s13, 1
        %s220 = scalar_select %p219, %s13, 1
        %s221 = smul.addr %s220, 2
        %s222 = smul.addr %s221, 8
        %s223 = scalar_lea.vmem %s4, %s222
      $region36: #{conformer_forward.14} parent=27 // pred_fallthru
        _
    $region28: #{conformer_forward.14} parent=5 // pred_fallthru
      _
    %p224 = scmp.le.s32.totalorder 1, %s13
    %p225 = scmp.lt.s32.totalorder %s13, 3
    %p226 = pnand %p224, %p225
    %p227 = pneg %p226
    // Predicated region
    $region37: #{conformer_forward.14} parent=5 // pred_check
      _
    $region38: #{conformer_forward.14} parent=5 // pred_check_branch
      %229 = sbr.rel (%p226) target = $region40
    $region39: #{conformer_forward.14} parent=5 // pred_region
      %s230 = ssub.s32 %s13, 1
      %p231 = scmp.lt.s32.totalorder %s18, 1
      %s232 = scalar_select %p231, %s18, 1
      %s233 = smul.addr %s232, 2
      %s234 = smul.addr %s233, 8
      %s235 = scalar_lea.vmem %s0, %s234
      %p236 = pneg %p39
      %p237 = pneg %p36
      %p238 = pneg %p60
      %p239 = pneg %p57
      %p240 = pneg %p81
      %p241 = pneg %p78
      %p242 = pneg %p102
      %p243 = pneg %p99
      %p244 = scmp.lt.s32.totalorder %s18, 1
      %s245 = scalar_select %p244, %s18, 1
      %s246 = smul.addr %s245, 2
      %s247 = smul.addr %s246, 8
      %s248 = scalar_lea.vmem %s4, %s247
      %p249 = pneg %p128
      %p250 = pneg %p125
      %p251 = pneg %p154
      %p252 = pneg %p151
      %p253 = scmp.lt.s32.totalorder %s18, 1
      %s254 = scalar_select %p253, %s18, 1
      %s255 = smul.addr %s254, 2
      %s256 = smul.addr %s255, 8
      %s257 = scalar_lea.vmem %s5, %s256
      %p258 = pneg %p180
      %p259 = pneg %p177
      %p260 = scmp.lt.s32.totalorder %s18, 1
      %s261 = scalar_select %p260, %s18, 1
      %s262 = smul.addr %s261, 8
      %s263 = smul.addr %s262, 8
      %s264 = scalar_lea.vmem %s6, %s263
      %p265 = scmp.lt.s32.totalorder %s18, 1
      %s266 = scalar_select %p265, %s18, 1
      %s267 = smul.addr %s266, 2
      %s268 = smul.addr %s267, 8
      %s269 = scalar_lea.vmem %s0, %s268
      %p270 = scmp.lt.s32.totalorder %s18, 1
      %s271 = scalar_select %p270, %s18, 1
      %s272 = smul.addr %s271, 2
      %s273 = smul.addr %s272, 8
      %s274 = scalar_lea.vmem %s4, %s273
      %p275 = scmp.lt.s32.totalorder %s18, 1
      %s276 = scalar_select %p275, %s18, 1
      %s277 = smul.addr %s276, 2
      %s278 = smul.addr %s277, 8
      %s279 = scalar_lea.vmem %s5, %s278
      %p280 = scmp.lt.s32.totalorder %s18, 1
      %s281 = scalar_select %p280, %s18, 1
      %s282 = smul.addr %s281, 8
      %s283 = smul.addr %s282, 8
      %s284 = scalar_lea.vmem %s6, %s283
      %v286 = vld [vmem:[%s269] sm:$0xff]
      %v287 = vld [vmem:[%s269 + $0x8] sm:$0x3f]
      %v288 = vpack.c.bf16 %v287, %v286
      %v289 = vld [vmem:[%s1] sm:$0xf]
      %v290 = vld [vmem:[%s1 + $0x4] sm:$0xf]
      %v291 = vld [vmem:[%s1 + $0x8] sm:$0xf]
      %v292 = vld [vmem:[%s1 + $0xc] sm:$0xf]
      %v297 = vunpack.c.l.b16 %v289
      %v298 = vunpack.c.l.b16 %v290
      %v299 = vunpack.c.l.b16 %v291
      %v300 = vunpack.c.l.b16 %v292
      %v301 = vpack.c.b16 %v298, %v297
      %v302 = vpack.c.b16 %v300, %v299
      %vm305 = vcmask 261120
      %v307 = vsel %vm305, %v288, 0
      %309 = vmatpush.bf16.msra.mxu0 0
      %310 = vmatpush.bf16.msra.mxu0 0
      %311 = vmatpush.bf16.msra.mxu0 0
      %312 = vmatpush.bf16.msra.mxu0 0
      %313 = vmatpush.bf16.msra.mxu0 0
      %314 = vmatpush.bf16.msra.mxu0 0
      %315 = vmatpush.bf16.msra.mxu0 %v302
      %316 = vmatpush.bf16.msra.mxu0 %v301
      %317 = vmatmul.bf16.gmra.mxu0 %v307
      %v318 = vpop.f32.mrf.mxu0
      %v319 = vadd.f32 0.0, %v318
      %v320 = vpop.f32.mrf.mxu0
      %v321 = vadd.f32 0.0, %v320
      %322 = vdwg.mxu0
      %v323 = vpack.c.bf16 %v319, %v319
      %v324 = vpack.c.bf16 %v321, %v321
      %v327 = vunpack.c.l.b16 %v323
      %v328 = vunpack.c.l.b16 %v324
      %v329 = vpack.c.b16 %v328, %v327
      %330 = vrot.lane.b32.xlu0 %v329, 96
      %v331 = vpop.permute.xlu0 %330
      %vm332 = vcmask 64512
      %v334 = vsel %vm332, %v329, 0
      %v337 = vsel %vm332, %v331, 0
      %339 = vmatpush.bf16.xpose.msra.mxu0 0
      %340 = vmatpush.bf16.xpose.msra.mxu0 0
      %341 = vmatpush.bf16.xpose.msra.mxu0 0
      %342 = vmatpush.bf16.xpose.msra.mxu0 0
      %343 = vmatpush.bf16.xpose.msra.mxu0 0
      %344 = vmatpush.bf16.xpose.msra.mxu0 0
      %345 = vmatpush.bf16.xpose.msra.mxu0 0
      %346 = vmatpush.bf16.xpose.msra.mxu0 %v337
      %347 = vmatmul.bf16.gmra.mxu0 %v334
      %v348 = vpop.f32.mrf.mxu0
      %v349 = vadd.f32 0.0, %v348
      %v350 = vpop.f32.mrf.mxu0
      %v351 = vadd.f32 0.0, %v350
      %352 = vdwg.mxu0
      %v353 = vmul.f32 %v349, 0.35355338
      %v354 = vmul.f32 %v351, 0.35355338
      %vm355 = vcmask 113664
      %v356 = vsel %vm355, %v353, -inf
      %357 = vmax.xlane.f32.xlu0 %v356
      %v358 = vpop.xlane.xlu0 %357
      %vm359 = vcmask 111616
      %v360 = vsel %vm359, %v354, -inf
      %361 = vmax.xlane.f32.xlu0 %v360
      %v362 = vpop.xlane.xlu0 %361
      %v363 = vsub.f32 %v353, %v358
      %v364 = vsub.f32 %v354, %v362
      %v365 = vmul.f32 %v363, 1.442695
      %v366 = vpow.pop %v365
      %v367 = vmul.f32 %v364, 1.442695
      %v368 = vpow.pop %v367
      %v369 = vsel %vm355, %v366, 0.0
      %370 = vadd.xlane.f32.xlu0 %v369
      %v371 = vpop.xlane.xlu0 %370
      %v372 = vsel %vm359, %v368, 0.0
      %373 = vadd.xlane.f32.xlu0 %v372
      %v374 = vpop.xlane.xlu0 %373
      %v375 = vrcp.pop %v371
      %v376 = vrcp.pop %v374
      %v377 = vmul.f32 %v366, %v375
      %v378 = vmul.f32 %v368, %v376
      %379 = vst.msk [vmem:[%s284] sm:$0xff] %vm355, %v377
      %380 = vst.msk [vmem:[%s284 + $0x8] sm:$0x3f] %vm359, %v378
      %v381 = vpack.c.bf16 %v378, %v377
      %382 = vrot.lane.b32.xlu0 %v329, 64
      %v383 = vpop.permute.xlu0 %382
      %v385 = vsel %vm355, %v381, 0
      %vm387 = vcmask 1046528
      %v389 = vsel %vm387, %v383, 0
      %391 = vmatpush.bf16.msra.mxu0 0
      %392 = vmatpush.bf16.msra.mxu0 0
      %393 = vmatpush.bf16.msra.mxu0 0
      %394 = vmatpush.bf16.msra.mxu0 0
      %395 = vmatpush.bf16.msra.mxu0 0
      %396 = vmatpush.bf16.msra.mxu0 0
      %397 = vmatpush.bf16.msra.mxu0 0
      %398 = vmatpush.bf16.msra.mxu0 %v389
      %399 = vmatmul.bf16.gmra.mxu0 %v385
      %v400 = vpop.f32.mrf.mxu0
      %v401 = vadd.f32 0.0, %v400
      %v402 = vpop.f32.mrf.mxu0
      %v403 = vadd.f32 0.0, %v402
      %404 = vdwg.mxu0
      %405 = vrot.lane.b32.xlu0 %v329, 120
      %v406 = vpop.permute.xlu0 %405
      %407 = vrot.lane.b32.xlu0 %v329, 88
      %v408 = vpop.permute.xlu0 %407
      %v410 = vsel %vm332, %v406, 0
      %v413 = vsel %vm332, %v408, 0
      %415 = vmatpush.bf16.xpose.msra.mxu0 0
      %416 = vmatpush.bf16.xpose.msra.mxu0 0
      %417 = vmatpush.bf16.xpose.msra.mxu0 0
      %418 = vmatpush.bf16.xpose.msra.mxu0 0
      %419 = vmatpush.bf16.xpose.msra.mxu0 0
      %420 = vmatpush.bf16.xpose.msra.mxu0 0
      %421 = vmatpush.bf16.xpose.msra.mxu0 0
      %422 = vmatpush.bf16.xpose.msra.mxu0 %v413
      %423 = vmatmul.bf16.gmra.mxu0 %v410
      %v424 = vpop.f32.mrf.mxu0
      %v425 = vadd.f32 0.0, %v424
      %v426 = vpop.f32.mrf.mxu0
      %v427 = vadd.f32 0.0, %v426
      %428 = vdwg.mxu0
      %v429 = vmul.f32 %v425, 0.35355338
      %v430 = vmul.f32 %v427, 0.35355338
      %v431 = vsel %vm355, %v429, -inf
      %432 = vmax.xlane.f32.xlu0 %v431
      %v433 = vpop.xlane.xlu0 %432
      %v434 = vsel %vm359, %v430, -inf
      %435 = vmax.xlane.f32.xlu0 %v434
      %v436 = vpop.xlane.xlu0 %435
      %v437 = vsub.f32 %v429, %v433
      %v438 = vsub.f32 %v430, %v436
      %v439 = vmul.f32 %v437, 1.442695
      %v440 = vpow.pop %v439
      %v441 = vmul.f32 %v438, 1.442695
      %v442 = vpow.pop %v441
      %v443 = vsel %vm355, %v440, 0.0
      %444 = vadd.xlane.f32.xlu0 %v443
      %v445 = vpop.xlane.xlu0 %444
      %v446 = vsel %vm359, %v442, 0.0
      %447 = vadd.xlane.f32.xlu0 %v446
      %v448 = vpop.xlane.xlu0 %447
      %v449 = vrcp.pop %v445
      %v450 = vrcp.pop %v448
      %v451 = vmul.f32 %v440, %v449
      %v452 = vmul.f32 %v442, %v450
      %s453 = scalar_lea.vmem %s284, 16
      %454 = vst.msk [vmem:[%s453] sm:$0xff] %vm355, %v451
      %455 = vst.msk [vmem:[%s453 + $0x8] sm:$0x3f] %vm359, %v452
      %v456 = vpack.c.bf16 %v452, %v451
      %457 = vrot.lane.b32.xlu0 %v329, 56
      %v458 = vpop.permute.xlu0 %457
      %v460 = vsel %vm355, %v456, 0
      %v463 = vsel %vm387, %v458, 0
      %465 = vmatpush.bf16.msra.mxu0 0
      %466 = vmatpush.bf16.msra.mxu0 0
      %467 = vmatpush.bf16.msra.mxu0 0
      %468 = vmatpush.bf16.msra.mxu0 0
      %469 = vmatpush.bf16.msra.mxu0 0
      %470 = vmatpush.bf16.msra.mxu0 0
      %471 = vmatpush.bf16.msra.mxu0 0
      %472 = vmatpush.bf16.msra.mxu0 %v463
      %473 = vmatmul.bf16.gmra.mxu0 %v460
      %v474 = vpop.f32.mrf.mxu0
      %v475 = vadd.f32 0.0, %v474
      %v476 = vpop.f32.mrf.mxu0
      %v477 = vadd.f32 0.0, %v476
      %478 = vdwg.mxu0
      %479 = vrot.lane.b32.xlu0 %v329, 112
      %v480 = vpop.permute.xlu0 %479
      %481 = vrot.lane.b32.xlu0 %v329, 80
      %v482 = vpop.permute.xlu0 %481
      %v484 = vsel %vm332, %v480, 0
      %v487 = vsel %vm332, %v482, 0
      %489 = vmatpush.bf16.xpose.msra.mxu0 0
      %490 = vmatpush.bf16.xpose.msra.mxu0 0
      %491 = vmatpush.bf16.xpose.msra.mxu0 0
      %492 = vmatpush.bf16.xpose.msra.mxu0 0
      %493 = vmatpush.bf16.xpose.msra.mxu0 0
      %494 = vmatpush.bf16.xpose.msra.mxu0 0
      %495 = vmatpush.bf16.xpose.msra.mxu0 0
      %496 = vmatpush.bf16.xpose.msra.mxu0 %v487
      %497 = vmatmul.bf16.gmra.mxu0 %v484
      %v498 = vpop.f32.mrf.mxu0
      %v499 = vadd.f32 0.0, %v498
      %v500 = vpop.f32.mrf.mxu0
      %v501 = vadd.f32 0.0, %v500
      %502 = vdwg.mxu0
      %v503 = vmul.f32 %v499, 0.35355338
      %v504 = vmul.f32 %v501, 0.35355338
      %v505 = vsel %vm355, %v503, -inf
      %506 = vmax.xlane.f32.xlu0 %v505
      %v507 = vpop.xlane.xlu0 %506
      %v508 = vsel %vm359, %v504, -inf
      %509 = vmax.xlane.f32.xlu0 %v508
      %v510 = vpop.xlane.xlu0 %509
      %v511 = vsub.f32 %v503, %v507
      %v512 = vsub.f32 %v504, %v510
      %v513 = vmul.f32 %v511, 1.442695
      %v514 = vpow.pop %v513
      %v515 = vmul.f32 %v512, 1.442695
      %v516 = vpow.pop %v515
      %v517 = vsel %vm355, %v514, 0.0
      %518 = vadd.xlane.f32.xlu0 %v517
      %v519 = vpop.xlane.xlu0 %518
      %v520 = vsel %vm359, %v516, 0.0
      %521 = vadd.xlane.f32.xlu0 %v520
      %v522 = vpop.xlane.xlu0 %521
      %v523 = vrcp.pop %v519
      %v524 = vrcp.pop %v522
      %v525 = vmul.f32 %v514, %v523
      %v526 = vmul.f32 %v516, %v524
      %s527 = scalar_lea.vmem %s284, 32
      %528 = vst.msk [vmem:[%s527] sm:$0xff] %vm355, %v525
      %529 = vst.msk [vmem:[%s527 + $0x8] sm:$0x3f] %vm359, %v526
      %v530 = vpack.c.bf16 %v526, %v525
      %531 = vrot.lane.b32.xlu0 %v329, 48
      %v532 = vpop.permute.xlu0 %531
      %v534 = vsel %vm355, %v530, 0
      %v537 = vsel %vm387, %v532, 0
      %539 = vmatpush.bf16.msra.mxu0 0
      %540 = vmatpush.bf16.msra.mxu0 0
      %541 = vmatpush.bf16.msra.mxu0 0
      %542 = vmatpush.bf16.msra.mxu0 0
      %543 = vmatpush.bf16.msra.mxu0 0
      %544 = vmatpush.bf16.msra.mxu0 0
      %545 = vmatpush.bf16.msra.mxu0 0
      %546 = vmatpush.bf16.msra.mxu0 %v537
      %547 = vmatmul.bf16.gmra.mxu0 %v534
      %v548 = vpop.f32.mrf.mxu0
      %v549 = vadd.f32 0.0, %v548
      %v550 = vpop.f32.mrf.mxu0
      %v551 = vadd.f32 0.0, %v550
      %552 = vdwg.mxu0
      %553 = vrot.lane.b32.xlu0 %v329, 104
      %v554 = vpop.permute.xlu0 %553
      %555 = vrot.lane.b32.xlu0 %v329, 72
      %v556 = vpop.permute.xlu0 %555
      %v558 = vsel %vm332, %v554, 0
      %v561 = vsel %vm332, %v556, 0
      %563 = vmatpush.bf16.xpose.msra.mxu0 0
      %564 = vmatpush.bf16.xpose.msra.mxu0 0
      %565 = vmatpush.bf16.xpose.msra.mxu0 0
      %566 = vmatpush.bf16.xpose.msra.mxu0 0
      %567 = vmatpush.bf16.xpose.msra.mxu0 0
      %568 = vmatpush.bf16.xpose.msra.mxu0 0
      %569 = vmatpush.bf16.xpose.msra.mxu0 0
      %570 = vmatpush.bf16.xpose.msra.mxu0 %v561
      %571 = vmatmul.bf16.gmra.mxu0 %v558
      %v572 = vpop.f32.mrf.mxu0
      %v573 = vadd.f32 0.0, %v572
      %v574 = vpop.f32.mrf.mxu0
      %v575 = vadd.f32 0.0, %v574
      %576 = vdwg.mxu0
      %v577 = vmul.f32 %v573, 0.35355338
      %v578 = vmul.f32 %v575, 0.35355338
      %v579 = vsel %vm355, %v577, -inf
      %580 = vmax.xlane.f32.xlu0 %v579
      %v581 = vpop.xlane.xlu0 %580
      %v582 = vsel %vm359, %v578, -inf
      %583 = vmax.xlane.f32.xlu0 %v582
      %v584 = vpop.xlane.xlu0 %583
      %v585 = vsub.f32 %v577, %v581
      %v586 = vsub.f32 %v578, %v584
      %v587 = vmul.f32 %v585, 1.442695
      %v588 = vpow.pop %v587
      %v589 = vmul.f32 %v586, 1.442695
      %v590 = vpow.pop %v589
      %v591 = vsel %vm355, %v588, 0.0
      %592 = vadd.xlane.f32.xlu0 %v591
      %v593 = vpop.xlane.xlu0 %592
      %v594 = vsel %vm359, %v590, 0.0
      %595 = vadd.xlane.f32.xlu0 %v594
      %v596 = vpop.xlane.xlu0 %595
      %v597 = vrcp.pop %v593
      %v598 = vrcp.pop %v596
      %v599 = vmul.f32 %v588, %v597
      %v600 = vmul.f32 %v590, %v598
      %s601 = scalar_lea.vmem %s284, 48
      %602 = vst.msk [vmem:[%s601] sm:$0xff] %vm355, %v599
      %603 = vst.msk [vmem:[%s601 + $0x8] sm:$0x3f] %vm359, %v600
      %v604 = vpack.c.bf16 %v600, %v599
      %605 = vrot.lane.b32.xlu0 %v329, 40
      %v606 = vpop.permute.xlu0 %605
      %v608 = vsel %vm355, %v604, 0
      %v611 = vsel %vm387, %v606, 0
      %613 = vmatpush.bf16.msra.mxu0 0
      %614 = vmatpush.bf16.msra.mxu0 0
      %615 = vmatpush.bf16.msra.mxu0 0
      %616 = vmatpush.bf16.msra.mxu0 0
      %617 = vmatpush.bf16.msra.mxu0 0
      %618 = vmatpush.bf16.msra.mxu0 0
      %619 = vmatpush.bf16.msra.mxu0 0
      %620 = vmatpush.bf16.msra.mxu0 %v611
      %621 = vmatmul.bf16.gmra.mxu0 %v608
      %v622 = vpop.f32.mrf.mxu0
      %v623 = vadd.f32 0.0, %v622
      %v624 = vpop.f32.mrf.mxu0
      %v625 = vadd.f32 0.0, %v624
      %626 = vdwg.mxu0
      %629 = vrot.lane.b32.xlu0 %v475, 8
      %v630 = vpop.permute.xlu0 %629
      %631 = vrot.lane.b32.xlu0 %v477, 8
      %v632 = vpop.permute.xlu0 %631
      %637 = vrot.lane.b32.xlu0 %v549, 16
      %v638 = vpop.permute.xlu0 %637
      %639 = vrot.lane.b32.xlu0 %v551, 16
      %v640 = vpop.permute.xlu0 %639
      %645 = vrot.lane.b32.xlu0 %v623, 24
      %v646 = vpop.permute.xlu0 %645
      %647 = vrot.lane.b32.xlu0 %v625, 24
      %v648 = vpop.permute.xlu0 %647
      %v651 = vsel %vm332, %v401, %v630
      %v652 = vsel %vm332, %v403, %v632
      %vm653 = vcmask 130048
      %v654 = vsel %vm653, %v651, %v638
      %v655 = vsel %vm653, %v652, %v640
      %vm656 = vcmask 195584
      %v657 = vsel %vm656, %v654, %v646
      %v658 = vsel %vm656, %v655, %v648
      %v659 = vpack.c.bf16 %v658, %v657
      %v660 = vld [vmem:[%s2] sm:$0xf]
      %v661 = vld [vmem:[%s2 + $0x4] sm:$0xf]
      %v662 = vld [vmem:[%s2 + $0x8] sm:$0xf]
      %v663 = vld [vmem:[%s2 + $0xc] sm:$0xf]
      %v664 = vld [vmem:[%s3] sm:$0x1]
      %v666 = vperm.slane %v664, 0
      %v672 = vunpack.c.l.b16 %v660
      %v673 = vunpack.c.l.b16 %v661
      %v674 = vunpack.c.l.b16 %v662
      %v675 = vunpack.c.l.b16 %v663
      %v676 = vpack.c.b16 %v673, %v672
      %v677 = vpack.c.b16 %v675, %v674
      %v681 = vsel %vm305, %v659, 0
      %683 = vmatpush.bf16.msra.mxu0 0
      %684 = vmatpush.bf16.msra.mxu0 0
      %685 = vmatpush.bf16.msra.mxu0 0
      %686 = vmatpush.bf16.msra.mxu0 0
      %687 = vmatpush.bf16.msra.mxu0 0
      %688 = vmatpush.bf16.msra.mxu0 0
      %689 = vmatpush.bf16.msra.mxu0 %v677
      %690 = vmatpush.bf16.msra.mxu0 %v676
      %691 = vmatmul.bf16.gmra.mxu0 %v681
      %v692 = vpop.f32.mrf.mxu0
      %v693 = vadd.f32 %v666, %v692
      %v694 = vpop.f32.mrf.mxu0
      %v695 = vadd.f32 %v666, %v694
      %696 = vdwg.mxu0
      %v698 = vrot.slane %v695, 2
      %vm700 = vcmask 257024
      %v701 = vsel %vm700, %v698, 0.0
      %v702 = vrot.slane %v701, 4
      %v703 = vadd.f32 %v701, %v702
      %v704 = vrot.slane %v703, 2
      %v705 = vadd.f32 %v703, %v704
      %v706 = vrot.slane %v705, 1
      %v707 = vadd.f32 %v705, %v706
      %v708 = vrcp.pop 4.0
      %v709 = vmul.f32 4.0, %v708
      %v710 = vsub.f32 1.0, %v709
      %v711 = vmul.f32 %v708, %v710
      %v712 = vadd.f32 %v708, %v711
      %vm713 = vweird.f32 %v708
      %v714 = vsel %vm713, %v708, %v712
      %v715 = vmul.f32 %v707, %v714
      %v716 = vadd.f32 %v693, %v715
      %v718 = vrot.slane %v693, 1
      %v719 = vrot.slane %v695, 1
      %v720 = vsel %vm387, %v718, %v719
      %v723 = vsel %vm305, %v720, 0.0
      %vm724 = vcmask 253952
      %v725 = vsel %vm724, %v719, 0.0
      %v726 = vadd.f32 %v723, %v725
      %v727 = vrot.slane %v726, 4
      %v728 = vadd.f32 %v726, %v727
      %v729 = vrot.slane %v728, 2
      %v730 = vadd.f32 %v728, %v729
      %v731 = vrot.slane %v730, 1
      %v732 = vadd.f32 %v730, %v731
      %v733 = vrcp.pop 9.0
      %v734 = vmul.f32 9.0, %v733
      %v735 = vsub.f32 1.0, %v734
      %v736 = vmul.f32 %v733, %v735
      %v737 = vadd.f32 %v733, %v736
      %vm738 = vweird.f32 %v733
      %v739 = vsel %vm738, %v733, %v737
      %v740 = vmul.f32 %v732, %v739
      %v741 = vadd.f32 %v716, %v740
      %vm742 = vcmask 1040384
      %v743 = vsel %vm742, %v741, %v693
      %v744 = vld [vmem:[%s274] sm:$0xff]
      %v745 = vld [vmem:[%s274 + $0x8] sm:$0x3]
      %v746 = vadd.f32 %v743, %v744
      %v747 = vadd.f32 %v695, %v745
      %748 = vst.msk [vmem:[%s279] sm:$0xff] %vm305, %v746
      %vm749 = vcmask 254976
      %750 = vst.msk [vmem:[%s279 + $0x8] sm:$0x3] %vm749, %v747
      %p751 = scmp.lt.s32.totalorder %s18, 1
      %s752 = scalar_select %p751, %s18, 1
      %s753 = smul.addr %s752, 2
      %s754 = smul.addr %s753, 8
      %s755 = scalar_lea.vmem %s5, %s754
      %p756 = scmp.lt.s32.totalorder %s18, 1
      %s757 = scalar_select %p756, %s18, 1
      %s758 = smul.addr %s757, 8
      %s759 = smul.addr %s758, 8
      %s760 = scalar_lea.vmem %s6, %s759
      // Predicated region
      $region41: #{conformer_forward.14} parent=39 // pred_check
        %p761 = pneg %p151
      $region42: #{conformer_forward.14} parent=39 // pred_check_branch
        %763 = sbr.rel (%p761) target = $region44
      $region43: #{conformer_forward.14} parent=39 // pred_region
        _
      $region44: #{conformer_forward.14} parent=39 // pred_fallthru
        _
      // Predicated region
      $region45: #{conformer_forward.14} parent=39 // pred_check
        %p764 = pneg %p177
      $region46: #{conformer_forward.14} parent=39 // pred_check_branch
        %766 = sbr.rel (%p764) target = $region48
      $region47: #{conformer_forward.14} parent=39 // pred_region
        _
      $region48: #{conformer_forward.14} parent=39 // pred_fallthru
        _
    $region40: #{conformer_forward.14} parent=5 // pred_fallthru
      _
    %p767 = scmp.le.s32.totalorder 2, %s13
    // Predicated region
    $region49: #{conformer_forward.14} parent=5 // pred_check
      %p768 = pneg %p767
    $region50: #{conformer_forward.14} parent=5 // pred_check_branch
      %770 = sbr.rel (%p768) target = $region52
    $region51: #{conformer_forward.14} parent=5 // pred_region
      %s771 = ssub.s32 %s13, 2
      // Predicated region
      $region53: #{conformer_forward.14} parent=51 // pred_check
        %p772 = pneg %p157
      $region54: #{conformer_forward.14} parent=51 // pred_check_branch
        %774 = sbr.rel (%p772) target = $region56
      $region55: #{conformer_forward.14} parent=51 // pred_region
        %p775 = scmp.lt.s32.totalorder %s19, 1
        %s776 = scalar_select %p775, %s19, 1
        %s777 = smul.addr %s776, 2
        %s778 = smul.addr %s777, 8
        %s779 = scalar_lea.vmem %s5, %s778
      $region56: #{conformer_forward.14} parent=51 // pred_fallthru
        _
      // Predicated region
      $region57: #{conformer_forward.14} parent=51 // pred_check
        %p780 = pneg %p183
      $region58: #{conformer_forward.14} parent=51 // pred_check_branch
        %782 = sbr.rel (%p780) target = $region60
      $region59: #{conformer_forward.14} parent=51 // pred_region
        %p783 = scmp.lt.s32.totalorder %s19, 1
        %s784 = scalar_select %p783, %s19, 1
        %s785 = smul.addr %s784, 8
        %s786 = smul.addr %s785, 8
        %s787 = scalar_lea.vmem %s6, %s786
      $region60: #{conformer_forward.14} parent=51 // pred_fallthru
        _
    $region52: #{conformer_forward.14} parent=5 // pred_fallthru
      _
  $region6: #{conformer_forward.14} parent=0 // loop_footer
    %s17 = sadd.s32 1, %s13
  $region7: #{conformer_forward.14} parent=0 // loop_footer_branch
    %12 = sbr.rel target = $region3
  $region8: #{conformer_forward.14} parent=0 // loop_exit
    _

</llo_original>
